<compile_context>
chip_gen: v6e
topology: v6e:2x2x1
jax: 0.10.0
libtpu: 0.0.40
codegen_flags: <defaults>
</compile_context>

<pallas_src>
import jax
import jax.numpy as jnp
from jax import lax
from jax.experimental import pallas as pl
from jax.experimental.pallas import tpu as pltpu

NEG_SLOPE = 0.2  # unetCat uses F.leaky_relu(..., negative_slope=0.2)


# ----------------------------------------------------------------------------
# Pallas kernel: fused zero-pad(1) + 3x3 conv (stride 1, no bias) + LeakyReLU.
# One grid step per batch element, channels-first, VPU broadcast-FMA conv.
# ----------------------------------------------------------------------------
def _conv3x3_lrelu_kernel(w_ref, x_ref, o_ref):
    # w_ref: SMEM (Cout*Cin*9,) f32   flattened (Cout, Cin, 3, 3) weights
    # x_ref: VMEM (1, Cin, H, W)      upsampled input_2, channels-first
    # o_ref: VMEM (1, Cout, H, W)
    cin, h, w = x_ref.shape[1], x_ref.shape[2], x_ref.shape[3]
    cout = o_ref.shape[1]

    x = x_ref[0]  # (Cin, H, W)

    # SAME padding built in-kernel as a value: zero row above/below, zero
    # column left/right.  No wrapper-side jnp.pad -> no padded HBM round trip.
    zrow = jnp.zeros((cin, 1, w), x.dtype)
    zcol = jnp.zeros((cin, h + 2, 1), x.dtype)
    xpad = jnp.concatenate([zrow, x, zrow], axis=1)      # (Cin, H+2, W)
    xpad = jnp.concatenate([zcol, xpad, zcol], axis=2)   # (Cin, H+2, W+2)

    # One small (H, W) f32 accumulator per output channel -> register resident.
    accs = [jnp.zeros((h, w), jnp.float32) for _ in range(cout)]

    # Shifted-window VPU conv: each tap is just an offset read of xpad
    # (no im2col, no reshape, no MXU push for a K=4, N=4 contraction).
    for ci in range(cin):
        for dh in range(3):
            for dw in range(3):
                tap = xpad[ci, dh:dh + h, dw:dw + w]          # (H, W)
                for co in range(cout):
                    wv = w_ref[(co * cin + ci) * 9 + dh * 3 + dw]
                    accs[co] = accs[co] + wv * tap

    for co in range(cout):
        a = accs[co]
        y = jnp.where(a >= 0, a, NEG_SLOPE * a)               # LeakyReLU(0.2)
        o_ref[0, co] = y.astype(o_ref.dtype)


def conv3x3_lrelu_pallas(x_nchw, w_oihw):
    """3x3 stride-1 pad-1 conv (no bias) + LeakyReLU(0.2); NCHW in / NCHW out."""
    n, cin, h, w = x_nchw.shape
    cout = w_oihw.shape[0]
    w_flat = w_oihw.reshape(-1).astype(jnp.float32)           # (Cout*Cin*9,)
    return pl.pallas_call(
        _conv3x3_lrelu_kernel,
        out_shape=jax.ShapeDtypeStruct((n, cout, h, w), x_nchw.dtype),
        # TODO(synk): for large feature maps (v7x, 64 MiB VMEM) also tile H
        # with a 1-row halo instead of one whole image per grid step.
        grid=(n,),
        in_specs=[
            # 144 weight scalars live in SMEM; read as scalars inside the kernel.
            pl.BlockSpec(memory_space=pltpu.MemorySpace.SMEM),
            pl.BlockSpec((1, cin, h, w), lambda i: (i, 0, 0, 0)),
        ],
        out_specs=pl.BlockSpec((1, cout, h, w), lambda i: (i, 0, 0, 0)),
        compiler_params=pltpu.CompilerParams(
            dimension_semantics=("parallel",),   # batch=2 -> both v7x TCs busy
            vmem_limit_bytes=32 * 1024 * 1024,
        ),
    )(w_flat, x_nchw)


# ----------------------------------------------------------------------------
# Plain-JAX glue (all NCHW, no transposes, no gathers).
# ----------------------------------------------------------------------------
def _up2x_axis(x, axis):
    """Bilinear 2x along `axis`, PyTorch align_corners=False semantics."""
    s = x.shape[axis]
    first = lax.slice_in_dim(x, 0, 1, axis=axis)
    last = lax.slice_in_dim(x, s - 1, s, axis=axis)
    x_prev = jnp.concatenate([first, lax.slice_in_dim(x, 0, s - 1, axis=axis)], axis=axis)
    x_next = jnp.concatenate([lax.slice_in_dim(x, 1, s, axis=axis), last], axis=axis)
    y_even = 0.75 * x + 0.25 * x_prev     # out[2i]   = .75 x[i] + .25 x[i-1]  (clamped)
    y_odd = 0.75 * x + 0.25 * x_next      # out[2i+1] = .75 x[i] + .25 x[i+1]  (clamped)
    y = jnp.stack([y_even, y_odd], axis=axis + 1)
    shape = list(x.shape)
    shape[axis] = 2 * s
    return y.reshape(shape)


# TODO(synk): the 2x lane/sublane interleave has no clean Mosaic primitive, so
# the (gather-free) upsample stays in XLA rather than being fused in-kernel.
def bilinear_up2x_nchw(x):
    """F.interpolate(x, scale_factor=2, mode='bilinear', align_corners=False)."""
    x = _up2x_axis(x, 2)
    x = _up2x_axis(x, 3)
    return x


def spectral_normalize(weight, n_iter=20, eps=1e-12):
    """weight: (Cout, Cin, kh, kw) -> weight / sigma_max(weight_mat).

    Single lax.fori_loop power iteration (one XLA while op) instead of a long
    unrolled chain of tiny matvec/norm dispatches.
    """
    # TODO(synk): torch.nn.utils.spectral_norm keeps a persistent random `u`
    # and does 1 iteration per forward; stateless converged estimate used here.
    cout = weight.shape[0]
    wmat = weight.reshape(cout, -1).astype(jnp.float32)
    v0 = jnp.ones((wmat.shape[1],), jnp.float32)
    v0 = v0 / (jnp.linalg.norm(v0) + eps)

    def body(_, v):
        u = wmat @ v
        u = u / (jnp.linalg.norm(u) + eps)
        v = wmat.T @ u
        v = v / (jnp.linalg.norm(v) + eps)
        return v

    v = lax.fori_loop(0, n_iter, body, v0)
    u = wmat @ v
    u = u / (jnp.linalg.norm(u) + eps)
    sigma = u @ (wmat @ v)
    return weight / sigma


@jax.jit
def unet_cat_forward(input_1, input_2, weight):
    """Equivalent of unetCat.forward; input_1, input_2, output are NCHW."""
    w_sn = spectral_normalize(weight)                     # spectral_norm(convU)
    x2 = bilinear_up2x_nchw(input_2)                      # F.interpolate x2
    output_2 = conv3x3_lrelu_pallas(x2, w_sn)             # conv + leaky_relu (Pallas)
    offset = output_2.shape[2] - input_1.shape[2]
    p = offset // 2
    output_1 = jnp.pad(input_1, ((0, 0), (0, 0), (p, p), (p, p)))  # F.pad
    return jnp.concatenate([output_1, output_2], axis=1)           # torch.cat dim=1


@jax.jit
def _reference_forward(input_1, input_2, weight):
    """Pure-XLA reference (lax conv) for a numerical cross-check."""
    w_sn = spectral_normalize(weight)
    x2 = bilinear_up2x_nchw(input_2)
    z = lax.conv_general_dilated(
        x2, w_sn, window_strides=(1, 1), padding=((1, 1), (1, 1)),
        dimension_numbers=("NCHW", "OIHW", "NCHW"))
    output_2 = jnp.where(z >= 0, z, NEG_SLOPE * z)
    offset = output_2.shape[2] - input_1.shape[2]
    p = offset // 2
    output_1 = jnp.pad(input_1, ((0, 0), (0, 0), (p, p), (p, p)))
    return jnp.concatenate([output_1, output_2], axis=1)


if __name__ == "__main__":
    key = jax.random.PRNGKey(0)
    k1, k2, k3 = jax.random.split(key, 3)

    dim_in, dim_out = 4, 4
    # input_2 (16x16) is upsampled to 32x32; input_1 (28x28) is padded to 32x32.
    input_1 = jax.random.normal(k1, (2, 4, 28, 28), dtype=jnp.float32)
    input_2 = jax.random.normal(k2, (2, dim_in, 16, 16), dtype=jnp.float32)
    # Deterministic synthetic conv weight (Cout, Cin, 3, 3), no bias.
    weight = 0.1 * jax.random.normal(k3, (dim_out, dim_in, 3, 3), dtype=jnp.float32)

    y = unet_cat_forward(input_1, input_2, weight)
    jax.block_until_ready(y)
    assert y.shape == (2, 4 + dim_out, 32, 32), y.shape

    y_ref = _reference_forward(input_1, input_2, weight)
    jax.block_until_ready(y_ref)
    err = float(jnp.max(jnp.abs(y - y_ref)))
    assert err < 1e-4, f"mismatch vs XLA reference: {err}"

    print("KERNEL_OK")
</pallas_src>

<mosaic_0001>
module attributes {stable_mosaic.version = 11 : i64} {
  func.func @_conv3x3_lrelu_kernel(%arg0: i32, %arg1: memref<144xf32, #tpu.memory_space<smem>>, %arg2: memref<1x4x32x32xf32, #tpu.memory_space<vmem>>, %arg3: memref<1x4x32x32xf32, #tpu.memory_space<vmem>>) attributes {dimension_semantics = [#tpu.dimension_semantics<parallel>], iteration_bounds = array<i64: 2>, scalar_prefetch = 0 : i64, scratch_operands = 0 : i64, tpu.core_type = #tpu.core_type<tc>, window_params = [{transform_indices = @transform_0, window_bounds = array<i64: 144>}, {transform_indices = @transform_1, window_bounds = array<i64: 1, 4, 32, 32>}, {transform_indices = @transform_2, window_bounds = array<i64: 1, 4, 32, 32>}]} {
    %c0 = arith.constant 0 : index
    %c0_0 = arith.constant 0 : index
    %c0_1 = arith.constant 0 : index
    %c0_2 = arith.constant 0 : index
    %0 = vector.load %arg2[%c0, %c0_0, %c0_1, %c0_2] : memref<1x4x32x32xf32, #tpu.memory_space<vmem>>, vector<1x4x32x32xf32>
    %1 = vector.shape_cast %0 : vector<1x4x32x32xf32> to vector<4x32x32xf32>
    %cst = arith.constant 0.000000e+00 : f32
    %2 = vector.broadcast %cst : f32 to vector<4x1x32xf32>
    %cst_3 = arith.constant 0.000000e+00 : f32
    %3 = vector.broadcast %cst_3 : f32 to vector<4x34x1xf32>
    %4 = tpu.concatenate %2, %1, %2 in 1 : vector<4x1x32xf32>, vector<4x32x32xf32>, vector<4x1x32xf32> -> vector<4x34x32xf32>
    %5 = tpu.concatenate %3, %4, %3 in 2 : vector<4x34x1xf32>, vector<4x34x32xf32>, vector<4x34x1xf32> -> vector<4x34x34xf32>
    %cst_4 = arith.constant 0.000000e+00 : f32
    %6 = vector.broadcast %cst_4 : f32 to vector<32x32xf32>
    %cst_5 = arith.constant 0.000000e+00 : f32
    %7 = vector.broadcast %cst_5 : f32 to vector<32x32xf32>
    %cst_6 = arith.constant 0.000000e+00 : f32
    %8 = vector.broadcast %cst_6 : f32 to vector<32x32xf32>
    %cst_7 = arith.constant 0.000000e+00 : f32
    %9 = vector.broadcast %cst_7 : f32 to vector<32x32xf32>
    %10 = vector.extract_strided_slice %5 {offsets = [0, 0, 0], sizes = [1, 32, 32], strides = [1, 1, 1]} : vector<4x34x34xf32> to vector<1x32x32xf32>
    %11 = vector.shape_cast %10 : vector<1x32x32xf32> to vector<32x32xf32>
    %c0_8 = arith.constant 0 : index
    %12 = memref.load %arg1[%c0_8] : memref<144xf32, #tpu.memory_space<smem>>
    %13 = vector.broadcast %12 : f32 to vector<32x32xf32>
    %14 = arith.mulf %13, %11 : vector<32x32xf32>
    %15 = arith.addf %6, %14 : vector<32x32xf32>
    %c36 = arith.constant 36 : index
    %16 = memref.load %arg1[%c36] : memref<144xf32, #tpu.memory_space<smem>>
    %17 = vector.broadcast %16 : f32 to vector<32x32xf32>
    %18 = arith.mulf %17, %11 : vector<32x32xf32>
    %19 = arith.addf %7, %18 : vector<32x32xf32>
    %c72 = arith.constant 72 : index
    %20 = memref.load %arg1[%c72] : memref<144xf32, #tpu.memory_space<smem>>
    %21 = vector.broadcast %20 : f32 to vector<32x32xf32>
    %22 = arith.mulf %21, %11 : vector<32x32xf32>
    %23 = arith.addf %8, %22 : vector<32x32xf32>
    %c108 = arith.constant 108 : index
    %24 = memref.load %arg1[%c108] : memref<144xf32, #tpu.memory_space<smem>>
    %25 = vector.broadcast %24 : f32 to vector<32x32xf32>
    %26 = arith.mulf %25, %11 : vector<32x32xf32>
    %27 = arith.addf %9, %26 : vector<32x32xf32>
    %28 = vector.extract_strided_slice %5 {offsets = [0, 0, 1], sizes = [1, 32, 32], strides = [1, 1, 1]} : vector<4x34x34xf32> to vector<1x32x32xf32>
    %29 = vector.shape_cast %28 : vector<1x32x32xf32> to vector<32x32xf32>
    %c1 = arith.constant 1 : index
    %30 = memref.load %arg1[%c1] : memref<144xf32, #tpu.memory_space<smem>>
    %31 = vector.broadcast %30 : f32 to vector<32x32xf32>
    %32 = arith.mulf %31, %29 : vector<32x32xf32>
    %33 = arith.addf %15, %32 : vector<32x32xf32>
    %c37 = arith.constant 37 : index
    %34 = memref.load %arg1[%c37] : memref<144xf32, #tpu.memory_space<smem>>
    %35 = vector.broadcast %34 : f32 to vector<32x32xf32>
    %36 = arith.mulf %35, %29 : vector<32x32xf32>
    %37 = arith.addf %19, %36 : vector<32x32xf32>
    %c73 = arith.constant 73 : index
    %38 = memref.load %arg1[%c73] : memref<144xf32, #tpu.memory_space<smem>>
    %39 = vector.broadcast %38 : f32 to vector<32x32xf32>
    %40 = arith.mulf %39, %29 : vector<32x32xf32>
    %41 = arith.addf %23, %40 : vector<32x32xf32>
    %c109 = arith.constant 109 : index
    %42 = memref.load %arg1[%c109] : memref<144xf32, #tpu.memory_space<smem>>
    %43 = vector.broadcast %42 : f32 to vector<32x32xf32>
    %44 = arith.mulf %43, %29 : vector<32x32xf32>
    %45 = arith.addf %27, %44 : vector<32x32xf32>
    %46 = vector.extract_strided_slice %5 {offsets = [0, 0, 2], sizes = [1, 32, 32], strides = [1, 1, 1]} : vector<4x34x34xf32> to vector<1x32x32xf32>
    %47 = vector.shape_cast %46 : vector<1x32x32xf32> to vector<32x32xf32>
    %c2 = arith.constant 2 : index
    %48 = memref.load %arg1[%c2] : memref<144xf32, #tpu.memory_space<smem>>
    %49 = vector.broadcast %48 : f32 to vector<32x32xf32>
    %50 = arith.mulf %49, %47 : vector<32x32xf32>
    %51 = arith.addf %33, %50 : vector<32x32xf32>
    %c38 = arith.constant 38 : index
    %52 = memref.load %arg1[%c38] : memref<144xf32, #tpu.memory_space<smem>>
    %53 = vector.broadcast %52 : f32 to vector<32x32xf32>
    %54 = arith.mulf %53, %47 : vector<32x32xf32>
    %55 = arith.addf %37, %54 : vector<32x32xf32>
    %c74 = arith.constant 74 : index
    %56 = memref.load %arg1[%c74] : memref<144xf32, #tpu.memory_space<smem>>
    %57 = vector.broadcast %56 : f32 to vector<32x32xf32>
    %58 = arith.mulf %57, %47 : vector<32x32xf32>
    %59 = arith.addf %41, %58 : vector<32x32xf32>
    %c110 = arith.constant 110 : index
    %60 = memref.load %arg1[%c110] : memref<144xf32, #tpu.memory_space<smem>>
    %61 = vector.broadcast %60 : f32 to vector<32x32xf32>
    %62 = arith.mulf %61, %47 : vector<32x32xf32>
    %63 = arith.addf %45, %62 : vector<32x32xf32>
    %64 = vector.extract_strided_slice %5 {offsets = [0, 1, 0], sizes = [1, 32, 32], strides = [1, 1, 1]} : vector<4x34x34xf32> to vector<1x32x32xf32>
    %65 = vector.shape_cast %64 : vector<1x32x32xf32> to vector<32x32xf32>
    %c3 = arith.constant 3 : index
    %66 = memref.load %arg1[%c3] : memref<144xf32, #tpu.memory_space<smem>>
    %67 = vector.broadcast %66 : f32 to vector<32x32xf32>
    %68 = arith.mulf %67, %65 : vector<32x32xf32>
    %69 = arith.addf %51, %68 : vector<32x32xf32>
    %c39 = arith.constant 39 : index
    %70 = memref.load %arg1[%c39] : memref<144xf32, #tpu.memory_space<smem>>
    %71 = vector.broadcast %70 : f32 to vector<32x32xf32>
    %72 = arith.mulf %71, %65 : vector<32x32xf32>
    %73 = arith.addf %55, %72 : vector<32x32xf32>
    %c75 = arith.constant 75 : index
    %74 = memref.load %arg1[%c75] : memref<144xf32, #tpu.memory_space<smem>>
    %75 = vector.broadcast %74 : f32 to vector<32x32xf32>
    %76 = arith.mulf %75, %65 : vector<32x32xf32>
    %77 = arith.addf %59, %76 : vector<32x32xf32>
    %c111 = arith.constant 111 : index
    %78 = memref.load %arg1[%c111] : memref<144xf32, #tpu.memory_space<smem>>
    %79 = vector.broadcast %78 : f32 to vector<32x32xf32>
    %80 = arith.mulf %79, %65 : vector<32x32xf32>
    %81 = arith.addf %63, %80 : vector<32x32xf32>
    %82 = vector.extract_strided_slice %5 {offsets = [0, 1, 1], sizes = [1, 32, 32], strides = [1, 1, 1]} : vector<4x34x34xf32> to vector<1x32x32xf32>
    %83 = vector.shape_cast %82 : vector<1x32x32xf32> to vector<32x32xf32>
    %c4 = arith.constant 4 : index
    %84 = memref.load %arg1[%c4] : memref<144xf32, #tpu.memory_space<smem>>
    %85 = vector.broadcast %84 : f32 to vector<32x32xf32>
    %86 = arith.mulf %85, %83 : vector<32x32xf32>
    %87 = arith.addf %69, %86 : vector<32x32xf32>
    %c40 = arith.constant 40 : index
    %88 = memref.load %arg1[%c40] : memref<144xf32, #tpu.memory_space<smem>>
    %89 = vector.broadcast %88 : f32 to vector<32x32xf32>
    %90 = arith.mulf %89, %83 : vector<32x32xf32>
    %91 = arith.addf %73, %90 : vector<32x32xf32>
    %c76 = arith.constant 76 : index
    %92 = memref.load %arg1[%c76] : memref<144xf32, #tpu.memory_space<smem>>
    %93 = vector.broadcast %92 : f32 to vector<32x32xf32>
    %94 = arith.mulf %93, %83 : vector<32x32xf32>
    %95 = arith.addf %77, %94 : vector<32x32xf32>
    %c112 = arith.constant 112 : index
    %96 = memref.load %arg1[%c112] : memref<144xf32, #tpu.memory_space<smem>>
    %97 = vector.broadcast %96 : f32 to vector<32x32xf32>
    %98 = arith.mulf %97, %83 : vector<32x32xf32>
    %99 = arith.addf %81, %98 : vector<32x32xf32>
    %100 = vector.extract_strided_slice %5 {offsets = [0, 1, 2], sizes = [1, 32, 32], strides = [1, 1, 1]} : vector<4x34x34xf32> to vector<1x32x32xf32>
    %101 = vector.shape_cast %100 : vector<1x32x32xf32> to vector<32x32xf32>
    %c5 = arith.constant 5 : index
    %102 = memref.load %arg1[%c5] : memref<144xf32, #tpu.memory_space<smem>>
    %103 = vector.broadcast %102 : f32 to vector<32x32xf32>
    %104 = arith.mulf %103, %101 : vector<32x32xf32>
    %105 = arith.addf %87, %104 : vector<32x32xf32>
    %c41 = arith.constant 41 : index
    %106 = memref.load %arg1[%c41] : memref<144xf32, #tpu.memory_space<smem>>
    %107 = vector.broadcast %106 : f32 to vector<32x32xf32>
    %108 = arith.mulf %107, %101 : vector<32x32xf32>
    %109 = arith.addf %91, %108 : vector<32x32xf32>
    %c77 = arith.constant 77 : index
    %110 = memref.load %arg1[%c77] : memref<144xf32, #tpu.memory_space<smem>>
    %111 = vector.broadcast %110 : f32 to vector<32x32xf32>
    %112 = arith.mulf %111, %101 : vector<32x32xf32>
    %113 = arith.addf %95, %112 : vector<32x32xf32>
    %c113 = arith.constant 113 : index
    %114 = memref.load %arg1[%c113] : memref<144xf32, #tpu.memory_space<smem>>
    %115 = vector.broadcast %114 : f32 to vector<32x32xf32>
    %116 = arith.mulf %115, %101 : vector<32x32xf32>
    %117 = arith.addf %99, %116 : vector<32x32xf32>
    %118 = vector.extract_strided_slice %5 {offsets = [0, 2, 0], sizes = [1, 32, 32], strides = [1, 1, 1]} : vector<4x34x34xf32> to vector<1x32x32xf32>
    %119 = vector.shape_cast %118 : vector<1x32x32xf32> to vector<32x32xf32>
    %c6 = arith.constant 6 : index
    %120 = memref.load %arg1[%c6] : memref<144xf32, #tpu.memory_space<smem>>
    %121 = vector.broadcast %120 : f32 to vector<32x32xf32>
    %122 = arith.mulf %121, %119 : vector<32x32xf32>
    %123 = arith.addf %105, %122 : vector<32x32xf32>
    %c42 = arith.constant 42 : index
    %124 = memref.load %arg1[%c42] : memref<144xf32, #tpu.memory_space<smem>>
    %125 = vector.broadcast %124 : f32 to vector<32x32xf32>
    %126 = arith.mulf %125, %119 : vector<32x32xf32>
    %127 = arith.addf %109, %126 : vector<32x32xf32>
    %c78 = arith.constant 78 : index
    %128 = memref.load %arg1[%c78] : memref<144xf32, #tpu.memory_space<smem>>
    %129 = vector.broadcast %128 : f32 to vector<32x32xf32>
    %130 = arith.mulf %129, %119 : vector<32x32xf32>
    %131 = arith.addf %113, %130 : vector<32x32xf32>
    %c114 = arith.constant 114 : index
    %132 = memref.load %arg1[%c114] : memref<144xf32, #tpu.memory_space<smem>>
    %133 = vector.broadcast %132 : f32 to vector<32x32xf32>
    %134 = arith.mulf %133, %119 : vector<32x32xf32>
    %135 = arith.addf %117, %134 : vector<32x32xf32>
    %136 = vector.extract_strided_slice %5 {offsets = [0, 2, 1], sizes = [1, 32, 32], strides = [1, 1, 1]} : vector<4x34x34xf32> to vector<1x32x32xf32>
    %137 = vector.shape_cast %136 : vector<1x32x32xf32> to vector<32x32xf32>
    %c7 = arith.constant 7 : index
    %138 = memref.load %arg1[%c7] : memref<144xf32, #tpu.memory_space<smem>>
    %139 = vector.broadcast %138 : f32 to vector<32x32xf32>
    %140 = arith.mulf %139, %137 : vector<32x32xf32>
    %141 = arith.addf %123, %140 : vector<32x32xf32>
    %c43 = arith.constant 43 : index
    %142 = memref.load %arg1[%c43] : memref<144xf32, #tpu.memory_space<smem>>
    %143 = vector.broadcast %142 : f32 to vector<32x32xf32>
    %144 = arith.mulf %143, %137 : vector<32x32xf32>
    %145 = arith.addf %127, %144 : vector<32x32xf32>
    %c79 = arith.constant 79 : index
    %146 = memref.load %arg1[%c79] : memref<144xf32, #tpu.memory_space<smem>>
    %147 = vector.broadcast %146 : f32 to vector<32x32xf32>
    %148 = arith.mulf %147, %137 : vector<32x32xf32>
    %149 = arith.addf %131, %148 : vector<32x32xf32>
    %c115 = arith.constant 115 : index
    %150 = memref.load %arg1[%c115] : memref<144xf32, #tpu.memory_space<smem>>
    %151 = vector.broadcast %150 : f32 to vector<32x32xf32>
    %152 = arith.mulf %151, %137 : vector<32x32xf32>
    %153 = arith.addf %135, %152 : vector<32x32xf32>
    %154 = vector.extract_strided_slice %5 {offsets = [0, 2, 2], sizes = [1, 32, 32], strides = [1, 1, 1]} : vector<4x34x34xf32> to vector<1x32x32xf32>
    %155 = vector.shape_cast %154 : vector<1x32x32xf32> to vector<32x32xf32>
    %c8 = arith.constant 8 : index
    %156 = memref.load %arg1[%c8] : memref<144xf32, #tpu.memory_space<smem>>
    %157 = vector.broadcast %156 : f32 to vector<32x32xf32>
    %158 = arith.mulf %157, %155 : vector<32x32xf32>
    %159 = arith.addf %141, %158 : vector<32x32xf32>
    %c44 = arith.constant 44 : index
    %160 = memref.load %arg1[%c44] : memref<144xf32, #tpu.memory_space<smem>>
    %161 = vector.broadcast %160 : f32 to vector<32x32xf32>
    %162 = arith.mulf %161, %155 : vector<32x32xf32>
    %163 = arith.addf %145, %162 : vector<32x32xf32>
    %c80 = arith.constant 80 : index
    %164 = memref.load %arg1[%c80] : memref<144xf32, #tpu.memory_space<smem>>
    %165 = vector.broadcast %164 : f32 to vector<32x32xf32>
    %166 = arith.mulf %165, %155 : vector<32x32xf32>
    %167 = arith.addf %149, %166 : vector<32x32xf32>
    %c116 = arith.constant 116 : index
    %168 = memref.load %arg1[%c116] : memref<144xf32, #tpu.memory_space<smem>>
    %169 = vector.broadcast %168 : f32 to vector<32x32xf32>
    %170 = arith.mulf %169, %155 : vector<32x32xf32>
    %171 = arith.addf %153, %170 : vector<32x32xf32>
    %172 = vector.extract_strided_slice %5 {offsets = [1, 0, 0], sizes = [1, 32, 32], strides = [1, 1, 1]} : vector<4x34x34xf32> to vector<1x32x32xf32>
    %173 = vector.shape_cast %172 : vector<1x32x32xf32> to vector<32x32xf32>
    %c9 = arith.constant 9 : index
    %174 = memref.load %arg1[%c9] : memref<144xf32, #tpu.memory_space<smem>>
    %175 = vector.broadcast %174 : f32 to vector<32x32xf32>
    %176 = arith.mulf %175, %173 : vector<32x32xf32>
    %177 = arith.addf %159, %176 : vector<32x32xf32>
    %c45 = arith.constant 45 : index
    %178 = memref.load %arg1[%c45] : memref<144xf32, #tpu.memory_space<smem>>
    %179 = vector.broadcast %178 : f32 to vector<32x32xf32>
    %180 = arith.mulf %179, %173 : vector<32x32xf32>
    %181 = arith.addf %163, %180 : vector<32x32xf32>
    %c81 = arith.constant 81 : index
    %182 = memref.load %arg1[%c81] : memref<144xf32, #tpu.memory_space<smem>>
    %183 = vector.broadcast %182 : f32 to vector<32x32xf32>
    %184 = arith.mulf %183, %173 : vector<32x32xf32>
    %185 = arith.addf %167, %184 : vector<32x32xf32>
    %c117 = arith.constant 117 : index
    %186 = memref.load %arg1[%c117] : memref<144xf32, #tpu.memory_space<smem>>
    %187 = vector.broadcast %186 : f32 to vector<32x32xf32>
    %188 = arith.mulf %187, %173 : vector<32x32xf32>
    %189 = arith.addf %171, %188 : vector<32x32xf32>
    %190 = vector.extract_strided_slice %5 {offsets = [1, 0, 1], sizes = [1, 32, 32], strides = [1, 1, 1]} : vector<4x34x34xf32> to vector<1x32x32xf32>
    %191 = vector.shape_cast %190 : vector<1x32x32xf32> to vector<32x32xf32>
    %c10 = arith.constant 10 : index
    %192 = memref.load %arg1[%c10] : memref<144xf32, #tpu.memory_space<smem>>
    %193 = vector.broadcast %192 : f32 to vector<32x32xf32>
    %194 = arith.mulf %193, %191 : vector<32x32xf32>
    %195 = arith.addf %177, %194 : vector<32x32xf32>
    %c46 = arith.constant 46 : index
    %196 = memref.load %arg1[%c46] : memref<144xf32, #tpu.memory_space<smem>>
    %197 = vector.broadcast %196 : f32 to vector<32x32xf32>
    %198 = arith.mulf %197, %191 : vector<32x32xf32>
    %199 = arith.addf %181, %198 : vector<32x32xf32>
    %c82 = arith.constant 82 : index
    %200 = memref.load %arg1[%c82] : memref<144xf32, #tpu.memory_space<smem>>
    %201 = vector.broadcast %200 : f32 to vector<32x32xf32>
    %202 = arith.mulf %201, %191 : vector<32x32xf32>
    %203 = arith.addf %185, %202 : vector<32x32xf32>
    %c118 = arith.constant 118 : index
    %204 = memref.load %arg1[%c118] : memref<144xf32, #tpu.memory_space<smem>>
    %205 = vector.broadcast %204 : f32 to vector<32x32xf32>
    %206 = arith.mulf %205, %191 : vector<32x32xf32>
    %207 = arith.addf %189, %206 : vector<32x32xf32>
    %208 = vector.extract_strided_slice %5 {offsets = [1, 0, 2], sizes = [1, 32, 32], strides = [1, 1, 1]} : vector<4x34x34xf32> to vector<1x32x32xf32>
    %209 = vector.shape_cast %208 : vector<1x32x32xf32> to vector<32x32xf32>
    %c11 = arith.constant 11 : index
    %210 = memref.load %arg1[%c11] : memref<144xf32, #tpu.memory_space<smem>>
    %211 = vector.broadcast %210 : f32 to vector<32x32xf32>
    %212 = arith.mulf %211, %209 : vector<32x32xf32>
    %213 = arith.addf %195, %212 : vector<32x32xf32>
    %c47 = arith.constant 47 : index
    %214 = memref.load %arg1[%c47] : memref<144xf32, #tpu.memory_space<smem>>
    %215 = vector.broadcast %214 : f32 to vector<32x32xf32>
    %216 = arith.mulf %215, %209 : vector<32x32xf32>
    %217 = arith.addf %199, %216 : vector<32x32xf32>
    %c83 = arith.constant 83 : index
    %218 = memref.load %arg1[%c83] : memref<144xf32, #tpu.memory_space<smem>>
    %219 = vector.broadcast %218 : f32 to vector<32x32xf32>
    %220 = arith.mulf %219, %209 : vector<32x32xf32>
    %221 = arith.addf %203, %220 : vector<32x32xf32>
    %c119 = arith.constant 119 : index
    %222 = memref.load %arg1[%c119] : memref<144xf32, #tpu.memory_space<smem>>
    %223 = vector.broadcast %222 : f32 to vector<32x32xf32>
    %224 = arith.mulf %223, %209 : vector<32x32xf32>
    %225 = arith.addf %207, %224 : vector<32x32xf32>
    %226 = vector.extract_strided_slice %5 {offsets = [1, 1, 0], sizes = [1, 32, 32], strides = [1, 1, 1]} : vector<4x34x34xf32> to vector<1x32x32xf32>
    %227 = vector.shape_cast %226 : vector<1x32x32xf32> to vector<32x32xf32>
    %c12 = arith.constant 12 : index
    %228 = memref.load %arg1[%c12] : memref<144xf32, #tpu.memory_space<smem>>
    %229 = vector.broadcast %228 : f32 to vector<32x32xf32>
    %230 = arith.mulf %229, %227 : vector<32x32xf32>
    %231 = arith.addf %213, %230 : vector<32x32xf32>
    %c48 = arith.constant 48 : index
    %232 = memref.load %arg1[%c48] : memref<144xf32, #tpu.memory_space<smem>>
    %233 = vector.broadcast %232 : f32 to vector<32x32xf32>
    %234 = arith.mulf %233, %227 : vector<32x32xf32>
    %235 = arith.addf %217, %234 : vector<32x32xf32>
    %c84 = arith.constant 84 : index
    %236 = memref.load %arg1[%c84] : memref<144xf32, #tpu.memory_space<smem>>
    %237 = vector.broadcast %236 : f32 to vector<32x32xf32>
    %238 = arith.mulf %237, %227 : vector<32x32xf32>
    %239 = arith.addf %221, %238 : vector<32x32xf32>
    %c120 = arith.constant 120 : index
    %240 = memref.load %arg1[%c120] : memref<144xf32, #tpu.memory_space<smem>>
    %241 = vector.broadcast %240 : f32 to vector<32x32xf32>
    %242 = arith.mulf %241, %227 : vector<32x32xf32>
    %243 = arith.addf %225, %242 : vector<32x32xf32>
    %244 = vector.extract_strided_slice %5 {offsets = [1, 1, 1], sizes = [1, 32, 32], strides = [1, 1, 1]} : vector<4x34x34xf32> to vector<1x32x32xf32>
    %245 = vector.shape_cast %244 : vector<1x32x32xf32> to vector<32x32xf32>
    %c13 = arith.constant 13 : index
    %246 = memref.load %arg1[%c13] : memref<144xf32, #tpu.memory_space<smem>>
    %247 = vector.broadcast %246 : f32 to vector<32x32xf32>
    %248 = arith.mulf %247, %245 : vector<32x32xf32>
    %249 = arith.addf %231, %248 : vector<32x32xf32>
    %c49 = arith.constant 49 : index
    %250 = memref.load %arg1[%c49] : memref<144xf32, #tpu.memory_space<smem>>
    %251 = vector.broadcast %250 : f32 to vector<32x32xf32>
    %252 = arith.mulf %251, %245 : vector<32x32xf32>
    %253 = arith.addf %235, %252 : vector<32x32xf32>
    %c85 = arith.constant 85 : index
    %254 = memref.load %arg1[%c85] : memref<144xf32, #tpu.memory_space<smem>>
    %255 = vector.broadcast %254 : f32 to vector<32x32xf32>
    %256 = arith.mulf %255, %245 : vector<32x32xf32>
    %257 = arith.addf %239, %256 : vector<32x32xf32>
    %c121 = arith.constant 121 : index
    %258 = memref.load %arg1[%c121] : memref<144xf32, #tpu.memory_space<smem>>
    %259 = vector.broadcast %258 : f32 to vector<32x32xf32>
    %260 = arith.mulf %259, %245 : vector<32x32xf32>
    %261 = arith.addf %243, %260 : vector<32x32xf32>
    %262 = vector.extract_strided_slice %5 {offsets = [1, 1, 2], sizes = [1, 32, 32], strides = [1, 1, 1]} : vector<4x34x34xf32> to vector<1x32x32xf32>
    %263 = vector.shape_cast %262 : vector<1x32x32xf32> to vector<32x32xf32>
    %c14 = arith.constant 14 : index
    %264 = memref.load %arg1[%c14] : memref<144xf32, #tpu.memory_space<smem>>
    %265 = vector.broadcast %264 : f32 to vector<32x32xf32>
    %266 = arith.mulf %265, %263 : vector<32x32xf32>
    %267 = arith.addf %249, %266 : vector<32x32xf32>
    %c50 = arith.constant 50 : index
    %268 = memref.load %arg1[%c50] : memref<144xf32, #tpu.memory_space<smem>>
    %269 = vector.broadcast %268 : f32 to vector<32x32xf32>
    %270 = arith.mulf %269, %263 : vector<32x32xf32>
    %271 = arith.addf %253, %270 : vector<32x32xf32>
    %c86 = arith.constant 86 : index
    %272 = memref.load %arg1[%c86] : memref<144xf32, #tpu.memory_space<smem>>
    %273 = vector.broadcast %272 : f32 to vector<32x32xf32>
    %274 = arith.mulf %273, %263 : vector<32x32xf32>
    %275 = arith.addf %257, %274 : vector<32x32xf32>
    %c122 = arith.constant 122 : index
    %276 = memref.load %arg1[%c122] : memref<144xf32, #tpu.memory_space<smem>>
    %277 = vector.broadcast %276 : f32 to vector<32x32xf32>
    %278 = arith.mulf %277, %263 : vector<32x32xf32>
    %279 = arith.addf %261, %278 : vector<32x32xf32>
    %280 = vector.extract_strided_slice %5 {offsets = [1, 2, 0], sizes = [1, 32, 32], strides = [1, 1, 1]} : vector<4x34x34xf32> to vector<1x32x32xf32>
    %281 = vector.shape_cast %280 : vector<1x32x32xf32> to vector<32x32xf32>
    %c15 = arith.constant 15 : index
    %282 = memref.load %arg1[%c15] : memref<144xf32, #tpu.memory_space<smem>>
    %283 = vector.broadcast %282 : f32 to vector<32x32xf32>
    %284 = arith.mulf %283, %281 : vector<32x32xf32>
    %285 = arith.addf %267, %284 : vector<32x32xf32>
    %c51 = arith.constant 51 : index
    %286 = memref.load %arg1[%c51] : memref<144xf32, #tpu.memory_space<smem>>
    %287 = vector.broadcast %286 : f32 to vector<32x32xf32>
    %288 = arith.mulf %287, %281 : vector<32x32xf32>
    %289 = arith.addf %271, %288 : vector<32x32xf32>
    %c87 = arith.constant 87 : index
    %290 = memref.load %arg1[%c87] : memref<144xf32, #tpu.memory_space<smem>>
    %291 = vector.broadcast %290 : f32 to vector<32x32xf32>
    %292 = arith.mulf %291, %281 : vector<32x32xf32>
    %293 = arith.addf %275, %292 : vector<32x32xf32>
    %c123 = arith.constant 123 : index
    %294 = memref.load %arg1[%c123] : memref<144xf32, #tpu.memory_space<smem>>
    %295 = vector.broadcast %294 : f32 to vector<32x32xf32>
    %296 = arith.mulf %295, %281 : vector<32x32xf32>
    %297 = arith.addf %279, %296 : vector<32x32xf32>
    %298 = vector.extract_strided_slice %5 {offsets = [1, 2, 1], sizes = [1, 32, 32], strides = [1, 1, 1]} : vector<4x34x34xf32> to vector<1x32x32xf32>
    %299 = vector.shape_cast %298 : vector<1x32x32xf32> to vector<32x32xf32>
    %c16 = arith.constant 16 : index
    %300 = memref.load %arg1[%c16] : memref<144xf32, #tpu.memory_space<smem>>
    %301 = vector.broadcast %300 : f32 to vector<32x32xf32>
    %302 = arith.mulf %301, %299 : vector<32x32xf32>
    %303 = arith.addf %285, %302 : vector<32x32xf32>
    %c52 = arith.constant 52 : index
    %304 = memref.load %arg1[%c52] : memref<144xf32, #tpu.memory_space<smem>>
    %305 = vector.broadcast %304 : f32 to vector<32x32xf32>
    %306 = arith.mulf %305, %299 : vector<32x32xf32>
    %307 = arith.addf %289, %306 : vector<32x32xf32>
    %c88 = arith.constant 88 : index
    %308 = memref.load %arg1[%c88] : memref<144xf32, #tpu.memory_space<smem>>
    %309 = vector.broadcast %308 : f32 to vector<32x32xf32>
    %310 = arith.mulf %309, %299 : vector<32x32xf32>
    %311 = arith.addf %293, %310 : vector<32x32xf32>
    %c124 = arith.constant 124 : index
    %312 = memref.load %arg1[%c124] : memref<144xf32, #tpu.memory_space<smem>>
    %313 = vector.broadcast %312 : f32 to vector<32x32xf32>
    %314 = arith.mulf %313, %299 : vector<32x32xf32>
    %315 = arith.addf %297, %314 : vector<32x32xf32>
    %316 = vector.extract_strided_slice %5 {offsets = [1, 2, 2], sizes = [1, 32, 32], strides = [1, 1, 1]} : vector<4x34x34xf32> to vector<1x32x32xf32>
    %317 = vector.shape_cast %316 : vector<1x32x32xf32> to vector<32x32xf32>
    %c17 = arith.constant 17 : index
    %318 = memref.load %arg1[%c17] : memref<144xf32, #tpu.memory_space<smem>>
    %319 = vector.broadcast %318 : f32 to vector<32x32xf32>
    %320 = arith.mulf %319, %317 : vector<32x32xf32>
    %321 = arith.addf %303, %320 : vector<32x32xf32>
    %c53 = arith.constant 53 : index
    %322 = memref.load %arg1[%c53] : memref<144xf32, #tpu.memory_space<smem>>
    %323 = vector.broadcast %322 : f32 to vector<32x32xf32>
    %324 = arith.mulf %323, %317 : vector<32x32xf32>
    %325 = arith.addf %307, %324 : vector<32x32xf32>
    %c89 = arith.constant 89 : index
    %326 = memref.load %arg1[%c89] : memref<144xf32, #tpu.memory_space<smem>>
    %327 = vector.broadcast %326 : f32 to vector<32x32xf32>
    %328 = arith.mulf %327, %317 : vector<32x32xf32>
    %329 = arith.addf %311, %328 : vector<32x32xf32>
    %c125 = arith.constant 125 : index
    %330 = memref.load %arg1[%c125] : memref<144xf32, #tpu.memory_space<smem>>
    %331 = vector.broadcast %330 : f32 to vector<32x32xf32>
    %332 = arith.mulf %331, %317 : vector<32x32xf32>
    %333 = arith.addf %315, %332 : vector<32x32xf32>
    %334 = vector.extract_strided_slice %5 {offsets = [2, 0, 0], sizes = [1, 32, 32], strides = [1, 1, 1]} : vector<4x34x34xf32> to vector<1x32x32xf32>
    %335 = vector.shape_cast %334 : vector<1x32x32xf32> to vector<32x32xf32>
    %c18 = arith.constant 18 : index
    %336 = memref.load %arg1[%c18] : memref<144xf32, #tpu.memory_space<smem>>
    %337 = vector.broadcast %336 : f32 to vector<32x32xf32>
    %338 = arith.mulf %337, %335 : vector<32x32xf32>
    %339 = arith.addf %321, %338 : vector<32x32xf32>
    %c54 = arith.constant 54 : index
    %340 = memref.load %arg1[%c54] : memref<144xf32, #tpu.memory_space<smem>>
    %341 = vector.broadcast %340 : f32 to vector<32x32xf32>
    %342 = arith.mulf %341, %335 : vector<32x32xf32>
    %343 = arith.addf %325, %342 : vector<32x32xf32>
    %c90 = arith.constant 90 : index
    %344 = memref.load %arg1[%c90] : memref<144xf32, #tpu.memory_space<smem>>
    %345 = vector.broadcast %344 : f32 to vector<32x32xf32>
    %346 = arith.mulf %345, %335 : vector<32x32xf32>
    %347 = arith.addf %329, %346 : vector<32x32xf32>
    %c126 = arith.constant 126 : index
    %348 = memref.load %arg1[%c126] : memref<144xf32, #tpu.memory_space<smem>>
    %349 = vector.broadcast %348 : f32 to vector<32x32xf32>
    %350 = arith.mulf %349, %335 : vector<32x32xf32>
    %351 = arith.addf %333, %350 : vector<32x32xf32>
    %352 = vector.extract_strided_slice %5 {offsets = [2, 0, 1], sizes = [1, 32, 32], strides = [1, 1, 1]} : vector<4x34x34xf32> to vector<1x32x32xf32>
    %353 = vector.shape_cast %352 : vector<1x32x32xf32> to vector<32x32xf32>
    %c19 = arith.constant 19 : index
    %354 = memref.load %arg1[%c19] : memref<144xf32, #tpu.memory_space<smem>>
    %355 = vector.broadcast %354 : f32 to vector<32x32xf32>
    %356 = arith.mulf %355, %353 : vector<32x32xf32>
    %357 = arith.addf %339, %356 : vector<32x32xf32>
    %c55 = arith.constant 55 : index
    %358 = memref.load %arg1[%c55] : memref<144xf32, #tpu.memory_space<smem>>
    %359 = vector.broadcast %358 : f32 to vector<32x32xf32>
    %360 = arith.mulf %359, %353 : vector<32x32xf32>
    %361 = arith.addf %343, %360 : vector<32x32xf32>
    %c91 = arith.constant 91 : index
    %362 = memref.load %arg1[%c91] : memref<144xf32, #tpu.memory_space<smem>>
    %363 = vector.broadcast %362 : f32 to vector<32x32xf32>
    %364 = arith.mulf %363, %353 : vector<32x32xf32>
    %365 = arith.addf %347, %364 : vector<32x32xf32>
    %c127 = arith.constant 127 : index
    %366 = memref.load %arg1[%c127] : memref<144xf32, #tpu.memory_space<smem>>
    %367 = vector.broadcast %366 : f32 to vector<32x32xf32>
    %368 = arith.mulf %367, %353 : vector<32x32xf32>
    %369 = arith.addf %351, %368 : vector<32x32xf32>
    %370 = vector.extract_strided_slice %5 {offsets = [2, 0, 2], sizes = [1, 32, 32], strides = [1, 1, 1]} : vector<4x34x34xf32> to vector<1x32x32xf32>
    %371 = vector.shape_cast %370 : vector<1x32x32xf32> to vector<32x32xf32>
    %c20 = arith.constant 20 : index
    %372 = memref.load %arg1[%c20] : memref<144xf32, #tpu.memory_space<smem>>
    %373 = vector.broadcast %372 : f32 to vector<32x32xf32>
    %374 = arith.mulf %373, %371 : vector<32x32xf32>
    %375 = arith.addf %357, %374 : vector<32x32xf32>
    %c56 = arith.constant 56 : index
    %376 = memref.load %arg1[%c56] : memref<144xf32, #tpu.memory_space<smem>>
    %377 = vector.broadcast %376 : f32 to vector<32x32xf32>
    %378 = arith.mulf %377, %371 : vector<32x32xf32>
    %379 = arith.addf %361, %378 : vector<32x32xf32>
    %c92 = arith.constant 92 : index
    %380 = memref.load %arg1[%c92] : memref<144xf32, #tpu.memory_space<smem>>
    %381 = vector.broadcast %380 : f32 to vector<32x32xf32>
    %382 = arith.mulf %381, %371 : vector<32x32xf32>
    %383 = arith.addf %365, %382 : vector<32x32xf32>
    %c128 = arith.constant 128 : index
    %384 = memref.load %arg1[%c128] : memref<144xf32, #tpu.memory_space<smem>>
    %385 = vector.broadcast %384 : f32 to vector<32x32xf32>
    %386 = arith.mulf %385, %371 : vector<32x32xf32>
    %387 = arith.addf %369, %386 : vector<32x32xf32>
    %388 = vector.extract_strided_slice %5 {offsets = [2, 1, 0], sizes = [1, 32, 32], strides = [1, 1, 1]} : vector<4x34x34xf32> to vector<1x32x32xf32>
    %389 = vector.shape_cast %388 : vector<1x32x32xf32> to vector<32x32xf32>
    %c21 = arith.constant 21 : index
    %390 = memref.load %arg1[%c21] : memref<144xf32, #tpu.memory_space<smem>>
    %391 = vector.broadcast %390 : f32 to vector<32x32xf32>
    %392 = arith.mulf %391, %389 : vector<32x32xf32>
    %393 = arith.addf %375, %392 : vector<32x32xf32>
    %c57 = arith.constant 57 : index
    %394 = memref.load %arg1[%c57] : memref<144xf32, #tpu.memory_space<smem>>
    %395 = vector.broadcast %394 : f32 to vector<32x32xf32>
    %396 = arith.mulf %395, %389 : vector<32x32xf32>
    %397 = arith.addf %379, %396 : vector<32x32xf32>
    %c93 = arith.constant 93 : index
    %398 = memref.load %arg1[%c93] : memref<144xf32, #tpu.memory_space<smem>>
    %399 = vector.broadcast %398 : f32 to vector<32x32xf32>
    %400 = arith.mulf %399, %389 : vector<32x32xf32>
    %401 = arith.addf %383, %400 : vector<32x32xf32>
    %c129 = arith.constant 129 : index
    %402 = memref.load %arg1[%c129] : memref<144xf32, #tpu.memory_space<smem>>
    %403 = vector.broadcast %402 : f32 to vector<32x32xf32>
    %404 = arith.mulf %403, %389 : vector<32x32xf32>
    %405 = arith.addf %387, %404 : vector<32x32xf32>
    %406 = vector.extract_strided_slice %5 {offsets = [2, 1, 1], sizes = [1, 32, 32], strides = [1, 1, 1]} : vector<4x34x34xf32> to vector<1x32x32xf32>
    %407 = vector.shape_cast %406 : vector<1x32x32xf32> to vector<32x32xf32>
    %c22 = arith.constant 22 : index
    %408 = memref.load %arg1[%c22] : memref<144xf32, #tpu.memory_space<smem>>
    %409 = vector.broadcast %408 : f32 to vector<32x32xf32>
    %410 = arith.mulf %409, %407 : vector<32x32xf32>
    %411 = arith.addf %393, %410 : vector<32x32xf32>
    %c58 = arith.constant 58 : index
    %412 = memref.load %arg1[%c58] : memref<144xf32, #tpu.memory_space<smem>>
    %413 = vector.broadcast %412 : f32 to vector<32x32xf32>
    %414 = arith.mulf %413, %407 : vector<32x32xf32>
    %415 = arith.addf %397, %414 : vector<32x32xf32>
    %c94 = arith.constant 94 : index
    %416 = memref.load %arg1[%c94] : memref<144xf32, #tpu.memory_space<smem>>
    %417 = vector.broadcast %416 : f32 to vector<32x32xf32>
    %418 = arith.mulf %417, %407 : vector<32x32xf32>
    %419 = arith.addf %401, %418 : vector<32x32xf32>
    %c130 = arith.constant 130 : index
    %420 = memref.load %arg1[%c130] : memref<144xf32, #tpu.memory_space<smem>>
    %421 = vector.broadcast %420 : f32 to vector<32x32xf32>
    %422 = arith.mulf %421, %407 : vector<32x32xf32>
    %423 = arith.addf %405, %422 : vector<32x32xf32>
    %424 = vector.extract_strided_slice %5 {offsets = [2, 1, 2], sizes = [1, 32, 32], strides = [1, 1, 1]} : vector<4x34x34xf32> to vector<1x32x32xf32>
    %425 = vector.shape_cast %424 : vector<1x32x32xf32> to vector<32x32xf32>
    %c23 = arith.constant 23 : index
    %426 = memref.load %arg1[%c23] : memref<144xf32, #tpu.memory_space<smem>>
    %427 = vector.broadcast %426 : f32 to vector<32x32xf32>
    %428 = arith.mulf %427, %425 : vector<32x32xf32>
    %429 = arith.addf %411, %428 : vector<32x32xf32>
    %c59 = arith.constant 59 : index
    %430 = memref.load %arg1[%c59] : memref<144xf32, #tpu.memory_space<smem>>
    %431 = vector.broadcast %430 : f32 to vector<32x32xf32>
    %432 = arith.mulf %431, %425 : vector<32x32xf32>
    %433 = arith.addf %415, %432 : vector<32x32xf32>
    %c95 = arith.constant 95 : index
    %434 = memref.load %arg1[%c95] : memref<144xf32, #tpu.memory_space<smem>>
    %435 = vector.broadcast %434 : f32 to vector<32x32xf32>
    %436 = arith.mulf %435, %425 : vector<32x32xf32>
    %437 = arith.addf %419, %436 : vector<32x32xf32>
    %c131 = arith.constant 131 : index
    %438 = memref.load %arg1[%c131] : memref<144xf32, #tpu.memory_space<smem>>
    %439 = vector.broadcast %438 : f32 to vector<32x32xf32>
    %440 = arith.mulf %439, %425 : vector<32x32xf32>
    %441 = arith.addf %423, %440 : vector<32x32xf32>
    %442 = vector.extract_strided_slice %5 {offsets = [2, 2, 0], sizes = [1, 32, 32], strides = [1, 1, 1]} : vector<4x34x34xf32> to vector<1x32x32xf32>
    %443 = vector.shape_cast %442 : vector<1x32x32xf32> to vector<32x32xf32>
    %c24 = arith.constant 24 : index
    %444 = memref.load %arg1[%c24] : memref<144xf32, #tpu.memory_space<smem>>
    %445 = vector.broadcast %444 : f32 to vector<32x32xf32>
    %446 = arith.mulf %445, %443 : vector<32x32xf32>
    %447 = arith.addf %429, %446 : vector<32x32xf32>
    %c60 = arith.constant 60 : index
    %448 = memref.load %arg1[%c60] : memref<144xf32, #tpu.memory_space<smem>>
    %449 = vector.broadcast %448 : f32 to vector<32x32xf32>
    %450 = arith.mulf %449, %443 : vector<32x32xf32>
    %451 = arith.addf %433, %450 : vector<32x32xf32>
    %c96 = arith.constant 96 : index
    %452 = memref.load %arg1[%c96] : memref<144xf32, #tpu.memory_space<smem>>
    %453 = vector.broadcast %452 : f32 to vector<32x32xf32>
    %454 = arith.mulf %453, %443 : vector<32x32xf32>
    %455 = arith.addf %437, %454 : vector<32x32xf32>
    %c132 = arith.constant 132 : index
    %456 = memref.load %arg1[%c132] : memref<144xf32, #tpu.memory_space<smem>>
    %457 = vector.broadcast %456 : f32 to vector<32x32xf32>
    %458 = arith.mulf %457, %443 : vector<32x32xf32>
    %459 = arith.addf %441, %458 : vector<32x32xf32>
    %460 = vector.extract_strided_slice %5 {offsets = [2, 2, 1], sizes = [1, 32, 32], strides = [1, 1, 1]} : vector<4x34x34xf32> to vector<1x32x32xf32>
    %461 = vector.shape_cast %460 : vector<1x32x32xf32> to vector<32x32xf32>
    %c25 = arith.constant 25 : index
    %462 = memref.load %arg1[%c25] : memref<144xf32, #tpu.memory_space<smem>>
    %463 = vector.broadcast %462 : f32 to vector<32x32xf32>
    %464 = arith.mulf %463, %461 : vector<32x32xf32>
    %465 = arith.addf %447, %464 : vector<32x32xf32>
    %c61 = arith.constant 61 : index
    %466 = memref.load %arg1[%c61] : memref<144xf32, #tpu.memory_space<smem>>
    %467 = vector.broadcast %466 : f32 to vector<32x32xf32>
    %468 = arith.mulf %467, %461 : vector<32x32xf32>
    %469 = arith.addf %451, %468 : vector<32x32xf32>
    %c97 = arith.constant 97 : index
    %470 = memref.load %arg1[%c97] : memref<144xf32, #tpu.memory_space<smem>>
    %471 = vector.broadcast %470 : f32 to vector<32x32xf32>
    %472 = arith.mulf %471, %461 : vector<32x32xf32>
    %473 = arith.addf %455, %472 : vector<32x32xf32>
    %c133 = arith.constant 133 : index
    %474 = memref.load %arg1[%c133] : memref<144xf32, #tpu.memory_space<smem>>
    %475 = vector.broadcast %474 : f32 to vector<32x32xf32>
    %476 = arith.mulf %475, %461 : vector<32x32xf32>
    %477 = arith.addf %459, %476 : vector<32x32xf32>
    %478 = vector.extract_strided_slice %5 {offsets = [2, 2, 2], sizes = [1, 32, 32], strides = [1, 1, 1]} : vector<4x34x34xf32> to vector<1x32x32xf32>
    %479 = vector.shape_cast %478 : vector<1x32x32xf32> to vector<32x32xf32>
    %c26 = arith.constant 26 : index
    %480 = memref.load %arg1[%c26] : memref<144xf32, #tpu.memory_space<smem>>
    %481 = vector.broadcast %480 : f32 to vector<32x32xf32>
    %482 = arith.mulf %481, %479 : vector<32x32xf32>
    %483 = arith.addf %465, %482 : vector<32x32xf32>
    %c62 = arith.constant 62 : index
    %484 = memref.load %arg1[%c62] : memref<144xf32, #tpu.memory_space<smem>>
    %485 = vector.broadcast %484 : f32 to vector<32x32xf32>
    %486 = arith.mulf %485, %479 : vector<32x32xf32>
    %487 = arith.addf %469, %486 : vector<32x32xf32>
    %c98 = arith.constant 98 : index
    %488 = memref.load %arg1[%c98] : memref<144xf32, #tpu.memory_space<smem>>
    %489 = vector.broadcast %488 : f32 to vector<32x32xf32>
    %490 = arith.mulf %489, %479 : vector<32x32xf32>
    %491 = arith.addf %473, %490 : vector<32x32xf32>
    %c134 = arith.constant 134 : index
    %492 = memref.load %arg1[%c134] : memref<144xf32, #tpu.memory_space<smem>>
    %493 = vector.broadcast %492 : f32 to vector<32x32xf32>
    %494 = arith.mulf %493, %479 : vector<32x32xf32>
    %495 = arith.addf %477, %494 : vector<32x32xf32>
    %496 = vector.extract_strided_slice %5 {offsets = [3, 0, 0], sizes = [1, 32, 32], strides = [1, 1, 1]} : vector<4x34x34xf32> to vector<1x32x32xf32>
    %497 = vector.shape_cast %496 : vector<1x32x32xf32> to vector<32x32xf32>
    %c27 = arith.constant 27 : index
    %498 = memref.load %arg1[%c27] : memref<144xf32, #tpu.memory_space<smem>>
    %499 = vector.broadcast %498 : f32 to vector<32x32xf32>
    %500 = arith.mulf %499, %497 : vector<32x32xf32>
    %501 = arith.addf %483, %500 : vector<32x32xf32>
    %c63 = arith.constant 63 : index
    %502 = memref.load %arg1[%c63] : memref<144xf32, #tpu.memory_space<smem>>
    %503 = vector.broadcast %502 : f32 to vector<32x32xf32>
    %504 = arith.mulf %503, %497 : vector<32x32xf32>
    %505 = arith.addf %487, %504 : vector<32x32xf32>
    %c99 = arith.constant 99 : index
    %506 = memref.load %arg1[%c99] : memref<144xf32, #tpu.memory_space<smem>>
    %507 = vector.broadcast %506 : f32 to vector<32x32xf32>
    %508 = arith.mulf %507, %497 : vector<32x32xf32>
    %509 = arith.addf %491, %508 : vector<32x32xf32>
    %c135 = arith.constant 135 : index
    %510 = memref.load %arg1[%c135] : memref<144xf32, #tpu.memory_space<smem>>
    %511 = vector.broadcast %510 : f32 to vector<32x32xf32>
    %512 = arith.mulf %511, %497 : vector<32x32xf32>
    %513 = arith.addf %495, %512 : vector<32x32xf32>
    %514 = vector.extract_strided_slice %5 {offsets = [3, 0, 1], sizes = [1, 32, 32], strides = [1, 1, 1]} : vector<4x34x34xf32> to vector<1x32x32xf32>
    %515 = vector.shape_cast %514 : vector<1x32x32xf32> to vector<32x32xf32>
    %c28 = arith.constant 28 : index
    %516 = memref.load %arg1[%c28] : memref<144xf32, #tpu.memory_space<smem>>
    %517 = vector.broadcast %516 : f32 to vector<32x32xf32>
    %518 = arith.mulf %517, %515 : vector<32x32xf32>
    %519 = arith.addf %501, %518 : vector<32x32xf32>
    %c64 = arith.constant 64 : index
    %520 = memref.load %arg1[%c64] : memref<144xf32, #tpu.memory_space<smem>>
    %521 = vector.broadcast %520 : f32 to vector<32x32xf32>
    %522 = arith.mulf %521, %515 : vector<32x32xf32>
    %523 = arith.addf %505, %522 : vector<32x32xf32>
    %c100 = arith.constant 100 : index
    %524 = memref.load %arg1[%c100] : memref<144xf32, #tpu.memory_space<smem>>
    %525 = vector.broadcast %524 : f32 to vector<32x32xf32>
    %526 = arith.mulf %525, %515 : vector<32x32xf32>
    %527 = arith.addf %509, %526 : vector<32x32xf32>
    %c136 = arith.constant 136 : index
    %528 = memref.load %arg1[%c136] : memref<144xf32, #tpu.memory_space<smem>>
    %529 = vector.broadcast %528 : f32 to vector<32x32xf32>
    %530 = arith.mulf %529, %515 : vector<32x32xf32>
    %531 = arith.addf %513, %530 : vector<32x32xf32>
    %532 = vector.extract_strided_slice %5 {offsets = [3, 0, 2], sizes = [1, 32, 32], strides = [1, 1, 1]} : vector<4x34x34xf32> to vector<1x32x32xf32>
    %533 = vector.shape_cast %532 : vector<1x32x32xf32> to vector<32x32xf32>
    %c29 = arith.constant 29 : index
    %534 = memref.load %arg1[%c29] : memref<144xf32, #tpu.memory_space<smem>>
    %535 = vector.broadcast %534 : f32 to vector<32x32xf32>
    %536 = arith.mulf %535, %533 : vector<32x32xf32>
    %537 = arith.addf %519, %536 : vector<32x32xf32>
    %c65 = arith.constant 65 : index
    %538 = memref.load %arg1[%c65] : memref<144xf32, #tpu.memory_space<smem>>
    %539 = vector.broadcast %538 : f32 to vector<32x32xf32>
    %540 = arith.mulf %539, %533 : vector<32x32xf32>
    %541 = arith.addf %523, %540 : vector<32x32xf32>
    %c101 = arith.constant 101 : index
    %542 = memref.load %arg1[%c101] : memref<144xf32, #tpu.memory_space<smem>>
    %543 = vector.broadcast %542 : f32 to vector<32x32xf32>
    %544 = arith.mulf %543, %533 : vector<32x32xf32>
    %545 = arith.addf %527, %544 : vector<32x32xf32>
    %c137 = arith.constant 137 : index
    %546 = memref.load %arg1[%c137] : memref<144xf32, #tpu.memory_space<smem>>
    %547 = vector.broadcast %546 : f32 to vector<32x32xf32>
    %548 = arith.mulf %547, %533 : vector<32x32xf32>
    %549 = arith.addf %531, %548 : vector<32x32xf32>
    %550 = vector.extract_strided_slice %5 {offsets = [3, 1, 0], sizes = [1, 32, 32], strides = [1, 1, 1]} : vector<4x34x34xf32> to vector<1x32x32xf32>
    %551 = vector.shape_cast %550 : vector<1x32x32xf32> to vector<32x32xf32>
    %c30 = arith.constant 30 : index
    %552 = memref.load %arg1[%c30] : memref<144xf32, #tpu.memory_space<smem>>
    %553 = vector.broadcast %552 : f32 to vector<32x32xf32>
    %554 = arith.mulf %553, %551 : vector<32x32xf32>
    %555 = arith.addf %537, %554 : vector<32x32xf32>
    %c66 = arith.constant 66 : index
    %556 = memref.load %arg1[%c66] : memref<144xf32, #tpu.memory_space<smem>>
    %557 = vector.broadcast %556 : f32 to vector<32x32xf32>
    %558 = arith.mulf %557, %551 : vector<32x32xf32>
    %559 = arith.addf %541, %558 : vector<32x32xf32>
    %c102 = arith.constant 102 : index
    %560 = memref.load %arg1[%c102] : memref<144xf32, #tpu.memory_space<smem>>
    %561 = vector.broadcast %560 : f32 to vector<32x32xf32>
    %562 = arith.mulf %561, %551 : vector<32x32xf32>
    %563 = arith.addf %545, %562 : vector<32x32xf32>
    %c138 = arith.constant 138 : index
    %564 = memref.load %arg1[%c138] : memref<144xf32, #tpu.memory_space<smem>>
    %565 = vector.broadcast %564 : f32 to vector<32x32xf32>
    %566 = arith.mulf %565, %551 : vector<32x32xf32>
    %567 = arith.addf %549, %566 : vector<32x32xf32>
    %568 = vector.extract_strided_slice %5 {offsets = [3, 1, 1], sizes = [1, 32, 32], strides = [1, 1, 1]} : vector<4x34x34xf32> to vector<1x32x32xf32>
    %569 = vector.shape_cast %568 : vector<1x32x32xf32> to vector<32x32xf32>
    %c31 = arith.constant 31 : index
    %570 = memref.load %arg1[%c31] : memref<144xf32, #tpu.memory_space<smem>>
    %571 = vector.broadcast %570 : f32 to vector<32x32xf32>
    %572 = arith.mulf %571, %569 : vector<32x32xf32>
    %573 = arith.addf %555, %572 : vector<32x32xf32>
    %c67 = arith.constant 67 : index
    %574 = memref.load %arg1[%c67] : memref<144xf32, #tpu.memory_space<smem>>
    %575 = vector.broadcast %574 : f32 to vector<32x32xf32>
    %576 = arith.mulf %575, %569 : vector<32x32xf32>
    %577 = arith.addf %559, %576 : vector<32x32xf32>
    %c103 = arith.constant 103 : index
    %578 = memref.load %arg1[%c103] : memref<144xf32, #tpu.memory_space<smem>>
    %579 = vector.broadcast %578 : f32 to vector<32x32xf32>
    %580 = arith.mulf %579, %569 : vector<32x32xf32>
    %581 = arith.addf %563, %580 : vector<32x32xf32>
    %c139 = arith.constant 139 : index
    %582 = memref.load %arg1[%c139] : memref<144xf32, #tpu.memory_space<smem>>
    %583 = vector.broadcast %582 : f32 to vector<32x32xf32>
    %584 = arith.mulf %583, %569 : vector<32x32xf32>
    %585 = arith.addf %567, %584 : vector<32x32xf32>
    %586 = vector.extract_strided_slice %5 {offsets = [3, 1, 2], sizes = [1, 32, 32], strides = [1, 1, 1]} : vector<4x34x34xf32> to vector<1x32x32xf32>
    %587 = vector.shape_cast %586 : vector<1x32x32xf32> to vector<32x32xf32>
    %c32 = arith.constant 32 : index
    %588 = memref.load %arg1[%c32] : memref<144xf32, #tpu.memory_space<smem>>
    %589 = vector.broadcast %588 : f32 to vector<32x32xf32>
    %590 = arith.mulf %589, %587 : vector<32x32xf32>
    %591 = arith.addf %573, %590 : vector<32x32xf32>
    %c68 = arith.constant 68 : index
    %592 = memref.load %arg1[%c68] : memref<144xf32, #tpu.memory_space<smem>>
    %593 = vector.broadcast %592 : f32 to vector<32x32xf32>
    %594 = arith.mulf %593, %587 : vector<32x32xf32>
    %595 = arith.addf %577, %594 : vector<32x32xf32>
    %c104 = arith.constant 104 : index
    %596 = memref.load %arg1[%c104] : memref<144xf32, #tpu.memory_space<smem>>
    %597 = vector.broadcast %596 : f32 to vector<32x32xf32>
    %598 = arith.mulf %597, %587 : vector<32x32xf32>
    %599 = arith.addf %581, %598 : vector<32x32xf32>
    %c140 = arith.constant 140 : index
    %600 = memref.load %arg1[%c140] : memref<144xf32, #tpu.memory_space<smem>>
    %601 = vector.broadcast %600 : f32 to vector<32x32xf32>
    %602 = arith.mulf %601, %587 : vector<32x32xf32>
    %603 = arith.addf %585, %602 : vector<32x32xf32>
    %604 = vector.extract_strided_slice %5 {offsets = [3, 2, 0], sizes = [1, 32, 32], strides = [1, 1, 1]} : vector<4x34x34xf32> to vector<1x32x32xf32>
    %605 = vector.shape_cast %604 : vector<1x32x32xf32> to vector<32x32xf32>
    %c33 = arith.constant 33 : index
    %606 = memref.load %arg1[%c33] : memref<144xf32, #tpu.memory_space<smem>>
    %607 = vector.broadcast %606 : f32 to vector<32x32xf32>
    %608 = arith.mulf %607, %605 : vector<32x32xf32>
    %609 = arith.addf %591, %608 : vector<32x32xf32>
    %c69 = arith.constant 69 : index
    %610 = memref.load %arg1[%c69] : memref<144xf32, #tpu.memory_space<smem>>
    %611 = vector.broadcast %610 : f32 to vector<32x32xf32>
    %612 = arith.mulf %611, %605 : vector<32x32xf32>
    %613 = arith.addf %595, %612 : vector<32x32xf32>
    %c105 = arith.constant 105 : index
    %614 = memref.load %arg1[%c105] : memref<144xf32, #tpu.memory_space<smem>>
    %615 = vector.broadcast %614 : f32 to vector<32x32xf32>
    %616 = arith.mulf %615, %605 : vector<32x32xf32>
    %617 = arith.addf %599, %616 : vector<32x32xf32>
    %c141 = arith.constant 141 : index
    %618 = memref.load %arg1[%c141] : memref<144xf32, #tpu.memory_space<smem>>
    %619 = vector.broadcast %618 : f32 to vector<32x32xf32>
    %620 = arith.mulf %619, %605 : vector<32x32xf32>
    %621 = arith.addf %603, %620 : vector<32x32xf32>
    %622 = vector.extract_strided_slice %5 {offsets = [3, 2, 1], sizes = [1, 32, 32], strides = [1, 1, 1]} : vector<4x34x34xf32> to vector<1x32x32xf32>
    %623 = vector.shape_cast %622 : vector<1x32x32xf32> to vector<32x32xf32>
    %c34 = arith.constant 34 : index
    %624 = memref.load %arg1[%c34] : memref<144xf32, #tpu.memory_space<smem>>
    %625 = vector.broadcast %624 : f32 to vector<32x32xf32>
    %626 = arith.mulf %625, %623 : vector<32x32xf32>
    %627 = arith.addf %609, %626 : vector<32x32xf32>
    %c70 = arith.constant 70 : index
    %628 = memref.load %arg1[%c70] : memref<144xf32, #tpu.memory_space<smem>>
    %629 = vector.broadcast %628 : f32 to vector<32x32xf32>
    %630 = arith.mulf %629, %623 : vector<32x32xf32>
    %631 = arith.addf %613, %630 : vector<32x32xf32>
    %c106 = arith.constant 106 : index
    %632 = memref.load %arg1[%c106] : memref<144xf32, #tpu.memory_space<smem>>
    %633 = vector.broadcast %632 : f32 to vector<32x32xf32>
    %634 = arith.mulf %633, %623 : vector<32x32xf32>
    %635 = arith.addf %617, %634 : vector<32x32xf32>
    %c142 = arith.constant 142 : index
    %636 = memref.load %arg1[%c142] : memref<144xf32, #tpu.memory_space<smem>>
    %637 = vector.broadcast %636 : f32 to vector<32x32xf32>
    %638 = arith.mulf %637, %623 : vector<32x32xf32>
    %639 = arith.addf %621, %638 : vector<32x32xf32>
    %640 = vector.extract_strided_slice %5 {offsets = [3, 2, 2], sizes = [1, 32, 32], strides = [1, 1, 1]} : vector<4x34x34xf32> to vector<1x32x32xf32>
    %641 = vector.shape_cast %640 : vector<1x32x32xf32> to vector<32x32xf32>
    %c35 = arith.constant 35 : index
    %642 = memref.load %arg1[%c35] : memref<144xf32, #tpu.memory_space<smem>>
    %643 = vector.broadcast %642 : f32 to vector<32x32xf32>
    %644 = arith.mulf %643, %641 : vector<32x32xf32>
    %645 = arith.addf %627, %644 : vector<32x32xf32>
    %c71 = arith.constant 71 : index
    %646 = memref.load %arg1[%c71] : memref<144xf32, #tpu.memory_space<smem>>
    %647 = vector.broadcast %646 : f32 to vector<32x32xf32>
    %648 = arith.mulf %647, %641 : vector<32x32xf32>
    %649 = arith.addf %631, %648 : vector<32x32xf32>
    %c107 = arith.constant 107 : index
    %650 = memref.load %arg1[%c107] : memref<144xf32, #tpu.memory_space<smem>>
    %651 = vector.broadcast %650 : f32 to vector<32x32xf32>
    %652 = arith.mulf %651, %641 : vector<32x32xf32>
    %653 = arith.addf %635, %652 : vector<32x32xf32>
    %c143 = arith.constant 143 : index
    %654 = memref.load %arg1[%c143] : memref<144xf32, #tpu.memory_space<smem>>
    %655 = vector.broadcast %654 : f32 to vector<32x32xf32>
    %656 = arith.mulf %655, %641 : vector<32x32xf32>
    %657 = arith.addf %639, %656 : vector<32x32xf32>
    %cst_9 = arith.constant 0.000000e+00 : f32
    %658 = vector.broadcast %cst_9 : f32 to vector<32x32xf32>
    %659 = arith.cmpf oge, %645, %658 : vector<32x32xf32>
    %cst_10 = arith.constant 2.000000e-01 : f32
    %660 = vector.broadcast %cst_10 : f32 to vector<32x32xf32>
    %661 = arith.mulf %660, %645 : vector<32x32xf32>
    %662 = arith.select %659, %645, %661 : vector<32x32xi1>, vector<32x32xf32>
    %c0_11 = arith.constant 0 : index
    %c0_12 = arith.constant 0 : index
    %c0_13 = arith.constant 0 : index
    %c0_14 = arith.constant 0 : index
    %663 = vector.load %arg3[%c0_11, %c0_12, %c0_13, %c0_14] : memref<1x4x32x32xf32, #tpu.memory_space<vmem>>, vector<1x1x32x32xf32>
    %664 = vector.shape_cast %663 : vector<1x1x32x32xf32> to vector<32x32xf32>
    %665 = vector.shape_cast %662 : vector<32x32xf32> to vector<1x1x32x32xf32>
    tpu.vector_store %arg3[%c0_11, %c0_12, %c0_13, %c0_14], %665 {strides = array<i32>} : memref<1x4x32x32xf32, #tpu.memory_space<vmem>>, vector<1x1x32x32xf32>,
    %cst_15 = arith.constant 0.000000e+00 : f32
    %666 = vector.broadcast %cst_15 : f32 to vector<32x32xf32>
    %667 = arith.cmpf oge, %649, %666 : vector<32x32xf32>
    %cst_16 = arith.constant 2.000000e-01 : f32
    %668 = vector.broadcast %cst_16 : f32 to vector<32x32xf32>
    %669 = arith.mulf %668, %649 : vector<32x32xf32>
    %670 = arith.select %667, %649, %669 : vector<32x32xi1>, vector<32x32xf32>
    %c0_17 = arith.constant 0 : index
    %c1_18 = arith.constant 1 : index
    %c0_19 = arith.constant 0 : index
    %c0_20 = arith.constant 0 : index
    %671 = vector.load %arg3[%c0_17, %c1_18, %c0_19, %c0_20] : memref<1x4x32x32xf32, #tpu.memory_space<vmem>>, vector<1x1x32x32xf32>
    %672 = vector.shape_cast %671 : vector<1x1x32x32xf32> to vector<32x32xf32>
    %673 = vector.shape_cast %670 : vector<32x32xf32> to vector<1x1x32x32xf32>
    tpu.vector_store %arg3[%c0_17, %c1_18, %c0_19, %c0_20], %673 {strides = array<i32>} : memref<1x4x32x32xf32, #tpu.memory_space<vmem>>, vector<1x1x32x32xf32>,
    %cst_21 = arith.constant 0.000000e+00 : f32
    %674 = vector.broadcast %cst_21 : f32 to vector<32x32xf32>
    %675 = arith.cmpf oge, %653, %674 : vector<32x32xf32>
    %cst_22 = arith.constant 2.000000e-01 : f32
    %676 = vector.broadcast %cst_22 : f32 to vector<32x32xf32>
    %677 = arith.mulf %676, %653 : vector<32x32xf32>
    %678 = arith.select %675, %653, %677 : vector<32x32xi1>, vector<32x32xf32>
    %c0_23 = arith.constant 0 : index
    %c2_24 = arith.constant 2 : index
    %c0_25 = arith.constant 0 : index
    %c0_26 = arith.constant 0 : index
    %679 = vector.load %arg3[%c0_23, %c2_24, %c0_25, %c0_26] : memref<1x4x32x32xf32, #tpu.memory_space<vmem>>, vector<1x1x32x32xf32>
    %680 = vector.shape_cast %679 : vector<1x1x32x32xf32> to vector<32x32xf32>
    %681 = vector.shape_cast %678 : vector<32x32xf32> to vector<1x1x32x32xf32>
    tpu.vector_store %arg3[%c0_23, %c2_24, %c0_25, %c0_26], %681 {strides = array<i32>} : memref<1x4x32x32xf32, #tpu.memory_space<vmem>>, vector<1x1x32x32xf32>,
    %cst_27 = arith.constant 0.000000e+00 : f32
    %682 = vector.broadcast %cst_27 : f32 to vector<32x32xf32>
    %683 = arith.cmpf oge, %657, %682 : vector<32x32xf32>
    %cst_28 = arith.constant 2.000000e-01 : f32
    %684 = vector.broadcast %cst_28 : f32 to vector<32x32xf32>
    %685 = arith.mulf %684, %657 : vector<32x32xf32>
    %686 = arith.select %683, %657, %685 : vector<32x32xi1>, vector<32x32xf32>
    %c0_29 = arith.constant 0 : index
    %c3_30 = arith.constant 3 : index
    %c0_31 = arith.constant 0 : index
    %c0_32 = arith.constant 0 : index
    %687 = vector.load %arg3[%c0_29, %c3_30, %c0_31, %c0_32] : memref<1x4x32x32xf32, #tpu.memory_space<vmem>>, vector<1x1x32x32xf32>
    %688 = vector.shape_cast %687 : vector<1x1x32x32xf32> to vector<32x32xf32>
    %689 = vector.shape_cast %686 : vector<32x32xf32> to vector<1x1x32x32xf32>
    tpu.vector_store %arg3[%c0_29, %c3_30, %c0_31, %c0_32], %689 {strides = array<i32>} : memref<1x4x32x32xf32, #tpu.memory_space<vmem>>, vector<1x1x32x32xf32>,
    return
  }
  func.func @transform_0(%arg0: i32) -> i32 {
    %c0_i32 = arith.constant 0 : i32
    %c0_i32_0 = arith.constant 0 : i32
    return %c0_i32 : i32
  }
  func.func @transform_1(%arg0: i32) -> (i32, i32, i32, i32) {
    %c0_i32 = arith.constant 0 : i32
    %c0_i32_0 = arith.constant 0 : i32
    %c0_i32_1 = arith.constant 0 : i32
    %c0_i32_2 = arith.constant 0 : i32
    return %arg0, %c0_i32, %c0_i32_0, %c0_i32_1 : i32, i32, i32, i32
  }
  func.func @transform_2(%arg0: i32) -> (i32, i32, i32, i32) {
    %c0_i32 = arith.constant 0 : i32
    %c0_i32_0 = arith.constant 0 : i32
    %c0_i32_1 = arith.constant 0 : i32
    %c0_i32_2 = arith.constant 0 : i32
    return %arg0, %c0_i32, %c0_i32_0, %c0_i32_1 : i32, i32, i32, i32
  }
}

</mosaic_0001>

<llo_original>
// kernel: custom-call
$region0: #{custom-call}
  %s0 = inlined_call_operand.vmem [shape: f32[36], index: 0, kind: output, shape index: {}]

// kernel: unet_cat_forward.1
$region0: #{unet_cat_forward.1}
  #allocation0 [shape = 'u32[]', space=smem, size = 0x4, offset = 0x4, fixed_abs, tag = 'smem constant byte address 0x4 - core index']
  #allocation1 [shape = 'u32[144,128]{1,0:T(1,128)}', space=vmem, size = 0x12000, scoped, tag = 'internal scratch']
  %s0 = inlined_call_operand.vmem [shape: f32[144], index: 0, kind: input, shape index: {}]
  %s1 = inlined_call_operand.vmem [shape: f32[2,4,32,32], index: 1, kind: input, shape index: {}]
  %s2 = inlined_call_operand.vmem [shape: f32[2,4,32,32], index: 2, kind: output, shape index: {}]
  %s3 = sld [smem:[#allocation0]]
  $region45: #{unet_cat_forward.1} parent=0
    _
  %s5 = ssub.s32 1, %s3
  %s6 = scalar_select 0, %s5, %s3
  $region1: #{unet_cat_forward.1} parent=0
    #allocation2 [shape = 'u8[1024]{0}', space=smem, size = 0x400, scoped, tag = 'input window, operand 0, single buffered']
    #allocation3 [shape = 's32[2]{0}', space=sflag, size = 0x8, scoped, tag = 'scoped memory for unet_cat_forward.1']
    %7 = vsyncpa [#allocation3], 0
    loop: start=0, step=1, limit=4
    $region2: #{unet_cat_forward.1} parent=1 // loop_pre_header
      _
    $region3: #{unet_cat_forward.1} parent=1 // loop_header
      %s9 = sphi 0, %s13
      %p10 = scmp.ge.s32.totalorder %s9, 4
      %s17 = sphi 0, %s17
      %s19 = sphi 0, %s17
      %s20 = sphi 0, %s19
      %s34 = sphi 0, %s20
      %s40 = sphi 0, %s42
      %s43 = sphi 0, %s40
      %s44 = sphi 0, %s43
      %s60 = sphi 0, %s44
      %s66 = sphi 0, %s68
      %s69 = sphi 0, %s66
      %s70 = sphi 0, %s69
      %s86 = sphi 0, %s70
    $region4: #{unet_cat_forward.1} parent=1 // loop_header_branch
      %12 = sbr.rel (%p10) target = $region8
    $region5: #{unet_cat_forward.1} parent=1 // loop_body
      %s14 = ssub.s32 %s9, 1
      %s15 = ssub.s32 %s9, 2
      %s16 = sadd.s32 %s9, 1
      %s18 = sadd.s32 %s17, 1
      %p21 = scmp.eq.s32.totalorder %s9, 1
      %p22 = scmp.ne.s32.totalorder %s17, %s19
      %p23 = scmp.eq.s32.totalorder %s9, 0
      %p24 = por %p22, %p23
      %p25 = scmp.ne.s32.totalorder %s17, %s19
      %p26 = scmp.eq.s32.totalorder %s14, 1
      %p27 = por %p25, %p26
      %p28 = scmp.ne.s32.totalorder %s19, %s20
      %p29 = scmp.eq.s32.totalorder %s14, 0
      %p30 = por %p28, %p29
      %p31 = scmp.ne.s32.totalorder %s19, %s20
      %p32 = scmp.eq.s32.totalorder %s15, 1
      %p33 = por %p31, %p32
      %p35 = scmp.ne.s32.totalorder %s20, %s34
      %p36 = scmp.eq.s32.totalorder %s15, 0
      %p37 = por %p35, %p36
      %s38 = ssub.s32 %s9, %s16
      %p39 = scmp.eq.s32.totalorder %s38, 0
      %s41 = sadd.s32 %s40, 1
      %s42 = scalar_select %p39, %s40, %s41
      %p45 = pneg %p39
      %p46 = scmp.eq.s32.totalorder %s9, 1
      %p47 = por %p45, %p46
      %p48 = scmp.ne.s32.totalorder %s40, %s43
      %p49 = scmp.eq.s32.totalorder %s9, 0
      %p50 = por %p48, %p49
      %p51 = scmp.ne.s32.totalorder %s40, %s43
      %p52 = scmp.eq.s32.totalorder %s14, 1
      %p53 = por %p51, %p52
      %p54 = scmp.ne.s32.totalorder %s43, %s44
      %p55 = scmp.eq.s32.totalorder %s14, 0
      %p56 = por %p54, %p55
      %p57 = scmp.ne.s32.totalorder %s43, %s44
      %p58 = scmp.eq.s32.totalorder %s15, 1
      %p59 = por %p57, %p58
      %p61 = scmp.ne.s32.totalorder %s44, %s60
      %p62 = scmp.eq.s32.totalorder %s15, 0
      %p63 = por %p61, %p62
      %s64 = ssub.s32 %s9, %s16
      %p65 = scmp.eq.s32.totalorder %s64, 0
      %s67 = sadd.s32 %s66, 1
      %s68 = scalar_select %p65, %s66, %s67
      %p71 = pneg %p65
      %p72 = scmp.eq.s32.totalorder %s9, 1
      %p73 = por %p71, %p72
      %p74 = scmp.ne.s32.totalorder %s66, %s69
      %p75 = scmp.eq.s32.totalorder %s9, 0
      %p76 = por %p74, %p75
      %p77 = scmp.ne.s32.totalorder %s66, %s69
      %p78 = scmp.eq.s32.totalorder %s14, 1
      %p79 = por %p77, %p78
      %p80 = scmp.ne.s32.totalorder %s69, %s70
      %p81 = scmp.eq.s32.totalorder %s14, 0
      %p82 = por %p80, %p81
      %p83 = scmp.ne.s32.totalorder %s69, %s70
      %p84 = scmp.eq.s32.totalorder %s15, 1
      %p85 = por %p83, %p84
      %p87 = scmp.ne.s32.totalorder %s70, %s86
      %p88 = scmp.eq.s32.totalorder %s15, 0
      %p89 = por %p87, %p88
      %p90 = scmp.le.s32.totalorder 1, %s9
      %p91 = scmp.lt.s32.totalorder %s9, 3
      %p92 = pnand %p90, %p91
      %p93 = pneg %p92
      // Predicated region
      $region9: #{unet_cat_forward.1} parent=5 // pred_check
        _
      $region10: #{unet_cat_forward.1} parent=5 // pred_check_branch
        %95 = sbr.rel (%p92) target = $region12
      $region11: #{unet_cat_forward.1} parent=5 // pred_region
        %s96 = ssub.s32 %s9, 1
        // Predicated region
        $region13: #{unet_cat_forward.1} parent=11 // pred_check
          %p97 = pneg %p30
        $region14: #{unet_cat_forward.1} parent=11 // pred_check_branch
          %99 = sbr.rel (%p97) target = $region16
        $region15: #{unet_cat_forward.1} parent=11 // pred_region
          %s101 = ssub.s32 32, 32
          %102 = vsyncadd [#allocation3], %s101
          %s104 = sshll.u32 %s0, 4
          %s105 = int_to_ptr.vmem [resolvable:$true] %s104
          %107 = dma.vmem_to_smem %s105, 32, [#allocation2], [#allocation3]
        $region16: #{unet_cat_forward.1} parent=11 // pred_fallthru
          _
      $region12: #{unet_cat_forward.1} parent=5 // pred_fallthru
        _
      %p108 = scmp.lt.s32.totalorder %s9, 2
      // Predicated region
      $region17: #{unet_cat_forward.1} parent=5 // pred_check
        %p109 = pneg %p108
      $region18: #{unet_cat_forward.1} parent=5 // pred_check_branch
        %111 = sbr.rel (%p109) target = $region20
      $region19: #{unet_cat_forward.1} parent=5 // pred_region
        // Predicated region
        $region21: #{unet_cat_forward.1} parent=19 // pred_check
          %p112 = pneg %p50
        $region22: #{unet_cat_forward.1} parent=19 // pred_check_branch
          %114 = sbr.rel (%p112) target = $region24
        $region23: #{unet_cat_forward.1} parent=19 // pred_region
          %p115 = scmp.lt.s32.totalorder %s9, 1
          %s116 = scalar_select %p115, %s9, 1
          %s117 = smul.addr %s116, 16
          %s118 = smul.addr %s117, 8
          %s119 = scalar_lea.vmem %s1, %s118
        $region24: #{unet_cat_forward.1} parent=19 // pred_fallthru
          _
      $region20: #{unet_cat_forward.1} parent=5 // pred_fallthru
        _
      %p120 = scmp.le.s32.totalorder 1, %s9
      %p121 = scmp.lt.s32.totalorder %s9, 3
      %p122 = pnand %p120, %p121
      %p123 = pneg %p122
      // Predicated region
      $region25: #{unet_cat_forward.1} parent=5 // pred_check
        _
      $region26: #{unet_cat_forward.1} parent=5 // pred_check_branch
        %125 = sbr.rel (%p122) target = $region28
      $region27: #{unet_cat_forward.1} parent=5 // pred_region
        %s126 = ssub.s32 %s9, 1
        // Predicated region
        $region29: #{unet_cat_forward.1} parent=27 // pred_check
          %p127 = pneg %p30
        $region30: #{unet_cat_forward.1} parent=27 // pred_check_branch
          %129 = sbr.rel (%p127) target = $region32
        $region31: #{unet_cat_forward.1} parent=27 // pred_region
          %130 = dma.done [#allocation3], 32
        $region32: #{unet_cat_forward.1} parent=27 // pred_fallthru
          _
        %131 = sfence
        %p132 = pneg %p30
        %p133 = pneg %p27
        %p134 = scmp.lt.s32.totalorder %s14, 1
        %s135 = scalar_select %p134, %s14, 1
        %s136 = smul.addr %s135, 16
        %s137 = smul.addr %s136, 8
        %s138 = scalar_lea.vmem %s1, %s137
        %p139 = pneg %p56
        %p140 = pneg %p53
        %p141 = pneg %p82
        %p142 = pneg %p79
        %p143 = scmp.lt.s32.totalorder %s14, 1
        %s144 = scalar_select %p143, %s14, 1
        %s145 = smul.addr %s144, 16
        %s146 = smul.addr %s145, 8
        %s147 = scalar_lea.vmem %s2, %s146
        %p148 = scmp.lt.s32.totalorder %s14, 1
        %s149 = scalar_select %p148, %s14, 1
        %s150 = smul.addr %s149, 16
        %s151 = smul.addr %s150, 8
        %s152 = scalar_lea.vmem %s1, %s151
        %p153 = scmp.lt.s32.totalorder %s14, 1
        %s154 = scalar_select %p153, %s14, 1
        %s155 = smul.addr %s154, 16
        %s156 = smul.addr %s155, 8
        %s157 = scalar_lea.vmem %s2, %s156
        %v158 = vld [vmem:[%s152] sm:$0xff]
        %v159 = vld [vmem:[%s152 + $0x8] sm:$0xff]
        %v160 = vld [vmem:[%s152 + $0x10] sm:$0xff]
        %v161 = vld [vmem:[%s152 + $0x18] sm:$0xff]
        %v162 = vld [vmem:[%s152 + $0x20] sm:$0xff]
        %v163 = vld [vmem:[%s152 + $0x28] sm:$0xff]
        %v164 = vld [vmem:[%s152 + $0x30] sm:$0xff]
        %v165 = vld [vmem:[%s152 + $0x38] sm:$0xff]
        %v166 = vld [vmem:[%s152 + $0x40] sm:$0xff]
        %v167 = vld [vmem:[%s152 + $0x48] sm:$0xff]
        %v168 = vld [vmem:[%s152 + $0x50] sm:$0xff]
        %v169 = vld [vmem:[%s152 + $0x58] sm:$0xff]
        %v170 = vld [vmem:[%s152 + $0x60] sm:$0xff]
        %v171 = vld [vmem:[%s152 + $0x68] sm:$0xff]
        %v172 = vld [vmem:[%s152 + $0x70] sm:$0xff]
        %v173 = vld [vmem:[%s152 + $0x78] sm:$0xff]
        %vm190 = vcmask 1040384
        %v191 = vrot.slane %v158, 7
        %v192 = vrot.slane %v159, 7
        %v193 = vsel %vm190, %v191, %v192
        %v194 = vrot.slane %v160, 7
        %v195 = vsel %vm190, %v192, %v194
        %v196 = vrot.slane %v161, 7
        %v197 = vsel %vm190, %v194, %v196
        %v198 = vrot.slane %v162, 7
        %v199 = vrot.slane %v163, 7
        %v200 = vsel %vm190, %v198, %v199
        %v201 = vrot.slane %v164, 7
        %v202 = vsel %vm190, %v199, %v201
        %v203 = vrot.slane %v165, 7
        %v204 = vsel %vm190, %v201, %v203
        %v205 = vrot.slane %v166, 7
        %v206 = vrot.slane %v167, 7
        %v207 = vsel %vm190, %v205, %v206
        %v208 = vrot.slane %v168, 7
        %v209 = vsel %vm190, %v206, %v208
        %v210 = vrot.slane %v169, 7
        %v211 = vsel %vm190, %v208, %v210
        %v212 = vrot.slane %v170, 7
        %v213 = vrot.slane %v171, 7
        %v214 = vsel %vm190, %v212, %v213
        %v215 = vrot.slane %v172, 7
        %v216 = vsel %vm190, %v213, %v215
        %v217 = vrot.slane %v173, 7
        %v218 = vsel %vm190, %v215, %v217
        %v227 = vsel %vm190, 0.0, %v191
        %v228 = vsel %vm190, 0.0, %v198
        %v229 = vsel %vm190, 0.0, %v205
        %v230 = vsel %vm190, 0.0, %v212
        %v231 = vsel %vm190, %v196, 0.0
        %v232 = vsel %vm190, %v203, 0.0
        %v233 = vsel %vm190, %v210, 0.0
        %v234 = vsel %vm190, %v217, 0.0
        %243 = vrot.lane.b32.xlu0 %v227, 1
        %v244 = vpop.permute.xlu0 %243
        %245 = vrot.lane.b32.xlu0 %v193, 1
        %v246 = vpop.permute.xlu0 %245
        %247 = vrot.lane.b32.xlu0 %v195, 1
        %v248 = vpop.permute.xlu0 %247
        %249 = vrot.lane.b32.xlu0 %v197, 1
        %v250 = vpop.permute.xlu0 %249
        %251 = vrot.lane.b32.xlu0 %v231, 1
        %v252 = vpop.permute.xlu0 %251
        %253 = vrot.lane.b32.xlu0 %v228, 1
        %v254 = vpop.permute.xlu0 %253
        %255 = vrot.lane.b32.xlu0 %v200, 1
        %v256 = vpop.permute.xlu0 %255
        %257 = vrot.lane.b32.xlu0 %v202, 1
        %v258 = vpop.permute.xlu0 %257
        %259 = vrot.lane.b32.xlu0 %v204, 1
        %v260 = vpop.permute.xlu0 %259
        %261 = vrot.lane.b32.xlu0 %v232, 1
        %v262 = vpop.permute.xlu0 %261
        %263 = vrot.lane.b32.xlu0 %v229, 1
        %v264 = vpop.permute.xlu0 %263
        %265 = vrot.lane.b32.xlu0 %v207, 1
        %v266 = vpop.permute.xlu0 %265
        %267 = vrot.lane.b32.xlu0 %v209, 1
        %v268 = vpop.permute.xlu0 %267
        %269 = vrot.lane.b32.xlu0 %v211, 1
        %v270 = vpop.permute.xlu0 %269
        %271 = vrot.lane.b32.xlu0 %v233, 1
        %v272 = vpop.permute.xlu0 %271
        %273 = vrot.lane.b32.xlu0 %v230, 1
        %v274 = vpop.permute.xlu0 %273
        %275 = vrot.lane.b32.xlu0 %v214, 1
        %v276 = vpop.permute.xlu0 %275
        %277 = vrot.lane.b32.xlu0 %v216, 1
        %v278 = vpop.permute.xlu0 %277
        %279 = vrot.lane.b32.xlu0 %v218, 1
        %v280 = vpop.permute.xlu0 %279
        %281 = vrot.lane.b32.xlu0 %v234, 1
        %v282 = vpop.permute.xlu0 %281
        %vm303 = vcmask 7168
        %v304 = vsel %vm303, 0.0, %v244
        %v305 = vsel %vm303, 0.0, %v246
        %v306 = vsel %vm303, 0.0, %v248
        %v307 = vsel %vm303, 0.0, %v250
        %v308 = vsel %vm303, 0.0, %v252
        %v309 = vsel %vm303, 0.0, %v254
        %v310 = vsel %vm303, 0.0, %v256
        %v311 = vsel %vm303, 0.0, %v258
        %v312 = vsel %vm303, 0.0, %v260
        %v313 = vsel %vm303, 0.0, %v262
        %v314 = vsel %vm303, 0.0, %v264
        %v315 = vsel %vm303, 0.0, %v266
        %v316 = vsel %vm303, 0.0, %v268
        %v317 = vsel %vm303, 0.0, %v270
        %v318 = vsel %vm303, 0.0, %v272
        %v319 = vsel %vm303, 0.0, %v274
        %v320 = vsel %vm303, 0.0, %v276
        %v321 = vsel %vm303, 0.0, %v278
        %v322 = vsel %vm303, 0.0, %v280
        %v323 = vsel %vm303, 0.0, %v282
        %vm324 = vcmask 269312
        %v325 = vsel %vm324, %v304, 0.0
        %v326 = vsel %vm324, %v305, 0.0
        %v327 = vsel %vm324, %v306, 0.0
        %v328 = vsel %vm324, %v307, 0.0
        %v329 = vsel %vm324, %v308, 0.0
        %v330 = vsel %vm324, %v309, 0.0
        %v331 = vsel %vm324, %v310, 0.0
        %v332 = vsel %vm324, %v311, 0.0
        %v333 = vsel %vm324, %v312, 0.0
        %v334 = vsel %vm324, %v313, 0.0
        %v335 = vsel %vm324, %v314, 0.0
        %v336 = vsel %vm324, %v315, 0.0
        %v337 = vsel %vm324, %v316, 0.0
        %v338 = vsel %vm324, %v317, 0.0
        %v339 = vsel %vm324, %v318, 0.0
        %v340 = vsel %vm324, %v319, 0.0
        %v341 = vsel %vm324, %v320, 0.0
        %v342 = vsel %vm324, %v321, 0.0
        %v343 = vsel %vm324, %v322, 0.0
        %v344 = vsel %vm324, %v323, 0.0
        %s345 = sld [smem:[#allocation2]]
        %v346 = vstv %s345
        %v347 = vmul.f32 %v346, %v325
        %v348 = vmul.f32 %v346, %v326
        %v349 = vmul.f32 %v346, %v327
        %v350 = vmul.f32 %v346, %v328
        %v351 = vadd.f32 %v347, 0.0
        %v352 = vadd.f32 %v348, 0.0
        %v353 = vadd.f32 %v349, 0.0
        %v354 = vadd.f32 %v350, 0.0
        %s355 = sld [smem:[#allocation2 + $0x24]]
        %v356 = vstv %s355
        %v357 = vmul.f32 %v356, %v325
        %v358 = vmul.f32 %v356, %v326
        %v359 = vmul.f32 %v356, %v327
        %v360 = vmul.f32 %v356, %v328
        %v361 = vadd.f32 %v357, 0.0
        %v362 = vadd.f32 %v358, 0.0
        %v363 = vadd.f32 %v359, 0.0
        %v364 = vadd.f32 %v360, 0.0
        %s365 = sld [smem:[#allocation2 + $0x48]]
        %v366 = vstv %s365
        %v367 = vmul.f32 %v366, %v325
        %v368 = vmul.f32 %v366, %v326
        %v369 = vmul.f32 %v366, %v327
        %v370 = vmul.f32 %v366, %v328
        %v371 = vadd.f32 %v367, 0.0
        %v372 = vadd.f32 %v368, 0.0
        %v373 = vadd.f32 %v369, 0.0
        %v374 = vadd.f32 %v370, 0.0
        %s375 = sld [smem:[#allocation2 + $0x6c]]
        %v376 = vstv %s375
        %v377 = vmul.f32 %v376, %v325
        %v378 = vmul.f32 %v376, %v326
        %v379 = vmul.f32 %v376, %v327
        %v380 = vmul.f32 %v376, %v328
        %v381 = vadd.f32 %v377, 0.0
        %v382 = vadd.f32 %v378, 0.0
        %v383 = vadd.f32 %v379, 0.0
        %v384 = vadd.f32 %v380, 0.0
        %s385 = sld [smem:[#allocation2 + $0x1]]
        %v386 = vstv %s385
        %v387 = vmul.f32 %v386, %v325
        %v388 = vmul.f32 %v386, %v326
        %v389 = vmul.f32 %v386, %v327
        %v390 = vmul.f32 %v386, %v328
        %395 = vrot.lane.b32.xlu0 %v387, 127
        %v396 = vpop.permute.xlu0 %395
        %397 = vrot.lane.b32.xlu0 %v388, 127
        %v398 = vpop.permute.xlu0 %397
        %399 = vrot.lane.b32.xlu0 %v389, 127
        %v400 = vpop.permute.xlu0 %399
        %401 = vrot.lane.b32.xlu0 %v390, 127
        %v402 = vpop.permute.xlu0 %401
        %v407 = vadd.f32 %v351, %v396
        %v408 = vadd.f32 %v352, %v398
        %v409 = vadd.f32 %v353, %v400
        %v410 = vadd.f32 %v354, %v402
        %s411 = sld [smem:[#allocation2 + $0x25]]
        %v412 = vstv %s411
        %v413 = vmul.f32 %v412, %v325
        %v414 = vmul.f32 %v412, %v326
        %v415 = vmul.f32 %v412, %v327
        %v416 = vmul.f32 %v412, %v328
        %421 = vrot.lane.b32.xlu0 %v413, 127
        %v422 = vpop.permute.xlu0 %421
        %423 = vrot.lane.b32.xlu0 %v414, 127
        %v424 = vpop.permute.xlu0 %423
        %425 = vrot.lane.b32.xlu0 %v415, 127
        %v426 = vpop.permute.xlu0 %425
        %427 = vrot.lane.b32.xlu0 %v416, 127
        %v428 = vpop.permute.xlu0 %427
        %v433 = vadd.f32 %v361, %v422
        %v434 = vadd.f32 %v362, %v424
        %v435 = vadd.f32 %v363, %v426
        %v436 = vadd.f32 %v364, %v428
        %s437 = sld [smem:[#allocation2 + $0x49]]
        %v438 = vstv %s437
        %v439 = vmul.f32 %v438, %v325
        %v440 = vmul.f32 %v438, %v326
        %v441 = vmul.f32 %v438, %v327
        %v442 = vmul.f32 %v438, %v328
        %447 = vrot.lane.b32.xlu0 %v439, 127
        %v448 = vpop.permute.xlu0 %447
        %449 = vrot.lane.b32.xlu0 %v440, 127
        %v450 = vpop.permute.xlu0 %449
        %451 = vrot.lane.b32.xlu0 %v441, 127
        %v452 = vpop.permute.xlu0 %451
        %453 = vrot.lane.b32.xlu0 %v442, 127
        %v454 = vpop.permute.xlu0 %453
        %v459 = vadd.f32 %v371, %v448
        %v460 = vadd.f32 %v372, %v450
        %v461 = vadd.f32 %v373, %v452
        %v462 = vadd.f32 %v374, %v454
        %s463 = sld [smem:[#allocation2 + $0x6d]]
        %v464 = vstv %s463
        %v465 = vmul.f32 %v464, %v325
        %v466 = vmul.f32 %v464, %v326
        %v467 = vmul.f32 %v464, %v327
        %v468 = vmul.f32 %v464, %v328
        %473 = vrot.lane.b32.xlu0 %v465, 127
        %v474 = vpop.permute.xlu0 %473
        %475 = vrot.lane.b32.xlu0 %v466, 127
        %v476 = vpop.permute.xlu0 %475
        %477 = vrot.lane.b32.xlu0 %v467, 127
        %v478 = vpop.permute.xlu0 %477
        %479 = vrot.lane.b32.xlu0 %v468, 127
        %v480 = vpop.permute.xlu0 %479
        %v485 = vadd.f32 %v381, %v474
        %v486 = vadd.f32 %v382, %v476
        %v487 = vadd.f32 %v383, %v478
        %v488 = vadd.f32 %v384, %v480
        %s489 = sld [smem:[#allocation2 + $0x2]]
        %v490 = vstv %s489
        %v491 = vmul.f32 %v490, %v325
        %v492 = vmul.f32 %v490, %v326
        %v493 = vmul.f32 %v490, %v327
        %v494 = vmul.f32 %v490, %v328
        %499 = vrot.lane.b32.xlu0 %v491, 126
        %v500 = vpop.permute.xlu0 %499
        %501 = vrot.lane.b32.xlu0 %v492, 126
        %v502 = vpop.permute.xlu0 %501
        %503 = vrot.lane.b32.xlu0 %v493, 126
        %v504 = vpop.permute.xlu0 %503
        %505 = vrot.lane.b32.xlu0 %v494, 126
        %v506 = vpop.permute.xlu0 %505
        %v511 = vadd.f32 %v407, %v500
        %v512 = vadd.f32 %v408, %v502
        %v513 = vadd.f32 %v409, %v504
        %v514 = vadd.f32 %v410, %v506
        %s515 = sld [smem:[#allocation2 + $0x26]]
        %v516 = vstv %s515
        %v517 = vmul.f32 %v516, %v325
        %v518 = vmul.f32 %v516, %v326
        %v519 = vmul.f32 %v516, %v327
        %v520 = vmul.f32 %v516, %v328
        %525 = vrot.lane.b32.xlu0 %v517, 126
        %v526 = vpop.permute.xlu0 %525
        %527 = vrot.lane.b32.xlu0 %v518, 126
        %v528 = vpop.permute.xlu0 %527
        %529 = vrot.lane.b32.xlu0 %v519, 126
        %v530 = vpop.permute.xlu0 %529
        %531 = vrot.lane.b32.xlu0 %v520, 126
        %v532 = vpop.permute.xlu0 %531
        %v537 = vadd.f32 %v433, %v526
        %v538 = vadd.f32 %v434, %v528
        %v539 = vadd.f32 %v435, %v530
        %v540 = vadd.f32 %v436, %v532
        %s541 = sld [smem:[#allocation2 + $0x4a]]
        %v542 = vstv %s541
        %v543 = vmul.f32 %v542, %v325
        %v544 = vmul.f32 %v542, %v326
        %v545 = vmul.f32 %v542, %v327
        %v546 = vmul.f32 %v542, %v328
        %551 = vrot.lane.b32.xlu0 %v543, 126
        %v552 = vpop.permute.xlu0 %551
        %553 = vrot.lane.b32.xlu0 %v544, 126
        %v554 = vpop.permute.xlu0 %553
        %555 = vrot.lane.b32.xlu0 %v545, 126
        %v556 = vpop.permute.xlu0 %555
        %557 = vrot.lane.b32.xlu0 %v546, 126
        %v558 = vpop.permute.xlu0 %557
        %v563 = vadd.f32 %v459, %v552
        %v564 = vadd.f32 %v460, %v554
        %v565 = vadd.f32 %v461, %v556
        %v566 = vadd.f32 %v462, %v558
        %s567 = sld [smem:[#allocation2 + $0x6e]]
        %v568 = vstv %s567
        %v569 = vmul.f32 %v568, %v325
        %v570 = vmul.f32 %v568, %v326
        %v571 = vmul.f32 %v568, %v327
        %v572 = vmul.f32 %v568, %v328
        %577 = vrot.lane.b32.xlu0 %v569, 126
        %v578 = vpop.permute.xlu0 %577
        %579 = vrot.lane.b32.xlu0 %v570, 126
        %v580 = vpop.permute.xlu0 %579
        %581 = vrot.lane.b32.xlu0 %v571, 126
        %v582 = vpop.permute.xlu0 %581
        %583 = vrot.lane.b32.xlu0 %v572, 126
        %v584 = vpop.permute.xlu0 %583
        %v589 = vadd.f32 %v485, %v578
        %v590 = vadd.f32 %v486, %v580
        %v591 = vadd.f32 %v487, %v582
        %v592 = vadd.f32 %v488, %v584
        %s593 = sld [smem:[#allocation2 + $0x3]]
        %v594 = vstv %s593
        %v595 = vmul.f32 %v594, %v325
        %v596 = vmul.f32 %v594, %v326
        %v597 = vmul.f32 %v594, %v327
        %v598 = vmul.f32 %v594, %v328
        %v599 = vmul.f32 %v594, %v329
        %vm605 = vcmask 1046528
        %v606 = vrot.slane %v595, 1
        %v607 = vrot.slane %v596, 1
        %v608 = vsel %vm605, %v606, %v607
        %v609 = vrot.slane %v597, 1
        %v610 = vsel %vm605, %v607, %v609
        %v611 = vrot.slane %v598, 1
        %v612 = vsel %vm605, %v609, %v611
        %v613 = vrot.slane %v599, 1
        %v614 = vsel %vm605, %v611, %v613
        %v619 = vadd.f32 %v511, %v608
        %v620 = vadd.f32 %v512, %v610
        %v621 = vadd.f32 %v513, %v612
        %v622 = vadd.f32 %v514, %v614
        %s623 = sld [smem:[#allocation2 + $0x27]]
        %v624 = vstv %s623
        %v625 = vmul.f32 %v624, %v325
        %v626 = vmul.f32 %v624, %v326
        %v627 = vmul.f32 %v624, %v327
        %v628 = vmul.f32 %v624, %v328
        %v629 = vmul.f32 %v624, %v329
        %v635 = vrot.slane %v625, 1
        %v636 = vrot.slane %v626, 1
        %v637 = vsel %vm605, %v635, %v636
        %v638 = vrot.slane %v627, 1
        %v639 = vsel %vm605, %v636, %v638
        %v640 = vrot.slane %v628, 1
        %v641 = vsel %vm605, %v638, %v640
        %v642 = vrot.slane %v629, 1
        %v643 = vsel %vm605, %v640, %v642
        %v648 = vadd.f32 %v537, %v637
        %v649 = vadd.f32 %v538, %v639
        %v650 = vadd.f32 %v539, %v641
        %v651 = vadd.f32 %v540, %v643
        %s652 = sld [smem:[#allocation2 + $0x4b]]
        %v653 = vstv %s652
        %v654 = vmul.f32 %v653, %v325
        %v655 = vmul.f32 %v653, %v326
        %v656 = vmul.f32 %v653, %v327
        %v657 = vmul.f32 %v653, %v328
        %v658 = vmul.f32 %v653, %v329
        %v664 = vrot.slane %v654, 1
        %v665 = vrot.slane %v655, 1
        %v666 = vsel %vm605, %v664, %v665
        %v667 = vrot.slane %v656, 1
        %v668 = vsel %vm605, %v665, %v667
        %v669 = vrot.slane %v657, 1
        %v670 = vsel %vm605, %v667, %v669
        %v671 = vrot.slane %v658, 1
        %v672 = vsel %vm605, %v669, %v671
        %v677 = vadd.f32 %v563, %v666
        %v678 = vadd.f32 %v564, %v668
        %v679 = vadd.f32 %v565, %v670
        %v680 = vadd.f32 %v566, %v672
        %s681 = sld [smem:[#allocation2 + $0x6f]]
        %v682 = vstv %s681
        %v683 = vmul.f32 %v682, %v325
        %v684 = vmul.f32 %v682, %v326
        %v685 = vmul.f32 %v682, %v327
        %v686 = vmul.f32 %v682, %v328
        %v687 = vmul.f32 %v682, %v329
        %v693 = vrot.slane %v683, 1
        %v694 = vrot.slane %v684, 1
        %v695 = vsel %vm605, %v693, %v694
        %v696 = vrot.slane %v685, 1
        %v697 = vsel %vm605, %v694, %v696
        %v698 = vrot.slane %v686, 1
        %v699 = vsel %vm605, %v696, %v698
        %v700 = vrot.slane %v687, 1
        %v701 = vsel %vm605, %v698, %v700
        %v706 = vadd.f32 %v589, %v695
        %v707 = vadd.f32 %v590, %v697
        %v708 = vadd.f32 %v591, %v699
        %v709 = vadd.f32 %v592, %v701
        %s710 = sld [smem:[#allocation2 + $0x4]]
        %v711 = vstv %s710
        %v712 = vmul.f32 %v711, %v325
        %v713 = vmul.f32 %v711, %v326
        %v714 = vmul.f32 %v711, %v327
        %v715 = vmul.f32 %v711, %v328
        %v716 = vmul.f32 %v711, %v329
        %v722 = vrot.slane %v712, 1
        %v723 = vrot.slane %v713, 1
        %v724 = vsel %vm605, %v722, %v723
        %v725 = vrot.slane %v714, 1
        %v726 = vsel %vm605, %v723, %v725
        %v727 = vrot.slane %v715, 1
        %v728 = vsel %vm605, %v725, %v727
        %v729 = vrot.slane %v716, 1
        %v730 = vsel %vm605, %v727, %v729
        %731 = vrot.lane.b32.xlu0 %v724, 127
        %v732 = vpop.permute.xlu0 %731
        %733 = vrot.lane.b32.xlu0 %v726, 127
        %v734 = vpop.permute.xlu0 %733
        %735 = vrot.lane.b32.xlu0 %v728, 127
        %v736 = vpop.permute.xlu0 %735
        %737 = vrot.lane.b32.xlu0 %v730, 127
        %v738 = vpop.permute.xlu0 %737
        %v743 = vadd.f32 %v619, %v732
        %v744 = vadd.f32 %v620, %v734
        %v745 = vadd.f32 %v621, %v736
        %v746 = vadd.f32 %v622, %v738
        %s747 = sld [smem:[#allocation2 + $0x28]]
        %v748 = vstv %s747
        %v749 = vmul.f32 %v748, %v325
        %v750 = vmul.f32 %v748, %v326
        %v751 = vmul.f32 %v748, %v327
        %v752 = vmul.f32 %v748, %v328
        %v753 = vmul.f32 %v748, %v329
        %v759 = vrot.slane %v749, 1
        %v760 = vrot.slane %v750, 1
        %v761 = vsel %vm605, %v759, %v760
        %v762 = vrot.slane %v751, 1
        %v763 = vsel %vm605, %v760, %v762
        %v764 = vrot.slane %v752, 1
        %v765 = vsel %vm605, %v762, %v764
        %v766 = vrot.slane %v753, 1
        %v767 = vsel %vm605, %v764, %v766
        %768 = vrot.lane.b32.xlu0 %v761, 127
        %v769 = vpop.permute.xlu0 %768
        %770 = vrot.lane.b32.xlu0 %v763, 127
        %v771 = vpop.permute.xlu0 %770
        %772 = vrot.lane.b32.xlu0 %v765, 127
        %v773 = vpop.permute.xlu0 %772
        %774 = vrot.lane.b32.xlu0 %v767, 127
        %v775 = vpop.permute.xlu0 %774
        %v780 = vadd.f32 %v648, %v769
        %v781 = vadd.f32 %v649, %v771
        %v782 = vadd.f32 %v650, %v773
        %v783 = vadd.f32 %v651, %v775
        %s784 = sld [smem:[#allocation2 + $0x4c]]
        %v785 = vstv %s784
        %v786 = vmul.f32 %v785, %v325
        %v787 = vmul.f32 %v785, %v326
        %v788 = vmul.f32 %v785, %v327
        %v789 = vmul.f32 %v785, %v328
        %v790 = vmul.f32 %v785, %v329
        %v796 = vrot.slane %v786, 1
        %v797 = vrot.slane %v787, 1
        %v798 = vsel %vm605, %v796, %v797
        %v799 = vrot.slane %v788, 1
        %v800 = vsel %vm605, %v797, %v799
        %v801 = vrot.slane %v789, 1
        %v802 = vsel %vm605, %v799, %v801
        %v803 = vrot.slane %v790, 1
        %v804 = vsel %vm605, %v801, %v803
        %805 = vrot.lane.b32.xlu0 %v798, 127
        %v806 = vpop.permute.xlu0 %805
        %807 = vrot.lane.b32.xlu0 %v800, 127
        %v808 = vpop.permute.xlu0 %807
        %809 = vrot.lane.b32.xlu0 %v802, 127
        %v810 = vpop.permute.xlu0 %809
        %811 = vrot.lane.b32.xlu0 %v804, 127
        %v812 = vpop.permute.xlu0 %811
        %v817 = vadd.f32 %v677, %v806
        %v818 = vadd.f32 %v678, %v808
        %v819 = vadd.f32 %v679, %v810
        %v820 = vadd.f32 %v680, %v812
        %s821 = sld [smem:[#allocation2 + $0x70]]
        %v822 = vstv %s821
        %v823 = vmul.f32 %v822, %v325
        %v824 = vmul.f32 %v822, %v326
        %v825 = vmul.f32 %v822, %v327
        %v826 = vmul.f32 %v822, %v328
        %v827 = vmul.f32 %v822, %v329
        %v833 = vrot.slane %v823, 1
        %v834 = vrot.slane %v824, 1
        %v835 = vsel %vm605, %v833, %v834
        %v836 = vrot.slane %v825, 1
        %v837 = vsel %vm605, %v834, %v836
        %v838 = vrot.slane %v826, 1
        %v839 = vsel %vm605, %v836, %v838
        %v840 = vrot.slane %v827, 1
        %v841 = vsel %vm605, %v838, %v840
        %842 = vrot.lane.b32.xlu0 %v835, 127
        %v843 = vpop.permute.xlu0 %842
        %844 = vrot.lane.b32.xlu0 %v837, 127
        %v845 = vpop.permute.xlu0 %844
        %846 = vrot.lane.b32.xlu0 %v839, 127
        %v847 = vpop.permute.xlu0 %846
        %848 = vrot.lane.b32.xlu0 %v841, 127
        %v849 = vpop.permute.xlu0 %848
        %v854 = vadd.f32 %v706, %v843
        %v855 = vadd.f32 %v707, %v845
        %v856 = vadd.f32 %v708, %v847
        %v857 = vadd.f32 %v709, %v849
        %s858 = sld [smem:[#allocation2 + $0x5]]
        %v859 = vstv %s858
        %v860 = vmul.f32 %v859, %v325
        %v861 = vmul.f32 %v859, %v326
        %v862 = vmul.f32 %v859, %v327
        %v863 = vmul.f32 %v859, %v328
        %v864 = vmul.f32 %v859, %v329
        %v870 = vrot.slane %v860, 1
        %v871 = vrot.slane %v861, 1
        %v872 = vsel %vm605, %v870, %v871
        %v873 = vrot.slane %v862, 1
        %v874 = vsel %vm605, %v871, %v873
        %v875 = vrot.slane %v863, 1
        %v876 = vsel %vm605, %v873, %v875
        %v877 = vrot.slane %v864, 1
        %v878 = vsel %vm605, %v875, %v877
        %879 = vrot.lane.b32.xlu0 %v872, 126
        %v880 = vpop.permute.xlu0 %879
        %881 = vrot.lane.b32.xlu0 %v874, 126
        %v882 = vpop.permute.xlu0 %881
        %883 = vrot.lane.b32.xlu0 %v876, 126
        %v884 = vpop.permute.xlu0 %883
        %885 = vrot.lane.b32.xlu0 %v878, 126
        %v886 = vpop.permute.xlu0 %885
        %v891 = vadd.f32 %v743, %v880
        %v892 = vadd.f32 %v744, %v882
        %v893 = vadd.f32 %v745, %v884
        %v894 = vadd.f32 %v746, %v886
        %s895 = sld [smem:[#allocation2 + $0x29]]
        %v896 = vstv %s895
        %v897 = vmul.f32 %v896, %v325
        %v898 = vmul.f32 %v896, %v326
        %v899 = vmul.f32 %v896, %v327
        %v900 = vmul.f32 %v896, %v328
        %v901 = vmul.f32 %v896, %v329
        %v907 = vrot.slane %v897, 1
        %v908 = vrot.slane %v898, 1
        %v909 = vsel %vm605, %v907, %v908
        %v910 = vrot.slane %v899, 1
        %v911 = vsel %vm605, %v908, %v910
        %v912 = vrot.slane %v900, 1
        %v913 = vsel %vm605, %v910, %v912
        %v914 = vrot.slane %v901, 1
        %v915 = vsel %vm605, %v912, %v914
        %916 = vrot.lane.b32.xlu0 %v909, 126
        %v917 = vpop.permute.xlu0 %916
        %918 = vrot.lane.b32.xlu0 %v911, 126
        %v919 = vpop.permute.xlu0 %918
        %920 = vrot.lane.b32.xlu0 %v913, 126
        %v921 = vpop.permute.xlu0 %920
        %922 = vrot.lane.b32.xlu0 %v915, 126
        %v923 = vpop.permute.xlu0 %922
        %v928 = vadd.f32 %v780, %v917
        %v929 = vadd.f32 %v781, %v919
        %v930 = vadd.f32 %v782, %v921
        %v931 = vadd.f32 %v783, %v923
        %s932 = sld [smem:[#allocation2 + $0x4d]]
        %v933 = vstv %s932
        %v934 = vmul.f32 %v933, %v325
        %v935 = vmul.f32 %v933, %v326
        %v936 = vmul.f32 %v933, %v327
        %v937 = vmul.f32 %v933, %v328
        %v938 = vmul.f32 %v933, %v329
        %v944 = vrot.slane %v934, 1
        %v945 = vrot.slane %v935, 1
        %v946 = vsel %vm605, %v944, %v945
        %v947 = vrot.slane %v936, 1
        %v948 = vsel %vm605, %v945, %v947
        %v949 = vrot.slane %v937, 1
        %v950 = vsel %vm605, %v947, %v949
        %v951 = vrot.slane %v938, 1
        %v952 = vsel %vm605, %v949, %v951
        %953 = vrot.lane.b32.xlu0 %v946, 126
        %v954 = vpop.permute.xlu0 %953
        %955 = vrot.lane.b32.xlu0 %v948, 126
        %v956 = vpop.permute.xlu0 %955
        %957 = vrot.lane.b32.xlu0 %v950, 126
        %v958 = vpop.permute.xlu0 %957
        %959 = vrot.lane.b32.xlu0 %v952, 126
        %v960 = vpop.permute.xlu0 %959
        %v965 = vadd.f32 %v817, %v954
        %v966 = vadd.f32 %v818, %v956
        %v967 = vadd.f32 %v819, %v958
        %v968 = vadd.f32 %v820, %v960
        %s969 = sld [smem:[#allocation2 + $0x71]]
        %v970 = vstv %s969
        %v971 = vmul.f32 %v970, %v325
        %v972 = vmul.f32 %v970, %v326
        %v973 = vmul.f32 %v970, %v327
        %v974 = vmul.f32 %v970, %v328
        %v975 = vmul.f32 %v970, %v329
        %v981 = vrot.slane %v971, 1
        %v982 = vrot.slane %v972, 1
        %v983 = vsel %vm605, %v981, %v982
        %v984 = vrot.slane %v973, 1
        %v985 = vsel %vm605, %v982, %v984
        %v986 = vrot.slane %v974, 1
        %v987 = vsel %vm605, %v984, %v986
        %v988 = vrot.slane %v975, 1
        %v989 = vsel %vm605, %v986, %v988
        %990 = vrot.lane.b32.xlu0 %v983, 126
        %v991 = vpop.permute.xlu0 %990
        %992 = vrot.lane.b32.xlu0 %v985, 126
        %v993 = vpop.permute.xlu0 %992
        %994 = vrot.lane.b32.xlu0 %v987, 126
        %v995 = vpop.permute.xlu0 %994
        %996 = vrot.lane.b32.xlu0 %v989, 126
        %v997 = vpop.permute.xlu0 %996
        %v1002 = vadd.f32 %v854, %v991
        %v1003 = vadd.f32 %v855, %v993
        %v1004 = vadd.f32 %v856, %v995
        %v1005 = vadd.f32 %v857, %v997
        %s1006 = sld [smem:[#allocation2 + $0x6]]
        %v1007 = vstv %s1006
        %v1008 = vmul.f32 %v1007, %v325
        %v1009 = vmul.f32 %v1007, %v326
        %v1010 = vmul.f32 %v1007, %v327
        %v1011 = vmul.f32 %v1007, %v328
        %v1012 = vmul.f32 %v1007, %v329
        %vm1018 = vcmask 1045504
        %v1019 = vrot.slane %v1008, 2
        %v1020 = vrot.slane %v1009, 2
        %v1021 = vsel %vm1018, %v1019, %v1020
        %v1022 = vrot.slane %v1010, 2
        %v1023 = vsel %vm1018, %v1020, %v1022
        %v1024 = vrot.slane %v1011, 2
        %v1025 = vsel %vm1018, %v1022, %v1024
        %v1026 = vrot.slane %v1012, 2
        %v1027 = vsel %vm1018, %v1024, %v1026
        %v1032 = vadd.f32 %v891, %v1021
        %v1033 = vadd.f32 %v892, %v1023
        %v1034 = vadd.f32 %v893, %v1025
        %v1035 = vadd.f32 %v894, %v1027
        %s1036 = sld [smem:[#allocation2 + $0x2a]]
        %v1037 = vstv %s1036
        %v1038 = vmul.f32 %v1037, %v325
        %v1039 = vmul.f32 %v1037, %v326
        %v1040 = vmul.f32 %v1037, %v327
        %v1041 = vmul.f32 %v1037, %v328
        %v1042 = vmul.f32 %v1037, %v329
        %v1048 = vrot.slane %v1038, 2
        %v1049 = vrot.slane %v1039, 2
        %v1050 = vsel %vm1018, %v1048, %v1049
        %v1051 = vrot.slane %v1040, 2
        %v1052 = vsel %vm1018, %v1049, %v1051
        %v1053 = vrot.slane %v1041, 2
        %v1054 = vsel %vm1018, %v1051, %v1053
        %v1055 = vrot.slane %v1042, 2
        %v1056 = vsel %vm1018, %v1053, %v1055
        %v1061 = vadd.f32 %v928, %v1050
        %v1062 = vadd.f32 %v929, %v1052
        %v1063 = vadd.f32 %v930, %v1054
        %v1064 = vadd.f32 %v931, %v1056
        %s1065 = sld [smem:[#allocation2 + $0x4e]]
        %v1066 = vstv %s1065
        %v1067 = vmul.f32 %v1066, %v325
        %v1068 = vmul.f32 %v1066, %v326
        %v1069 = vmul.f32 %v1066, %v327
        %v1070 = vmul.f32 %v1066, %v328
        %v1071 = vmul.f32 %v1066, %v329
        %v1077 = vrot.slane %v1067, 2
        %v1078 = vrot.slane %v1068, 2
        %v1079 = vsel %vm1018, %v1077, %v1078
        %v1080 = vrot.slane %v1069, 2
        %v1081 = vsel %vm1018, %v1078, %v1080
        %v1082 = vrot.slane %v1070, 2
        %v1083 = vsel %vm1018, %v1080, %v1082
        %v1084 = vrot.slane %v1071, 2
        %v1085 = vsel %vm1018, %v1082, %v1084
        %v1090 = vadd.f32 %v965, %v1079
        %v1091 = vadd.f32 %v966, %v1081
        %v1092 = vadd.f32 %v967, %v1083
        %v1093 = vadd.f32 %v968, %v1085
        %s1094 = sld [smem:[#allocation2 + $0x72]]
        %v1095 = vstv %s1094
        %v1096 = vmul.f32 %v1095, %v325
        %v1097 = vmul.f32 %v1095, %v326
        %v1098 = vmul.f32 %v1095, %v327
        %v1099 = vmul.f32 %v1095, %v328
        %v1100 = vmul.f32 %v1095, %v329
        %v1106 = vrot.slane %v1096, 2
        %v1107 = vrot.slane %v1097, 2
        %v1108 = vsel %vm1018, %v1106, %v1107
        %v1109 = vrot.slane %v1098, 2
        %v1110 = vsel %vm1018, %v1107, %v1109
        %v1111 = vrot.slane %v1099, 2
        %v1112 = vsel %vm1018, %v1109, %v1111
        %v1113 = vrot.slane %v1100, 2
        %v1114 = vsel %vm1018, %v1111, %v1113
        %v1119 = vadd.f32 %v1002, %v1108
        %v1120 = vadd.f32 %v1003, %v1110
        %v1121 = vadd.f32 %v1004, %v1112
        %v1122 = vadd.f32 %v1005, %v1114
        %s1123 = sld [smem:[#allocation2 + $0x7]]
        %v1124 = vstv %s1123
        %v1125 = vmul.f32 %v1124, %v325
        %v1126 = vmul.f32 %v1124, %v326
        %v1127 = vmul.f32 %v1124, %v327
        %v1128 = vmul.f32 %v1124, %v328
        %v1129 = vmul.f32 %v1124, %v329
        %v1135 = vrot.slane %v1125, 2
        %v1136 = vrot.slane %v1126, 2
        %v1137 = vsel %vm1018, %v1135, %v1136
        %v1138 = vrot.slane %v1127, 2
        %v1139 = vsel %vm1018, %v1136, %v1138
        %v1140 = vrot.slane %v1128, 2
        %v1141 = vsel %vm1018, %v1138, %v1140
        %v1142 = vrot.slane %v1129, 2
        %v1143 = vsel %vm1018, %v1140, %v1142
        %1144 = vrot.lane.b32.xlu0 %v1137, 127
        %v1145 = vpop.permute.xlu0 %1144
        %1146 = vrot.lane.b32.xlu0 %v1139, 127
        %v1147 = vpop.permute.xlu0 %1146
        %1148 = vrot.lane.b32.xlu0 %v1141, 127
        %v1149 = vpop.permute.xlu0 %1148
        %1150 = vrot.lane.b32.xlu0 %v1143, 127
        %v1151 = vpop.permute.xlu0 %1150
        %v1156 = vadd.f32 %v1032, %v1145
        %v1157 = vadd.f32 %v1033, %v1147
        %v1158 = vadd.f32 %v1034, %v1149
        %v1159 = vadd.f32 %v1035, %v1151
        %s1160 = sld [smem:[#allocation2 + $0x2b]]
        %v1161 = vstv %s1160
        %v1162 = vmul.f32 %v1161, %v325
        %v1163 = vmul.f32 %v1161, %v326
        %v1164 = vmul.f32 %v1161, %v327
        %v1165 = vmul.f32 %v1161, %v328
        %v1166 = vmul.f32 %v1161, %v329
        %v1172 = vrot.slane %v1162, 2
        %v1173 = vrot.slane %v1163, 2
        %v1174 = vsel %vm1018, %v1172, %v1173
        %v1175 = vrot.slane %v1164, 2
        %v1176 = vsel %vm1018, %v1173, %v1175
        %v1177 = vrot.slane %v1165, 2
        %v1178 = vsel %vm1018, %v1175, %v1177
        %v1179 = vrot.slane %v1166, 2
        %v1180 = vsel %vm1018, %v1177, %v1179
        %1181 = vrot.lane.b32.xlu0 %v1174, 127
        %v1182 = vpop.permute.xlu0 %1181
        %1183 = vrot.lane.b32.xlu0 %v1176, 127
        %v1184 = vpop.permute.xlu0 %1183
        %1185 = vrot.lane.b32.xlu0 %v1178, 127
        %v1186 = vpop.permute.xlu0 %1185
        %1187 = vrot.lane.b32.xlu0 %v1180, 127
        %v1188 = vpop.permute.xlu0 %1187
        %v1193 = vadd.f32 %v1061, %v1182
        %v1194 = vadd.f32 %v1062, %v1184
        %v1195 = vadd.f32 %v1063, %v1186
        %v1196 = vadd.f32 %v1064, %v1188
        %s1197 = sld [smem:[#allocation2 + $0x4f]]
        %v1198 = vstv %s1197
        %v1199 = vmul.f32 %v1198, %v325
        %v1200 = vmul.f32 %v1198, %v326
        %v1201 = vmul.f32 %v1198, %v327
        %v1202 = vmul.f32 %v1198, %v328
        %v1203 = vmul.f32 %v1198, %v329
        %v1209 = vrot.slane %v1199, 2
        %v1210 = vrot.slane %v1200, 2
        %v1211 = vsel %vm1018, %v1209, %v1210
        %v1212 = vrot.slane %v1201, 2
        %v1213 = vsel %vm1018, %v1210, %v1212
        %v1214 = vrot.slane %v1202, 2
        %v1215 = vsel %vm1018, %v1212, %v1214
        %v1216 = vrot.slane %v1203, 2
        %v1217 = vsel %vm1018, %v1214, %v1216
        %1218 = vrot.lane.b32.xlu0 %v1211, 127
        %v1219 = vpop.permute.xlu0 %1218
        %1220 = vrot.lane.b32.xlu0 %v1213, 127
        %v1221 = vpop.permute.xlu0 %1220
        %1222 = vrot.lane.b32.xlu0 %v1215, 127
        %v1223 = vpop.permute.xlu0 %1222
        %1224 = vrot.lane.b32.xlu0 %v1217, 127
        %v1225 = vpop.permute.xlu0 %1224
        %v1230 = vadd.f32 %v1090, %v1219
        %v1231 = vadd.f32 %v1091, %v1221
        %v1232 = vadd.f32 %v1092, %v1223
        %v1233 = vadd.f32 %v1093, %v1225
        %s1234 = sld [smem:[#allocation2 + $0x73]]
        %v1235 = vstv %s1234
        %v1236 = vmul.f32 %v1235, %v325
        %v1237 = vmul.f32 %v1235, %v326
        %v1238 = vmul.f32 %v1235, %v327
        %v1239 = vmul.f32 %v1235, %v328
        %v1240 = vmul.f32 %v1235, %v329
        %v1246 = vrot.slane %v1236, 2
        %v1247 = vrot.slane %v1237, 2
        %v1248 = vsel %vm1018, %v1246, %v1247
        %v1249 = vrot.slane %v1238, 2
        %v1250 = vsel %vm1018, %v1247, %v1249
        %v1251 = vrot.slane %v1239, 2
        %v1252 = vsel %vm1018, %v1249, %v1251
        %v1253 = vrot.slane %v1240, 2
        %v1254 = vsel %vm1018, %v1251, %v1253
        %1255 = vrot.lane.b32.xlu0 %v1248, 127
        %v1256 = vpop.permute.xlu0 %1255
        %1257 = vrot.lane.b32.xlu0 %v1250, 127
        %v1258 = vpop.permute.xlu0 %1257
        %1259 = vrot.lane.b32.xlu0 %v1252, 127
        %v1260 = vpop.permute.xlu0 %1259
        %1261 = vrot.lane.b32.xlu0 %v1254, 127
        %v1262 = vpop.permute.xlu0 %1261
        %v1267 = vadd.f32 %v1119, %v1256
        %v1268 = vadd.f32 %v1120, %v1258
        %v1269 = vadd.f32 %v1121, %v1260
        %v1270 = vadd.f32 %v1122, %v1262
        %s1271 = sld [smem:[#allocation2 + $0x8]]
        %v1272 = vstv %s1271
        %v1273 = vmul.f32 %v1272, %v325
        %v1274 = vmul.f32 %v1272, %v326
        %v1275 = vmul.f32 %v1272, %v327
        %v1276 = vmul.f32 %v1272, %v328
        %v1277 = vmul.f32 %v1272, %v329
        %v1283 = vrot.slane %v1273, 2
        %v1284 = vrot.slane %v1274, 2
        %v1285 = vsel %vm1018, %v1283, %v1284
        %v1286 = vrot.slane %v1275, 2
        %v1287 = vsel %vm1018, %v1284, %v1286
        %v1288 = vrot.slane %v1276, 2
        %v1289 = vsel %vm1018, %v1286, %v1288
        %v1290 = vrot.slane %v1277, 2
        %v1291 = vsel %vm1018, %v1288, %v1290
        %1292 = vrot.lane.b32.xlu0 %v1285, 126
        %v1293 = vpop.permute.xlu0 %1292
        %1294 = vrot.lane.b32.xlu0 %v1287, 126
        %v1295 = vpop.permute.xlu0 %1294
        %1296 = vrot.lane.b32.xlu0 %v1289, 126
        %v1297 = vpop.permute.xlu0 %1296
        %1298 = vrot.lane.b32.xlu0 %v1291, 126
        %v1299 = vpop.permute.xlu0 %1298
        %v1304 = vadd.f32 %v1156, %v1293
        %v1305 = vadd.f32 %v1157, %v1295
        %v1306 = vadd.f32 %v1158, %v1297
        %v1307 = vadd.f32 %v1159, %v1299
        %s1308 = sld [smem:[#allocation2 + $0x2c]]
        %v1309 = vstv %s1308
        %v1310 = vmul.f32 %v1309, %v325
        %v1311 = vmul.f32 %v1309, %v326
        %v1312 = vmul.f32 %v1309, %v327
        %v1313 = vmul.f32 %v1309, %v328
        %v1314 = vmul.f32 %v1309, %v329
        %v1320 = vrot.slane %v1310, 2
        %v1321 = vrot.slane %v1311, 2
        %v1322 = vsel %vm1018, %v1320, %v1321
        %v1323 = vrot.slane %v1312, 2
        %v1324 = vsel %vm1018, %v1321, %v1323
        %v1325 = vrot.slane %v1313, 2
        %v1326 = vsel %vm1018, %v1323, %v1325
        %v1327 = vrot.slane %v1314, 2
        %v1328 = vsel %vm1018, %v1325, %v1327
        %1329 = vrot.lane.b32.xlu0 %v1322, 126
        %v1330 = vpop.permute.xlu0 %1329
        %1331 = vrot.lane.b32.xlu0 %v1324, 126
        %v1332 = vpop.permute.xlu0 %1331
        %1333 = vrot.lane.b32.xlu0 %v1326, 126
        %v1334 = vpop.permute.xlu0 %1333
        %1335 = vrot.lane.b32.xlu0 %v1328, 126
        %v1336 = vpop.permute.xlu0 %1335
        %v1341 = vadd.f32 %v1193, %v1330
        %v1342 = vadd.f32 %v1194, %v1332
        %v1343 = vadd.f32 %v1195, %v1334
        %v1344 = vadd.f32 %v1196, %v1336
        %s1345 = sld [smem:[#allocation2 + $0x50]]
        %v1346 = vstv %s1345
        %v1347 = vmul.f32 %v1346, %v325
        %v1348 = vmul.f32 %v1346, %v326
        %v1349 = vmul.f32 %v1346, %v327
        %v1350 = vmul.f32 %v1346, %v328
        %v1351 = vmul.f32 %v1346, %v329
        %v1357 = vrot.slane %v1347, 2
        %v1358 = vrot.slane %v1348, 2
        %v1359 = vsel %vm1018, %v1357, %v1358
        %v1360 = vrot.slane %v1349, 2
        %v1361 = vsel %vm1018, %v1358, %v1360
        %v1362 = vrot.slane %v1350, 2
        %v1363 = vsel %vm1018, %v1360, %v1362
        %v1364 = vrot.slane %v1351, 2
        %v1365 = vsel %vm1018, %v1362, %v1364
        %1366 = vrot.lane.b32.xlu0 %v1359, 126
        %v1367 = vpop.permute.xlu0 %1366
        %1368 = vrot.lane.b32.xlu0 %v1361, 126
        %v1369 = vpop.permute.xlu0 %1368
        %1370 = vrot.lane.b32.xlu0 %v1363, 126
        %v1371 = vpop.permute.xlu0 %1370
        %1372 = vrot.lane.b32.xlu0 %v1365, 126
        %v1373 = vpop.permute.xlu0 %1372
        %v1378 = vadd.f32 %v1230, %v1367
        %v1379 = vadd.f32 %v1231, %v1369
        %v1380 = vadd.f32 %v1232, %v1371
        %v1381 = vadd.f32 %v1233, %v1373
        %s1382 = sld [smem:[#allocation2 + $0x74]]
        %v1383 = vstv %s1382
        %v1384 = vmul.f32 %v1383, %v325
        %v1385 = vmul.f32 %v1383, %v326
        %v1386 = vmul.f32 %v1383, %v327
        %v1387 = vmul.f32 %v1383, %v328
        %v1388 = vmul.f32 %v1383, %v329
        %v1394 = vrot.slane %v1384, 2
        %v1395 = vrot.slane %v1385, 2
        %v1396 = vsel %vm1018, %v1394, %v1395
        %v1397 = vrot.slane %v1386, 2
        %v1398 = vsel %vm1018, %v1395, %v1397
        %v1399 = vrot.slane %v1387, 2
        %v1400 = vsel %vm1018, %v1397, %v1399
        %v1401 = vrot.slane %v1388, 2
        %v1402 = vsel %vm1018, %v1399, %v1401
        %1403 = vrot.lane.b32.xlu0 %v1396, 126
        %v1404 = vpop.permute.xlu0 %1403
        %1405 = vrot.lane.b32.xlu0 %v1398, 126
        %v1406 = vpop.permute.xlu0 %1405
        %1407 = vrot.lane.b32.xlu0 %v1400, 126
        %v1408 = vpop.permute.xlu0 %1407
        %1409 = vrot.lane.b32.xlu0 %v1402, 126
        %v1410 = vpop.permute.xlu0 %1409
        %v1415 = vadd.f32 %v1267, %v1404
        %v1416 = vadd.f32 %v1268, %v1406
        %v1417 = vadd.f32 %v1269, %v1408
        %v1418 = vadd.f32 %v1270, %v1410
        %s1419 = sld [smem:[#allocation2 + $0x9]]
        %v1420 = vstv %s1419
        %v1421 = vmul.f32 %v1420, %v330
        %v1422 = vmul.f32 %v1420, %v331
        %v1423 = vmul.f32 %v1420, %v332
        %v1424 = vmul.f32 %v1420, %v333
        %v1425 = vadd.f32 %v1304, %v1421
        %v1426 = vadd.f32 %v1305, %v1422
        %v1427 = vadd.f32 %v1306, %v1423
        %v1428 = vadd.f32 %v1307, %v1424
        %s1429 = sld [smem:[#allocation2 + $0x2d]]
        %v1430 = vstv %s1429
        %v1431 = vmul.f32 %v1430, %v330
        %v1432 = vmul.f32 %v1430, %v331
        %v1433 = vmul.f32 %v1430, %v332
        %v1434 = vmul.f32 %v1430, %v333
        %v1435 = vadd.f32 %v1341, %v1431
        %v1436 = vadd.f32 %v1342, %v1432
        %v1437 = vadd.f32 %v1343, %v1433
        %v1438 = vadd.f32 %v1344, %v1434
        %s1439 = sld [smem:[#allocation2 + $0x51]]
        %v1440 = vstv %s1439
        %v1441 = vmul.f32 %v1440, %v330
        %v1442 = vmul.f32 %v1440, %v331
        %v1443 = vmul.f32 %v1440, %v332
        %v1444 = vmul.f32 %v1440, %v333
        %v1445 = vadd.f32 %v1378, %v1441
        %v1446 = vadd.f32 %v1379, %v1442
        %v1447 = vadd.f32 %v1380, %v1443
        %v1448 = vadd.f32 %v1381, %v1444
        %s1449 = sld [smem:[#allocation2 + $0x75]]
        %v1450 = vstv %s1449
        %v1451 = vmul.f32 %v1450, %v330
        %v1452 = vmul.f32 %v1450, %v331
        %v1453 = vmul.f32 %v1450, %v332
        %v1454 = vmul.f32 %v1450, %v333
        %v1455 = vadd.f32 %v1415, %v1451
        %v1456 = vadd.f32 %v1416, %v1452
        %v1457 = vadd.f32 %v1417, %v1453
        %v1458 = vadd.f32 %v1418, %v1454
        %s1459 = sld [smem:[#allocation2 + $0xa]]
        %v1460 = vstv %s1459
        %v1461 = vmul.f32 %v1460, %v330
        %v1462 = vmul.f32 %v1460, %v331
        %v1463 = vmul.f32 %v1460, %v332
        %v1464 = vmul.f32 %v1460, %v333
        %1469 = vrot.lane.b32.xlu0 %v1461, 127
        %v1470 = vpop.permute.xlu0 %1469
        %1471 = vrot.lane.b32.xlu0 %v1462, 127
        %v1472 = vpop.permute.xlu0 %1471
        %1473 = vrot.lane.b32.xlu0 %v1463, 127
        %v1474 = vpop.permute.xlu0 %1473
        %1475 = vrot.lane.b32.xlu0 %v1464, 127
        %v1476 = vpop.permute.xlu0 %1475
        %v1481 = vadd.f32 %v1425, %v1470
        %v1482 = vadd.f32 %v1426, %v1472
        %v1483 = vadd.f32 %v1427, %v1474
        %v1484 = vadd.f32 %v1428, %v1476
        %s1485 = sld [smem:[#allocation2 + $0x2e]]
        %v1486 = vstv %s1485
        %v1487 = vmul.f32 %v1486, %v330
        %v1488 = vmul.f32 %v1486, %v331
        %v1489 = vmul.f32 %v1486, %v332
        %v1490 = vmul.f32 %v1486, %v333
        %1495 = vrot.lane.b32.xlu0 %v1487, 127
        %v1496 = vpop.permute.xlu0 %1495
        %1497 = vrot.lane.b32.xlu0 %v1488, 127
        %v1498 = vpop.permute.xlu0 %1497
        %1499 = vrot.lane.b32.xlu0 %v1489, 127
        %v1500 = vpop.permute.xlu0 %1499
        %1501 = vrot.lane.b32.xlu0 %v1490, 127
        %v1502 = vpop.permute.xlu0 %1501
        %v1507 = vadd.f32 %v1435, %v1496
        %v1508 = vadd.f32 %v1436, %v1498
        %v1509 = vadd.f32 %v1437, %v1500
        %v1510 = vadd.f32 %v1438, %v1502
        %s1511 = sld [smem:[#allocation2 + $0x52]]
        %v1512 = vstv %s1511
        %v1513 = vmul.f32 %v1512, %v330
        %v1514 = vmul.f32 %v1512, %v331
        %v1515 = vmul.f32 %v1512, %v332
        %v1516 = vmul.f32 %v1512, %v333
        %1521 = vrot.lane.b32.xlu0 %v1513, 127
        %v1522 = vpop.permute.xlu0 %1521
        %1523 = vrot.lane.b32.xlu0 %v1514, 127
        %v1524 = vpop.permute.xlu0 %1523
        %1525 = vrot.lane.b32.xlu0 %v1515, 127
        %v1526 = vpop.permute.xlu0 %1525
        %1527 = vrot.lane.b32.xlu0 %v1516, 127
        %v1528 = vpop.permute.xlu0 %1527
        %v1533 = vadd.f32 %v1445, %v1522
        %v1534 = vadd.f32 %v1446, %v1524
        %v1535 = vadd.f32 %v1447, %v1526
        %v1536 = vadd.f32 %v1448, %v1528
        %s1537 = sld [smem:[#allocation2 + $0x76]]
        %v1538 = vstv %s1537
        %v1539 = vmul.f32 %v1538, %v330
        %v1540 = vmul.f32 %v1538, %v331
        %v1541 = vmul.f32 %v1538, %v332
        %v1542 = vmul.f32 %v1538, %v333
        %1547 = vrot.lane.b32.xlu0 %v1539, 127
        %v1548 = vpop.permute.xlu0 %1547
        %1549 = vrot.lane.b32.xlu0 %v1540, 127
        %v1550 = vpop.permute.xlu0 %1549
        %1551 = vrot.lane.b32.xlu0 %v1541, 127
        %v1552 = vpop.permute.xlu0 %1551
        %1553 = vrot.lane.b32.xlu0 %v1542, 127
        %v1554 = vpop.permute.xlu0 %1553
        %v1559 = vadd.f32 %v1455, %v1548
        %v1560 = vadd.f32 %v1456, %v1550
        %v1561 = vadd.f32 %v1457, %v1552
        %v1562 = vadd.f32 %v1458, %v1554
        %s1563 = sld [smem:[#allocation2 + $0xb]]
        %v1564 = vstv %s1563
        %v1565 = vmul.f32 %v1564, %v330
        %v1566 = vmul.f32 %v1564, %v331
        %v1567 = vmul.f32 %v1564, %v332
        %v1568 = vmul.f32 %v1564, %v333
        %1573 = vrot.lane.b32.xlu0 %v1565, 126
        %v1574 = vpop.permute.xlu0 %1573
        %1575 = vrot.lane.b32.xlu0 %v1566, 126
        %v1576 = vpop.permute.xlu0 %1575
        %1577 = vrot.lane.b32.xlu0 %v1567, 126
        %v1578 = vpop.permute.xlu0 %1577
        %1579 = vrot.lane.b32.xlu0 %v1568, 126
        %v1580 = vpop.permute.xlu0 %1579
        %v1585 = vadd.f32 %v1481, %v1574
        %v1586 = vadd.f32 %v1482, %v1576
        %v1587 = vadd.f32 %v1483, %v1578
        %v1588 = vadd.f32 %v1484, %v1580
        %s1589 = sld [smem:[#allocation2 + $0x2f]]
        %v1590 = vstv %s1589
        %v1591 = vmul.f32 %v1590, %v330
        %v1592 = vmul.f32 %v1590, %v331
        %v1593 = vmul.f32 %v1590, %v332
        %v1594 = vmul.f32 %v1590, %v333
        %1599 = vrot.lane.b32.xlu0 %v1591, 126
        %v1600 = vpop.permute.xlu0 %1599
        %1601 = vrot.lane.b32.xlu0 %v1592, 126
        %v1602 = vpop.permute.xlu0 %1601
        %1603 = vrot.lane.b32.xlu0 %v1593, 126
        %v1604 = vpop.permute.xlu0 %1603
        %1605 = vrot.lane.b32.xlu0 %v1594, 126
        %v1606 = vpop.permute.xlu0 %1605
        %v1611 = vadd.f32 %v1507, %v1600
        %v1612 = vadd.f32 %v1508, %v1602
        %v1613 = vadd.f32 %v1509, %v1604
        %v1614 = vadd.f32 %v1510, %v1606
        %s1615 = sld [smem:[#allocation2 + $0x53]]
        %v1616 = vstv %s1615
        %v1617 = vmul.f32 %v1616, %v330
        %v1618 = vmul.f32 %v1616, %v331
        %v1619 = vmul.f32 %v1616, %v332
        %v1620 = vmul.f32 %v1616, %v333
        %1625 = vrot.lane.b32.xlu0 %v1617, 126
        %v1626 = vpop.permute.xlu0 %1625
        %1627 = vrot.lane.b32.xlu0 %v1618, 126
        %v1628 = vpop.permute.xlu0 %1627
        %1629 = vrot.lane.b32.xlu0 %v1619, 126
        %v1630 = vpop.permute.xlu0 %1629
        %1631 = vrot.lane.b32.xlu0 %v1620, 126
        %v1632 = vpop.permute.xlu0 %1631
        %v1637 = vadd.f32 %v1533, %v1626
        %v1638 = vadd.f32 %v1534, %v1628
        %v1639 = vadd.f32 %v1535, %v1630
        %v1640 = vadd.f32 %v1536, %v1632
        %s1641 = sld [smem:[#allocation2 + $0x77]]
        %v1642 = vstv %s1641
        %v1643 = vmul.f32 %v1642, %v330
        %v1644 = vmul.f32 %v1642, %v331
        %v1645 = vmul.f32 %v1642, %v332
        %v1646 = vmul.f32 %v1642, %v333
        %1651 = vrot.lane.b32.xlu0 %v1643, 126
        %v1652 = vpop.permute.xlu0 %1651
        %1653 = vrot.lane.b32.xlu0 %v1644, 126
        %v1654 = vpop.permute.xlu0 %1653
        %1655 = vrot.lane.b32.xlu0 %v1645, 126
        %v1656 = vpop.permute.xlu0 %1655
        %1657 = vrot.lane.b32.xlu0 %v1646, 126
        %v1658 = vpop.permute.xlu0 %1657
        %v1663 = vadd.f32 %v1559, %v1652
        %v1664 = vadd.f32 %v1560, %v1654
        %v1665 = vadd.f32 %v1561, %v1656
        %v1666 = vadd.f32 %v1562, %v1658
        %s1667 = sld [smem:[#allocation2 + $0xc]]
        %v1668 = vstv %s1667
        %v1669 = vmul.f32 %v1668, %v330
        %v1670 = vmul.f32 %v1668, %v331
        %v1671 = vmul.f32 %v1668, %v332
        %v1672 = vmul.f32 %v1668, %v333
        %v1673 = vmul.f32 %v1668, %v334
        %v1679 = vrot.slane %v1669, 1
        %v1680 = vrot.slane %v1670, 1
        %v1681 = vsel %vm605, %v1679, %v1680
        %v1682 = vrot.slane %v1671, 1
        %v1683 = vsel %vm605, %v1680, %v1682
        %v1684 = vrot.slane %v1672, 1
        %v1685 = vsel %vm605, %v1682, %v1684
        %v1686 = vrot.slane %v1673, 1
        %v1687 = vsel %vm605, %v1684, %v1686
        %v1692 = vadd.f32 %v1585, %v1681
        %v1693 = vadd.f32 %v1586, %v1683
        %v1694 = vadd.f32 %v1587, %v1685
        %v1695 = vadd.f32 %v1588, %v1687
        %s1696 = sld [smem:[#allocation2 + $0x30]]
        %v1697 = vstv %s1696
        %v1698 = vmul.f32 %v1697, %v330
        %v1699 = vmul.f32 %v1697, %v331
        %v1700 = vmul.f32 %v1697, %v332
        %v1701 = vmul.f32 %v1697, %v333
        %v1702 = vmul.f32 %v1697, %v334
        %v1708 = vrot.slane %v1698, 1
        %v1709 = vrot.slane %v1699, 1
        %v1710 = vsel %vm605, %v1708, %v1709
        %v1711 = vrot.slane %v1700, 1
        %v1712 = vsel %vm605, %v1709, %v1711
        %v1713 = vrot.slane %v1701, 1
        %v1714 = vsel %vm605, %v1711, %v1713
        %v1715 = vrot.slane %v1702, 1
        %v1716 = vsel %vm605, %v1713, %v1715
        %v1721 = vadd.f32 %v1611, %v1710
        %v1722 = vadd.f32 %v1612, %v1712
        %v1723 = vadd.f32 %v1613, %v1714
        %v1724 = vadd.f32 %v1614, %v1716
        %s1725 = sld [smem:[#allocation2 + $0x54]]
        %v1726 = vstv %s1725
        %v1727 = vmul.f32 %v1726, %v330
        %v1728 = vmul.f32 %v1726, %v331
        %v1729 = vmul.f32 %v1726, %v332
        %v1730 = vmul.f32 %v1726, %v333
        %v1731 = vmul.f32 %v1726, %v334
        %v1737 = vrot.slane %v1727, 1
        %v1738 = vrot.slane %v1728, 1
        %v1739 = vsel %vm605, %v1737, %v1738
        %v1740 = vrot.slane %v1729, 1
        %v1741 = vsel %vm605, %v1738, %v1740
        %v1742 = vrot.slane %v1730, 1
        %v1743 = vsel %vm605, %v1740, %v1742
        %v1744 = vrot.slane %v1731, 1
        %v1745 = vsel %vm605, %v1742, %v1744
        %v1750 = vadd.f32 %v1637, %v1739
        %v1751 = vadd.f32 %v1638, %v1741
        %v1752 = vadd.f32 %v1639, %v1743
        %v1753 = vadd.f32 %v1640, %v1745
        %s1754 = sld [smem:[#allocation2 + $0x78]]
        %v1755 = vstv %s1754
        %v1756 = vmul.f32 %v1755, %v330
        %v1757 = vmul.f32 %v1755, %v331
        %v1758 = vmul.f32 %v1755, %v332
        %v1759 = vmul.f32 %v1755, %v333
        %v1760 = vmul.f32 %v1755, %v334
        %v1766 = vrot.slane %v1756, 1
        %v1767 = vrot.slane %v1757, 1
        %v1768 = vsel %vm605, %v1766, %v1767
        %v1769 = vrot.slane %v1758, 1
        %v1770 = vsel %vm605, %v1767, %v1769
        %v1771 = vrot.slane %v1759, 1
        %v1772 = vsel %vm605, %v1769, %v1771
        %v1773 = vrot.slane %v1760, 1
        %v1774 = vsel %vm605, %v1771, %v1773
        %v1779 = vadd.f32 %v1663, %v1768
        %v1780 = vadd.f32 %v1664, %v1770
        %v1781 = vadd.f32 %v1665, %v1772
        %v1782 = vadd.f32 %v1666, %v1774
        %s1783 = sld [smem:[#allocation2 + $0xd]]
        %v1784 = vstv %s1783
        %v1785 = vmul.f32 %v1784, %v330
        %v1786 = vmul.f32 %v1784, %v331
        %v1787 = vmul.f32 %v1784, %v332
        %v1788 = vmul.f32 %v1784, %v333
        %v1789 = vmul.f32 %v1784, %v334
        %v1795 = vrot.slane %v1785, 1
        %v1796 = vrot.slane %v1786, 1
        %v1797 = vsel %vm605, %v1795, %v1796
        %v1798 = vrot.slane %v1787, 1
        %v1799 = vsel %vm605, %v1796, %v1798
        %v1800 = vrot.slane %v1788, 1
        %v1801 = vsel %vm605, %v1798, %v1800
        %v1802 = vrot.slane %v1789, 1
        %v1803 = vsel %vm605, %v1800, %v1802
        %1804 = vrot.lane.b32.xlu0 %v1797, 127
        %v1805 = vpop.permute.xlu0 %1804
        %1806 = vrot.lane.b32.xlu0 %v1799, 127
        %v1807 = vpop.permute.xlu0 %1806
        %1808 = vrot.lane.b32.xlu0 %v1801, 127
        %v1809 = vpop.permute.xlu0 %1808
        %1810 = vrot.lane.b32.xlu0 %v1803, 127
        %v1811 = vpop.permute.xlu0 %1810
        %v1816 = vadd.f32 %v1692, %v1805
        %v1817 = vadd.f32 %v1693, %v1807
        %v1818 = vadd.f32 %v1694, %v1809
        %v1819 = vadd.f32 %v1695, %v1811
        %s1820 = sld [smem:[#allocation2 + $0x31]]
        %v1821 = vstv %s1820
        %v1822 = vmul.f32 %v1821, %v330
        %v1823 = vmul.f32 %v1821, %v331
        %v1824 = vmul.f32 %v1821, %v332
        %v1825 = vmul.f32 %v1821, %v333
        %v1826 = vmul.f32 %v1821, %v334
        %v1832 = vrot.slane %v1822, 1
        %v1833 = vrot.slane %v1823, 1
        %v1834 = vsel %vm605, %v1832, %v1833
        %v1835 = vrot.slane %v1824, 1
        %v1836 = vsel %vm605, %v1833, %v1835
        %v1837 = vrot.slane %v1825, 1
        %v1838 = vsel %vm605, %v1835, %v1837
        %v1839 = vrot.slane %v1826, 1
        %v1840 = vsel %vm605, %v1837, %v1839
        %1841 = vrot.lane.b32.xlu0 %v1834, 127
        %v1842 = vpop.permute.xlu0 %1841
        %1843 = vrot.lane.b32.xlu0 %v1836, 127
        %v1844 = vpop.permute.xlu0 %1843
        %1845 = vrot.lane.b32.xlu0 %v1838, 127
        %v1846 = vpop.permute.xlu0 %1845
        %1847 = vrot.lane.b32.xlu0 %v1840, 127
        %v1848 = vpop.permute.xlu0 %1847
        %v1853 = vadd.f32 %v1721, %v1842
        %v1854 = vadd.f32 %v1722, %v1844
        %v1855 = vadd.f32 %v1723, %v1846
        %v1856 = vadd.f32 %v1724, %v1848
        %s1857 = sld [smem:[#allocation2 + $0x55]]
        %v1858 = vstv %s1857
        %v1859 = vmul.f32 %v1858, %v330
        %v1860 = vmul.f32 %v1858, %v331
        %v1861 = vmul.f32 %v1858, %v332
        %v1862 = vmul.f32 %v1858, %v333
        %v1863 = vmul.f32 %v1858, %v334
        %v1869 = vrot.slane %v1859, 1
        %v1870 = vrot.slane %v1860, 1
        %v1871 = vsel %vm605, %v1869, %v1870
        %v1872 = vrot.slane %v1861, 1
        %v1873 = vsel %vm605, %v1870, %v1872
        %v1874 = vrot.slane %v1862, 1
        %v1875 = vsel %vm605, %v1872, %v1874
        %v1876 = vrot.slane %v1863, 1
        %v1877 = vsel %vm605, %v1874, %v1876
        %1878 = vrot.lane.b32.xlu0 %v1871, 127
        %v1879 = vpop.permute.xlu0 %1878
        %1880 = vrot.lane.b32.xlu0 %v1873, 127
        %v1881 = vpop.permute.xlu0 %1880
        %1882 = vrot.lane.b32.xlu0 %v1875, 127
        %v1883 = vpop.permute.xlu0 %1882
        %1884 = vrot.lane.b32.xlu0 %v1877, 127
        %v1885 = vpop.permute.xlu0 %1884
        %v1890 = vadd.f32 %v1750, %v1879
        %v1891 = vadd.f32 %v1751, %v1881
        %v1892 = vadd.f32 %v1752, %v1883
        %v1893 = vadd.f32 %v1753, %v1885
        %s1894 = sld [smem:[#allocation2 + $0x79]]
        %v1895 = vstv %s1894
        %v1896 = vmul.f32 %v1895, %v330
        %v1897 = vmul.f32 %v1895, %v331
        %v1898 = vmul.f32 %v1895, %v332
        %v1899 = vmul.f32 %v1895, %v333
        %v1900 = vmul.f32 %v1895, %v334
        %v1906 = vrot.slane %v1896, 1
        %v1907 = vrot.slane %v1897, 1
        %v1908 = vsel %vm605, %v1906, %v1907
        %v1909 = vrot.slane %v1898, 1
        %v1910 = vsel %vm605, %v1907, %v1909
        %v1911 = vrot.slane %v1899, 1
        %v1912 = vsel %vm605, %v1909, %v1911
        %v1913 = vrot.slane %v1900, 1
        %v1914 = vsel %vm605, %v1911, %v1913
        %1915 = vrot.lane.b32.xlu0 %v1908, 127
        %v1916 = vpop.permute.xlu0 %1915
        %1917 = vrot.lane.b32.xlu0 %v1910, 127
        %v1918 = vpop.permute.xlu0 %1917
        %1919 = vrot.lane.b32.xlu0 %v1912, 127
        %v1920 = vpop.permute.xlu0 %1919
        %1921 = vrot.lane.b32.xlu0 %v1914, 127
        %v1922 = vpop.permute.xlu0 %1921
        %v1927 = vadd.f32 %v1779, %v1916
        %v1928 = vadd.f32 %v1780, %v1918
        %v1929 = vadd.f32 %v1781, %v1920
        %v1930 = vadd.f32 %v1782, %v1922
        %s1931 = sld [smem:[#allocation2 + $0xe]]
        %v1932 = vstv %s1931
        %v1933 = vmul.f32 %v1932, %v330
        %v1934 = vmul.f32 %v1932, %v331
        %v1935 = vmul.f32 %v1932, %v332
        %v1936 = vmul.f32 %v1932, %v333
        %v1937 = vmul.f32 %v1932, %v334
        %v1943 = vrot.slane %v1933, 1
        %v1944 = vrot.slane %v1934, 1
        %v1945 = vsel %vm605, %v1943, %v1944
        %v1946 = vrot.slane %v1935, 1
        %v1947 = vsel %vm605, %v1944, %v1946
        %v1948 = vrot.slane %v1936, 1
        %v1949 = vsel %vm605, %v1946, %v1948
        %v1950 = vrot.slane %v1937, 1
        %v1951 = vsel %vm605, %v1948, %v1950
        %1952 = vrot.lane.b32.xlu0 %v1945, 126
        %v1953 = vpop.permute.xlu0 %1952
        %1954 = vrot.lane.b32.xlu0 %v1947, 126
        %v1955 = vpop.permute.xlu0 %1954
        %1956 = vrot.lane.b32.xlu0 %v1949, 126
        %v1957 = vpop.permute.xlu0 %1956
        %1958 = vrot.lane.b32.xlu0 %v1951, 126
        %v1959 = vpop.permute.xlu0 %1958
        %v1964 = vadd.f32 %v1816, %v1953
        %v1965 = vadd.f32 %v1817, %v1955
        %v1966 = vadd.f32 %v1818, %v1957
        %v1967 = vadd.f32 %v1819, %v1959
        %s1968 = sld [smem:[#allocation2 + $0x32]]
        %v1969 = vstv %s1968
        %v1970 = vmul.f32 %v1969, %v330
        %v1971 = vmul.f32 %v1969, %v331
        %v1972 = vmul.f32 %v1969, %v332
        %v1973 = vmul.f32 %v1969, %v333
        %v1974 = vmul.f32 %v1969, %v334
        %v1980 = vrot.slane %v1970, 1
        %v1981 = vrot.slane %v1971, 1
        %v1982 = vsel %vm605, %v1980, %v1981
        %v1983 = vrot.slane %v1972, 1
        %v1984 = vsel %vm605, %v1981, %v1983
        %v1985 = vrot.slane %v1973, 1
        %v1986 = vsel %vm605, %v1983, %v1985
        %v1987 = vrot.slane %v1974, 1
        %v1988 = vsel %vm605, %v1985, %v1987
        %1989 = vrot.lane.b32.xlu0 %v1982, 126
        %v1990 = vpop.permute.xlu0 %1989
        %1991 = vrot.lane.b32.xlu0 %v1984, 126
        %v1992 = vpop.permute.xlu0 %1991
        %1993 = vrot.lane.b32.xlu0 %v1986, 126
        %v1994 = vpop.permute.xlu0 %1993
        %1995 = vrot.lane.b32.xlu0 %v1988, 126
        %v1996 = vpop.permute.xlu0 %1995
        %v2001 = vadd.f32 %v1853, %v1990
        %v2002 = vadd.f32 %v1854, %v1992
        %v2003 = vadd.f32 %v1855, %v1994
        %v2004 = vadd.f32 %v1856, %v1996
        %s2005 = sld [smem:[#allocation2 + $0x56]]
        %v2006 = vstv %s2005
        %v2007 = vmul.f32 %v2006, %v330
        %v2008 = vmul.f32 %v2006, %v331
        %v2009 = vmul.f32 %v2006, %v332
        %v2010 = vmul.f32 %v2006, %v333
        %v2011 = vmul.f32 %v2006, %v334
        %v2017 = vrot.slane %v2007, 1
        %v2018 = vrot.slane %v2008, 1
        %v2019 = vsel %vm605, %v2017, %v2018
        %v2020 = vrot.slane %v2009, 1
        %v2021 = vsel %vm605, %v2018, %v2020
        %v2022 = vrot.slane %v2010, 1
        %v2023 = vsel %vm605, %v2020, %v2022
        %v2024 = vrot.slane %v2011, 1
        %v2025 = vsel %vm605, %v2022, %v2024
        %2026 = vrot.lane.b32.xlu0 %v2019, 126
        %v2027 = vpop.permute.xlu0 %2026
        %2028 = vrot.lane.b32.xlu0 %v2021, 126
        %v2029 = vpop.permute.xlu0 %2028
        %2030 = vrot.lane.b32.xlu0 %v2023, 126
        %v2031 = vpop.permute.xlu0 %2030
        %2032 = vrot.lane.b32.xlu0 %v2025, 126
        %v2033 = vpop.permute.xlu0 %2032
        %v2038 = vadd.f32 %v1890, %v2027
        %v2039 = vadd.f32 %v1891, %v2029
        %v2040 = vadd.f32 %v1892, %v2031
        %v2041 = vadd.f32 %v1893, %v2033
        %s2042 = sld [smem:[#allocation2 + $0x7a]]
        %v2043 = vstv %s2042
        %v2044 = vmul.f32 %v2043, %v330
        %v2045 = vmul.f32 %v2043, %v331
        %v2046 = vmul.f32 %v2043, %v332
        %v2047 = vmul.f32 %v2043, %v333
        %v2048 = vmul.f32 %v2043, %v334
        %v2054 = vrot.slane %v2044, 1
        %v2055 = vrot.slane %v2045, 1
        %v2056 = vsel %vm605, %v2054, %v2055
        %v2057 = vrot.slane %v2046, 1
        %v2058 = vsel %vm605, %v2055, %v2057
        %v2059 = vrot.slane %v2047, 1
        %v2060 = vsel %vm605, %v2057, %v2059
        %v2061 = vrot.slane %v2048, 1
        %v2062 = vsel %vm605, %v2059, %v2061
        %2063 = vrot.lane.b32.xlu0 %v2056, 126
        %v2064 = vpop.permute.xlu0 %2063
        %2065 = vrot.lane.b32.xlu0 %v2058, 126
        %v2066 = vpop.permute.xlu0 %2065
        %2067 = vrot.lane.b32.xlu0 %v2060, 126
        %v2068 = vpop.permute.xlu0 %2067
        %2069 = vrot.lane.b32.xlu0 %v2062, 126
        %v2070 = vpop.permute.xlu0 %2069
        %v2075 = vadd.f32 %v1927, %v2064
        %v2076 = vadd.f32 %v1928, %v2066
        %v2077 = vadd.f32 %v1929, %v2068
        %v2078 = vadd.f32 %v1930, %v2070
        %s2079 = sld [smem:[#allocation2 + $0xf]]
        %v2080 = vstv %s2079
        %v2081 = vmul.f32 %v2080, %v330
        %v2082 = vmul.f32 %v2080, %v331
        %v2083 = vmul.f32 %v2080, %v332
        %v2084 = vmul.f32 %v2080, %v333
        %v2085 = vmul.f32 %v2080, %v334
        %v2091 = vrot.slane %v2081, 2
        %v2092 = vrot.slane %v2082, 2
        %v2093 = vsel %vm1018, %v2091, %v2092
        %v2094 = vrot.slane %v2083, 2
        %v2095 = vsel %vm1018, %v2092, %v2094
        %v2096 = vrot.slane %v2084, 2
        %v2097 = vsel %vm1018, %v2094, %v2096
        %v2098 = vrot.slane %v2085, 2
        %v2099 = vsel %vm1018, %v2096, %v2098
        %v2104 = vadd.f32 %v1964, %v2093
        %v2105 = vadd.f32 %v1965, %v2095
        %v2106 = vadd.f32 %v1966, %v2097
        %v2107 = vadd.f32 %v1967, %v2099
        %s2108 = sld [smem:[#allocation2 + $0x33]]
        %v2109 = vstv %s2108
        %v2110 = vmul.f32 %v2109, %v330
        %v2111 = vmul.f32 %v2109, %v331
        %v2112 = vmul.f32 %v2109, %v332
        %v2113 = vmul.f32 %v2109, %v333
        %v2114 = vmul.f32 %v2109, %v334
        %v2120 = vrot.slane %v2110, 2
        %v2121 = vrot.slane %v2111, 2
        %v2122 = vsel %vm1018, %v2120, %v2121
        %v2123 = vrot.slane %v2112, 2
        %v2124 = vsel %vm1018, %v2121, %v2123
        %v2125 = vrot.slane %v2113, 2
        %v2126 = vsel %vm1018, %v2123, %v2125
        %v2127 = vrot.slane %v2114, 2
        %v2128 = vsel %vm1018, %v2125, %v2127
        %v2133 = vadd.f32 %v2001, %v2122
        %v2134 = vadd.f32 %v2002, %v2124
        %v2135 = vadd.f32 %v2003, %v2126
        %v2136 = vadd.f32 %v2004, %v2128
        %s2137 = sld [smem:[#allocation2 + $0x57]]
        %v2138 = vstv %s2137
        %v2139 = vmul.f32 %v2138, %v330
        %v2140 = vmul.f32 %v2138, %v331
        %v2141 = vmul.f32 %v2138, %v332
        %v2142 = vmul.f32 %v2138, %v333
        %v2143 = vmul.f32 %v2138, %v334
        %v2149 = vrot.slane %v2139, 2
        %v2150 = vrot.slane %v2140, 2
        %v2151 = vsel %vm1018, %v2149, %v2150
        %v2152 = vrot.slane %v2141, 2
        %v2153 = vsel %vm1018, %v2150, %v2152
        %v2154 = vrot.slane %v2142, 2
        %v2155 = vsel %vm1018, %v2152, %v2154
        %v2156 = vrot.slane %v2143, 2
        %v2157 = vsel %vm1018, %v2154, %v2156
        %v2162 = vadd.f32 %v2038, %v2151
        %v2163 = vadd.f32 %v2039, %v2153
        %v2164 = vadd.f32 %v2040, %v2155
        %v2165 = vadd.f32 %v2041, %v2157
        %s2166 = sld [smem:[#allocation2 + $0x7b]]
        %v2167 = vstv %s2166
        %v2168 = vmul.f32 %v2167, %v330
        %v2169 = vmul.f32 %v2167, %v331
        %v2170 = vmul.f32 %v2167, %v332
        %v2171 = vmul.f32 %v2167, %v333
        %v2172 = vmul.f32 %v2167, %v334
        %v2178 = vrot.slane %v2168, 2
        %v2179 = vrot.slane %v2169, 2
        %v2180 = vsel %vm1018, %v2178, %v2179
        %v2181 = vrot.slane %v2170, 2
        %v2182 = vsel %vm1018, %v2179, %v2181
        %v2183 = vrot.slane %v2171, 2
        %v2184 = vsel %vm1018, %v2181, %v2183
        %v2185 = vrot.slane %v2172, 2
        %v2186 = vsel %vm1018, %v2183, %v2185
        %v2191 = vadd.f32 %v2075, %v2180
        %v2192 = vadd.f32 %v2076, %v2182
        %v2193 = vadd.f32 %v2077, %v2184
        %v2194 = vadd.f32 %v2078, %v2186
        %s2195 = sld [smem:[#allocation2 + $0x10]]
        %v2196 = vstv %s2195
        %v2197 = vmul.f32 %v2196, %v330
        %v2198 = vmul.f32 %v2196, %v331
        %v2199 = vmul.f32 %v2196, %v332
        %v2200 = vmul.f32 %v2196, %v333
        %v2201 = vmul.f32 %v2196, %v334
        %v2207 = vrot.slane %v2197, 2
        %v2208 = vrot.slane %v2198, 2
        %v2209 = vsel %vm1018, %v2207, %v2208
        %v2210 = vrot.slane %v2199, 2
        %v2211 = vsel %vm1018, %v2208, %v2210
        %v2212 = vrot.slane %v2200, 2
        %v2213 = vsel %vm1018, %v2210, %v2212
        %v2214 = vrot.slane %v2201, 2
        %v2215 = vsel %vm1018, %v2212, %v2214
        %2216 = vrot.lane.b32.xlu0 %v2209, 127
        %v2217 = vpop.permute.xlu0 %2216
        %2218 = vrot.lane.b32.xlu0 %v2211, 127
        %v2219 = vpop.permute.xlu0 %2218
        %2220 = vrot.lane.b32.xlu0 %v2213, 127
        %v2221 = vpop.permute.xlu0 %2220
        %2222 = vrot.lane.b32.xlu0 %v2215, 127
        %v2223 = vpop.permute.xlu0 %2222
        %v2228 = vadd.f32 %v2104, %v2217
        %v2229 = vadd.f32 %v2105, %v2219
        %v2230 = vadd.f32 %v2106, %v2221
        %v2231 = vadd.f32 %v2107, %v2223
        %s2232 = sld [smem:[#allocation2 + $0x34]]
        %v2233 = vstv %s2232
        %v2234 = vmul.f32 %v2233, %v330
        %v2235 = vmul.f32 %v2233, %v331
        %v2236 = vmul.f32 %v2233, %v332
        %v2237 = vmul.f32 %v2233, %v333
        %v2238 = vmul.f32 %v2233, %v334
        %v2244 = vrot.slane %v2234, 2
        %v2245 = vrot.slane %v2235, 2
        %v2246 = vsel %vm1018, %v2244, %v2245
        %v2247 = vrot.slane %v2236, 2
        %v2248 = vsel %vm1018, %v2245, %v2247
        %v2249 = vrot.slane %v2237, 2
        %v2250 = vsel %vm1018, %v2247, %v2249
        %v2251 = vrot.slane %v2238, 2
        %v2252 = vsel %vm1018, %v2249, %v2251
        %2253 = vrot.lane.b32.xlu0 %v2246, 127
        %v2254 = vpop.permute.xlu0 %2253
        %2255 = vrot.lane.b32.xlu0 %v2248, 127
        %v2256 = vpop.permute.xlu0 %2255
        %2257 = vrot.lane.b32.xlu0 %v2250, 127
        %v2258 = vpop.permute.xlu0 %2257
        %2259 = vrot.lane.b32.xlu0 %v2252, 127
        %v2260 = vpop.permute.xlu0 %2259
        %v2265 = vadd.f32 %v2133, %v2254
        %v2266 = vadd.f32 %v2134, %v2256
        %v2267 = vadd.f32 %v2135, %v2258
        %v2268 = vadd.f32 %v2136, %v2260
        %s2269 = sld [smem:[#allocation2 + $0x58]]
        %v2270 = vstv %s2269
        %v2271 = vmul.f32 %v2270, %v330
        %v2272 = vmul.f32 %v2270, %v331
        %v2273 = vmul.f32 %v2270, %v332
        %v2274 = vmul.f32 %v2270, %v333
        %v2275 = vmul.f32 %v2270, %v334
        %v2281 = vrot.slane %v2271, 2
        %v2282 = vrot.slane %v2272, 2
        %v2283 = vsel %vm1018, %v2281, %v2282
        %v2284 = vrot.slane %v2273, 2
        %v2285 = vsel %vm1018, %v2282, %v2284
        %v2286 = vrot.slane %v2274, 2
        %v2287 = vsel %vm1018, %v2284, %v2286
        %v2288 = vrot.slane %v2275, 2
        %v2289 = vsel %vm1018, %v2286, %v2288
        %2290 = vrot.lane.b32.xlu0 %v2283, 127
        %v2291 = vpop.permute.xlu0 %2290
        %2292 = vrot.lane.b32.xlu0 %v2285, 127
        %v2293 = vpop.permute.xlu0 %2292
        %2294 = vrot.lane.b32.xlu0 %v2287, 127
        %v2295 = vpop.permute.xlu0 %2294
        %2296 = vrot.lane.b32.xlu0 %v2289, 127
        %v2297 = vpop.permute.xlu0 %2296
        %v2302 = vadd.f32 %v2162, %v2291
        %v2303 = vadd.f32 %v2163, %v2293
        %v2304 = vadd.f32 %v2164, %v2295
        %v2305 = vadd.f32 %v2165, %v2297
        %s2306 = sld [smem:[#allocation2 + $0x7c]]
        %v2307 = vstv %s2306
        %v2308 = vmul.f32 %v2307, %v330
        %v2309 = vmul.f32 %v2307, %v331
        %v2310 = vmul.f32 %v2307, %v332
        %v2311 = vmul.f32 %v2307, %v333
        %v2312 = vmul.f32 %v2307, %v334
        %v2318 = vrot.slane %v2308, 2
        %v2319 = vrot.slane %v2309, 2
        %v2320 = vsel %vm1018, %v2318, %v2319
        %v2321 = vrot.slane %v2310, 2
        %v2322 = vsel %vm1018, %v2319, %v2321
        %v2323 = vrot.slane %v2311, 2
        %v2324 = vsel %vm1018, %v2321, %v2323
        %v2325 = vrot.slane %v2312, 2
        %v2326 = vsel %vm1018, %v2323, %v2325
        %2327 = vrot.lane.b32.xlu0 %v2320, 127
        %v2328 = vpop.permute.xlu0 %2327
        %2329 = vrot.lane.b32.xlu0 %v2322, 127
        %v2330 = vpop.permute.xlu0 %2329
        %2331 = vrot.lane.b32.xlu0 %v2324, 127
        %v2332 = vpop.permute.xlu0 %2331
        %2333 = vrot.lane.b32.xlu0 %v2326, 127
        %v2334 = vpop.permute.xlu0 %2333
        %v2339 = vadd.f32 %v2191, %v2328
        %v2340 = vadd.f32 %v2192, %v2330
        %v2341 = vadd.f32 %v2193, %v2332
        %v2342 = vadd.f32 %v2194, %v2334
        %s2343 = sld [smem:[#allocation2 + $0x11]]
        %v2344 = vstv %s2343
        %v2345 = vmul.f32 %v2344, %v330
        %v2346 = vmul.f32 %v2344, %v331
        %v2347 = vmul.f32 %v2344, %v332
        %v2348 = vmul.f32 %v2344, %v333
        %v2349 = vmul.f32 %v2344, %v334
        %v2355 = vrot.slane %v2345, 2
        %v2356 = vrot.slane %v2346, 2
        %v2357 = vsel %vm1018, %v2355, %v2356
        %v2358 = vrot.slane %v2347, 2
        %v2359 = vsel %vm1018, %v2356, %v2358
        %v2360 = vrot.slane %v2348, 2
        %v2361 = vsel %vm1018, %v2358, %v2360
        %v2362 = vrot.slane %v2349, 2
        %v2363 = vsel %vm1018, %v2360, %v2362
        %2364 = vrot.lane.b32.xlu0 %v2357, 126
        %v2365 = vpop.permute.xlu0 %2364
        %2366 = vrot.lane.b32.xlu0 %v2359, 126
        %v2367 = vpop.permute.xlu0 %2366
        %2368 = vrot.lane.b32.xlu0 %v2361, 126
        %v2369 = vpop.permute.xlu0 %2368
        %2370 = vrot.lane.b32.xlu0 %v2363, 126
        %v2371 = vpop.permute.xlu0 %2370
        %v2376 = vadd.f32 %v2228, %v2365
        %v2377 = vadd.f32 %v2229, %v2367
        %v2378 = vadd.f32 %v2230, %v2369
        %v2379 = vadd.f32 %v2231, %v2371
        %s2380 = sld [smem:[#allocation2 + $0x35]]
        %v2381 = vstv %s2380
        %v2382 = vmul.f32 %v2381, %v330
        %v2383 = vmul.f32 %v2381, %v331
        %v2384 = vmul.f32 %v2381, %v332
        %v2385 = vmul.f32 %v2381, %v333
        %v2386 = vmul.f32 %v2381, %v334
        %v2392 = vrot.slane %v2382, 2
        %v2393 = vrot.slane %v2383, 2
        %v2394 = vsel %vm1018, %v2392, %v2393
        %v2395 = vrot.slane %v2384, 2
        %v2396 = vsel %vm1018, %v2393, %v2395
        %v2397 = vrot.slane %v2385, 2
        %v2398 = vsel %vm1018, %v2395, %v2397
        %v2399 = vrot.slane %v2386, 2
        %v2400 = vsel %vm1018, %v2397, %v2399
        %2401 = vrot.lane.b32.xlu0 %v2394, 126
        %v2402 = vpop.permute.xlu0 %2401
        %2403 = vrot.lane.b32.xlu0 %v2396, 126
        %v2404 = vpop.permute.xlu0 %2403
        %2405 = vrot.lane.b32.xlu0 %v2398, 126
        %v2406 = vpop.permute.xlu0 %2405
        %2407 = vrot.lane.b32.xlu0 %v2400, 126
        %v2408 = vpop.permute.xlu0 %2407
        %v2413 = vadd.f32 %v2265, %v2402
        %v2414 = vadd.f32 %v2266, %v2404
        %v2415 = vadd.f32 %v2267, %v2406
        %v2416 = vadd.f32 %v2268, %v2408
        %s2417 = sld [smem:[#allocation2 + $0x59]]
        %v2418 = vstv %s2417
        %v2419 = vmul.f32 %v2418, %v330
        %v2420 = vmul.f32 %v2418, %v331
        %v2421 = vmul.f32 %v2418, %v332
        %v2422 = vmul.f32 %v2418, %v333
        %v2423 = vmul.f32 %v2418, %v334
        %v2429 = vrot.slane %v2419, 2
        %v2430 = vrot.slane %v2420, 2
        %v2431 = vsel %vm1018, %v2429, %v2430
        %v2432 = vrot.slane %v2421, 2
        %v2433 = vsel %vm1018, %v2430, %v2432
        %v2434 = vrot.slane %v2422, 2
        %v2435 = vsel %vm1018, %v2432, %v2434
        %v2436 = vrot.slane %v2423, 2
        %v2437 = vsel %vm1018, %v2434, %v2436
        %2438 = vrot.lane.b32.xlu0 %v2431, 126
        %v2439 = vpop.permute.xlu0 %2438
        %2440 = vrot.lane.b32.xlu0 %v2433, 126
        %v2441 = vpop.permute.xlu0 %2440
        %2442 = vrot.lane.b32.xlu0 %v2435, 126
        %v2443 = vpop.permute.xlu0 %2442
        %2444 = vrot.lane.b32.xlu0 %v2437, 126
        %v2445 = vpop.permute.xlu0 %2444
        %v2450 = vadd.f32 %v2302, %v2439
        %v2451 = vadd.f32 %v2303, %v2441
        %v2452 = vadd.f32 %v2304, %v2443
        %v2453 = vadd.f32 %v2305, %v2445
        %s2454 = sld [smem:[#allocation2 + $0x7d]]
        %v2455 = vstv %s2454
        %v2456 = vmul.f32 %v2455, %v330
        %v2457 = vmul.f32 %v2455, %v331
        %v2458 = vmul.f32 %v2455, %v332
        %v2459 = vmul.f32 %v2455, %v333
        %v2460 = vmul.f32 %v2455, %v334
        %v2466 = vrot.slane %v2456, 2
        %v2467 = vrot.slane %v2457, 2
        %v2468 = vsel %vm1018, %v2466, %v2467
        %v2469 = vrot.slane %v2458, 2
        %v2470 = vsel %vm1018, %v2467, %v2469
        %v2471 = vrot.slane %v2459, 2
        %v2472 = vsel %vm1018, %v2469, %v2471
        %v2473 = vrot.slane %v2460, 2
        %v2474 = vsel %vm1018, %v2471, %v2473
        %2475 = vrot.lane.b32.xlu0 %v2468, 126
        %v2476 = vpop.permute.xlu0 %2475
        %2477 = vrot.lane.b32.xlu0 %v2470, 126
        %v2478 = vpop.permute.xlu0 %2477
        %2479 = vrot.lane.b32.xlu0 %v2472, 126
        %v2480 = vpop.permute.xlu0 %2479
        %2481 = vrot.lane.b32.xlu0 %v2474, 126
        %v2482 = vpop.permute.xlu0 %2481
        %v2487 = vadd.f32 %v2339, %v2476
        %v2488 = vadd.f32 %v2340, %v2478
        %v2489 = vadd.f32 %v2341, %v2480
        %v2490 = vadd.f32 %v2342, %v2482
        %s2491 = sld [smem:[#allocation2 + $0x12]]
        %v2492 = vstv %s2491
        %v2493 = vmul.f32 %v2492, %v335
        %v2494 = vmul.f32 %v2492, %v336
        %v2495 = vmul.f32 %v2492, %v337
        %v2496 = vmul.f32 %v2492, %v338
        %v2497 = vadd.f32 %v2376, %v2493
        %v2498 = vadd.f32 %v2377, %v2494
        %v2499 = vadd.f32 %v2378, %v2495
        %v2500 = vadd.f32 %v2379, %v2496
        %s2501 = sld [smem:[#allocation2 + $0x36]]
        %v2502 = vstv %s2501
        %v2503 = vmul.f32 %v2502, %v335
        %v2504 = vmul.f32 %v2502, %v336
        %v2505 = vmul.f32 %v2502, %v337
        %v2506 = vmul.f32 %v2502, %v338
        %v2507 = vadd.f32 %v2413, %v2503
        %v2508 = vadd.f32 %v2414, %v2504
        %v2509 = vadd.f32 %v2415, %v2505
        %v2510 = vadd.f32 %v2416, %v2506
        %s2511 = sld [smem:[#allocation2 + $0x5a]]
        %v2512 = vstv %s2511
        %v2513 = vmul.f32 %v2512, %v335
        %v2514 = vmul.f32 %v2512, %v336
        %v2515 = vmul.f32 %v2512, %v337
        %v2516 = vmul.f32 %v2512, %v338
        %v2517 = vadd.f32 %v2450, %v2513
        %v2518 = vadd.f32 %v2451, %v2514
        %v2519 = vadd.f32 %v2452, %v2515
        %v2520 = vadd.f32 %v2453, %v2516
        %s2521 = sld [smem:[#allocation2 + $0x7e]]
        %v2522 = vstv %s2521
        %v2523 = vmul.f32 %v2522, %v335
        %v2524 = vmul.f32 %v2522, %v336
        %v2525 = vmul.f32 %v2522, %v337
        %v2526 = vmul.f32 %v2522, %v338
        %v2527 = vadd.f32 %v2487, %v2523
        %v2528 = vadd.f32 %v2488, %v2524
        %v2529 = vadd.f32 %v2489, %v2525
        %v2530 = vadd.f32 %v2490, %v2526
        %s2531 = sld [smem:[#allocation2 + $0x13]]
        %v2532 = vstv %s2531
        %v2533 = vmul.f32 %v2532, %v335
        %v2534 = vmul.f32 %v2532, %v336
        %v2535 = vmul.f32 %v2532, %v337
        %v2536 = vmul.f32 %v2532, %v338
        %2541 = vrot.lane.b32.xlu0 %v2533, 127
        %v2542 = vpop.permute.xlu0 %2541
        %2543 = vrot.lane.b32.xlu0 %v2534, 127
        %v2544 = vpop.permute.xlu0 %2543
        %2545 = vrot.lane.b32.xlu0 %v2535, 127
        %v2546 = vpop.permute.xlu0 %2545
        %2547 = vrot.lane.b32.xlu0 %v2536, 127
        %v2548 = vpop.permute.xlu0 %2547
        %v2553 = vadd.f32 %v2497, %v2542
        %v2554 = vadd.f32 %v2498, %v2544
        %v2555 = vadd.f32 %v2499, %v2546
        %v2556 = vadd.f32 %v2500, %v2548
        %s2557 = sld [smem:[#allocation2 + $0x37]]
        %v2558 = vstv %s2557
        %v2559 = vmul.f32 %v2558, %v335
        %v2560 = vmul.f32 %v2558, %v336
        %v2561 = vmul.f32 %v2558, %v337
        %v2562 = vmul.f32 %v2558, %v338
        %2567 = vrot.lane.b32.xlu0 %v2559, 127
        %v2568 = vpop.permute.xlu0 %2567
        %2569 = vrot.lane.b32.xlu0 %v2560, 127
        %v2570 = vpop.permute.xlu0 %2569
        %2571 = vrot.lane.b32.xlu0 %v2561, 127
        %v2572 = vpop.permute.xlu0 %2571
        %2573 = vrot.lane.b32.xlu0 %v2562, 127
        %v2574 = vpop.permute.xlu0 %2573
        %v2579 = vadd.f32 %v2507, %v2568
        %v2580 = vadd.f32 %v2508, %v2570
        %v2581 = vadd.f32 %v2509, %v2572
        %v2582 = vadd.f32 %v2510, %v2574
        %s2583 = sld [smem:[#allocation2 + $0x5b]]
        %v2584 = vstv %s2583
        %v2585 = vmul.f32 %v2584, %v335
        %v2586 = vmul.f32 %v2584, %v336
        %v2587 = vmul.f32 %v2584, %v337
        %v2588 = vmul.f32 %v2584, %v338
        %2593 = vrot.lane.b32.xlu0 %v2585, 127
        %v2594 = vpop.permute.xlu0 %2593
        %2595 = vrot.lane.b32.xlu0 %v2586, 127
        %v2596 = vpop.permute.xlu0 %2595
        %2597 = vrot.lane.b32.xlu0 %v2587, 127
        %v2598 = vpop.permute.xlu0 %2597
        %2599 = vrot.lane.b32.xlu0 %v2588, 127
        %v2600 = vpop.permute.xlu0 %2599
        %v2605 = vadd.f32 %v2517, %v2594
        %v2606 = vadd.f32 %v2518, %v2596
        %v2607 = vadd.f32 %v2519, %v2598
        %v2608 = vadd.f32 %v2520, %v2600
        %s2609 = sld [smem:[#allocation2 + $0x7f]]
        %v2610 = vstv %s2609
        %v2611 = vmul.f32 %v2610, %v335
        %v2612 = vmul.f32 %v2610, %v336
        %v2613 = vmul.f32 %v2610, %v337
        %v2614 = vmul.f32 %v2610, %v338
        %2619 = vrot.lane.b32.xlu0 %v2611, 127
        %v2620 = vpop.permute.xlu0 %2619
        %2621 = vrot.lane.b32.xlu0 %v2612, 127
        %v2622 = vpop.permute.xlu0 %2621
        %2623 = vrot.lane.b32.xlu0 %v2613, 127
        %v2624 = vpop.permute.xlu0 %2623
        %2625 = vrot.lane.b32.xlu0 %v2614, 127
        %v2626 = vpop.permute.xlu0 %2625
        %v2631 = vadd.f32 %v2527, %v2620
        %v2632 = vadd.f32 %v2528, %v2622
        %v2633 = vadd.f32 %v2529, %v2624
        %v2634 = vadd.f32 %v2530, %v2626
        %s2635 = sld [smem:[#allocation2 + $0x14]]
        %v2636 = vstv %s2635
        %v2637 = vmul.f32 %v2636, %v335
        %v2638 = vmul.f32 %v2636, %v336
        %v2639 = vmul.f32 %v2636, %v337
        %v2640 = vmul.f32 %v2636, %v338
        %2645 = vrot.lane.b32.xlu0 %v2637, 126
        %v2646 = vpop.permute.xlu0 %2645
        %2647 = vrot.lane.b32.xlu0 %v2638, 126
        %v2648 = vpop.permute.xlu0 %2647
        %2649 = vrot.lane.b32.xlu0 %v2639, 126
        %v2650 = vpop.permute.xlu0 %2649
        %2651 = vrot.lane.b32.xlu0 %v2640, 126
        %v2652 = vpop.permute.xlu0 %2651
        %v2657 = vadd.f32 %v2553, %v2646
        %v2658 = vadd.f32 %v2554, %v2648
        %v2659 = vadd.f32 %v2555, %v2650
        %v2660 = vadd.f32 %v2556, %v2652
        %s2661 = sld [smem:[#allocation2 + $0x38]]
        %v2662 = vstv %s2661
        %v2663 = vmul.f32 %v2662, %v335
        %v2664 = vmul.f32 %v2662, %v336
        %v2665 = vmul.f32 %v2662, %v337
        %v2666 = vmul.f32 %v2662, %v338
        %2671 = vrot.lane.b32.xlu0 %v2663, 126
        %v2672 = vpop.permute.xlu0 %2671
        %2673 = vrot.lane.b32.xlu0 %v2664, 126
        %v2674 = vpop.permute.xlu0 %2673
        %2675 = vrot.lane.b32.xlu0 %v2665, 126
        %v2676 = vpop.permute.xlu0 %2675
        %2677 = vrot.lane.b32.xlu0 %v2666, 126
        %v2678 = vpop.permute.xlu0 %2677
        %v2683 = vadd.f32 %v2579, %v2672
        %v2684 = vadd.f32 %v2580, %v2674
        %v2685 = vadd.f32 %v2581, %v2676
        %v2686 = vadd.f32 %v2582, %v2678
        %s2687 = sld [smem:[#allocation2 + $0x5c]]
        %v2688 = vstv %s2687
        %v2689 = vmul.f32 %v2688, %v335
        %v2690 = vmul.f32 %v2688, %v336
        %v2691 = vmul.f32 %v2688, %v337
        %v2692 = vmul.f32 %v2688, %v338
        %2697 = vrot.lane.b32.xlu0 %v2689, 126
        %v2698 = vpop.permute.xlu0 %2697
        %2699 = vrot.lane.b32.xlu0 %v2690, 126
        %v2700 = vpop.permute.xlu0 %2699
        %2701 = vrot.lane.b32.xlu0 %v2691, 126
        %v2702 = vpop.permute.xlu0 %2701
        %2703 = vrot.lane.b32.xlu0 %v2692, 126
        %v2704 = vpop.permute.xlu0 %2703
        %v2709 = vadd.f32 %v2605, %v2698
        %v2710 = vadd.f32 %v2606, %v2700
        %v2711 = vadd.f32 %v2607, %v2702
        %v2712 = vadd.f32 %v2608, %v2704
        %s2713 = sld [smem:[#allocation2 + $0x80]]
        %v2714 = vstv %s2713
        %v2715 = vmul.f32 %v2714, %v335
        %v2716 = vmul.f32 %v2714, %v336
        %v2717 = vmul.f32 %v2714, %v337
        %v2718 = vmul.f32 %v2714, %v338
        %2723 = vrot.lane.b32.xlu0 %v2715, 126
        %v2724 = vpop.permute.xlu0 %2723
        %2725 = vrot.lane.b32.xlu0 %v2716, 126
        %v2726 = vpop.permute.xlu0 %2725
        %2727 = vrot.lane.b32.xlu0 %v2717, 126
        %v2728 = vpop.permute.xlu0 %2727
        %2729 = vrot.lane.b32.xlu0 %v2718, 126
        %v2730 = vpop.permute.xlu0 %2729
        %v2735 = vadd.f32 %v2631, %v2724
        %v2736 = vadd.f32 %v2632, %v2726
        %v2737 = vadd.f32 %v2633, %v2728
        %v2738 = vadd.f32 %v2634, %v2730
        %s2739 = sld [smem:[#allocation2 + $0x15]]
        %v2740 = vstv %s2739
        %v2741 = vmul.f32 %v2740, %v335
        %v2742 = vmul.f32 %v2740, %v336
        %v2743 = vmul.f32 %v2740, %v337
        %v2744 = vmul.f32 %v2740, %v338
        %v2745 = vmul.f32 %v2740, %v339
        %v2751 = vrot.slane %v2741, 1
        %v2752 = vrot.slane %v2742, 1
        %v2753 = vsel %vm605, %v2751, %v2752
        %v2754 = vrot.slane %v2743, 1
        %v2755 = vsel %vm605, %v2752, %v2754
        %v2756 = vrot.slane %v2744, 1
        %v2757 = vsel %vm605, %v2754, %v2756
        %v2758 = vrot.slane %v2745, 1
        %v2759 = vsel %vm605, %v2756, %v2758
        %v2764 = vadd.f32 %v2657, %v2753
        %v2765 = vadd.f32 %v2658, %v2755
        %v2766 = vadd.f32 %v2659, %v2757
        %v2767 = vadd.f32 %v2660, %v2759
        %s2768 = sld [smem:[#allocation2 + $0x39]]
        %v2769 = vstv %s2768
        %v2770 = vmul.f32 %v2769, %v335
        %v2771 = vmul.f32 %v2769, %v336
        %v2772 = vmul.f32 %v2769, %v337
        %v2773 = vmul.f32 %v2769, %v338
        %v2774 = vmul.f32 %v2769, %v339
        %v2780 = vrot.slane %v2770, 1
        %v2781 = vrot.slane %v2771, 1
        %v2782 = vsel %vm605, %v2780, %v2781
        %v2783 = vrot.slane %v2772, 1
        %v2784 = vsel %vm605, %v2781, %v2783
        %v2785 = vrot.slane %v2773, 1
        %v2786 = vsel %vm605, %v2783, %v2785
        %v2787 = vrot.slane %v2774, 1
        %v2788 = vsel %vm605, %v2785, %v2787
        %v2793 = vadd.f32 %v2683, %v2782
        %v2794 = vadd.f32 %v2684, %v2784
        %v2795 = vadd.f32 %v2685, %v2786
        %v2796 = vadd.f32 %v2686, %v2788
        %s2797 = sld [smem:[#allocation2 + $0x5d]]
        %v2798 = vstv %s2797
        %v2799 = vmul.f32 %v2798, %v335
        %v2800 = vmul.f32 %v2798, %v336
        %v2801 = vmul.f32 %v2798, %v337
        %v2802 = vmul.f32 %v2798, %v338
        %v2803 = vmul.f32 %v2798, %v339
        %v2809 = vrot.slane %v2799, 1
        %v2810 = vrot.slane %v2800, 1
        %v2811 = vsel %vm605, %v2809, %v2810
        %v2812 = vrot.slane %v2801, 1
        %v2813 = vsel %vm605, %v2810, %v2812
        %v2814 = vrot.slane %v2802, 1
        %v2815 = vsel %vm605, %v2812, %v2814
        %v2816 = vrot.slane %v2803, 1
        %v2817 = vsel %vm605, %v2814, %v2816
        %v2822 = vadd.f32 %v2709, %v2811
        %v2823 = vadd.f32 %v2710, %v2813
        %v2824 = vadd.f32 %v2711, %v2815
        %v2825 = vadd.f32 %v2712, %v2817
        %s2826 = sld [smem:[#allocation2 + $0x81]]
        %v2827 = vstv %s2826
        %v2828 = vmul.f32 %v2827, %v335
        %v2829 = vmul.f32 %v2827, %v336
        %v2830 = vmul.f32 %v2827, %v337
        %v2831 = vmul.f32 %v2827, %v338
        %v2832 = vmul.f32 %v2827, %v339
        %v2838 = vrot.slane %v2828, 1
        %v2839 = vrot.slane %v2829, 1
        %v2840 = vsel %vm605, %v2838, %v2839
        %v2841 = vrot.slane %v2830, 1
        %v2842 = vsel %vm605, %v2839, %v2841
        %v2843 = vrot.slane %v2831, 1
        %v2844 = vsel %vm605, %v2841, %v2843
        %v2845 = vrot.slane %v2832, 1
        %v2846 = vsel %vm605, %v2843, %v2845
        %v2851 = vadd.f32 %v2735, %v2840
        %v2852 = vadd.f32 %v2736, %v2842
        %v2853 = vadd.f32 %v2737, %v2844
        %v2854 = vadd.f32 %v2738, %v2846
        %s2855 = sld [smem:[#allocation2 + $0x16]]
        %v2856 = vstv %s2855
        %v2857 = vmul.f32 %v2856, %v335
        %v2858 = vmul.f32 %v2856, %v336
        %v2859 = vmul.f32 %v2856, %v337
        %v2860 = vmul.f32 %v2856, %v338
        %v2861 = vmul.f32 %v2856, %v339
        %v2867 = vrot.slane %v2857, 1
        %v2868 = vrot.slane %v2858, 1
        %v2869 = vsel %vm605, %v2867, %v2868
        %v2870 = vrot.slane %v2859, 1
        %v2871 = vsel %vm605, %v2868, %v2870
        %v2872 = vrot.slane %v2860, 1
        %v2873 = vsel %vm605, %v2870, %v2872
        %v2874 = vrot.slane %v2861, 1
        %v2875 = vsel %vm605, %v2872, %v2874
        %2876 = vrot.lane.b32.xlu0 %v2869, 127
        %v2877 = vpop.permute.xlu0 %2876
        %2878 = vrot.lane.b32.xlu0 %v2871, 127
        %v2879 = vpop.permute.xlu0 %2878
        %2880 = vrot.lane.b32.xlu0 %v2873, 127
        %v2881 = vpop.permute.xlu0 %2880
        %2882 = vrot.lane.b32.xlu0 %v2875, 127
        %v2883 = vpop.permute.xlu0 %2882
        %v2888 = vadd.f32 %v2764, %v2877
        %v2889 = vadd.f32 %v2765, %v2879
        %v2890 = vadd.f32 %v2766, %v2881
        %v2891 = vadd.f32 %v2767, %v2883
        %s2892 = sld [smem:[#allocation2 + $0x3a]]
        %v2893 = vstv %s2892
        %v2894 = vmul.f32 %v2893, %v335
        %v2895 = vmul.f32 %v2893, %v336
        %v2896 = vmul.f32 %v2893, %v337
        %v2897 = vmul.f32 %v2893, %v338
        %v2898 = vmul.f32 %v2893, %v339
        %v2904 = vrot.slane %v2894, 1
        %v2905 = vrot.slane %v2895, 1
        %v2906 = vsel %vm605, %v2904, %v2905
        %v2907 = vrot.slane %v2896, 1
        %v2908 = vsel %vm605, %v2905, %v2907
        %v2909 = vrot.slane %v2897, 1
        %v2910 = vsel %vm605, %v2907, %v2909
        %v2911 = vrot.slane %v2898, 1
        %v2912 = vsel %vm605, %v2909, %v2911
        %2913 = vrot.lane.b32.xlu0 %v2906, 127
        %v2914 = vpop.permute.xlu0 %2913
        %2915 = vrot.lane.b32.xlu0 %v2908, 127
        %v2916 = vpop.permute.xlu0 %2915
        %2917 = vrot.lane.b32.xlu0 %v2910, 127
        %v2918 = vpop.permute.xlu0 %2917
        %2919 = vrot.lane.b32.xlu0 %v2912, 127
        %v2920 = vpop.permute.xlu0 %2919
        %v2925 = vadd.f32 %v2793, %v2914
        %v2926 = vadd.f32 %v2794, %v2916
        %v2927 = vadd.f32 %v2795, %v2918
        %v2928 = vadd.f32 %v2796, %v2920
        %s2929 = sld [smem:[#allocation2 + $0x5e]]
        %v2930 = vstv %s2929
        %v2931 = vmul.f32 %v2930, %v335
        %v2932 = vmul.f32 %v2930, %v336
        %v2933 = vmul.f32 %v2930, %v337
        %v2934 = vmul.f32 %v2930, %v338
        %v2935 = vmul.f32 %v2930, %v339
        %v2941 = vrot.slane %v2931, 1
        %v2942 = vrot.slane %v2932, 1
        %v2943 = vsel %vm605, %v2941, %v2942
        %v2944 = vrot.slane %v2933, 1
        %v2945 = vsel %vm605, %v2942, %v2944
        %v2946 = vrot.slane %v2934, 1
        %v2947 = vsel %vm605, %v2944, %v2946
        %v2948 = vrot.slane %v2935, 1
        %v2949 = vsel %vm605, %v2946, %v2948
        %2950 = vrot.lane.b32.xlu0 %v2943, 127
        %v2951 = vpop.permute.xlu0 %2950
        %2952 = vrot.lane.b32.xlu0 %v2945, 127
        %v2953 = vpop.permute.xlu0 %2952
        %2954 = vrot.lane.b32.xlu0 %v2947, 127
        %v2955 = vpop.permute.xlu0 %2954
        %2956 = vrot.lane.b32.xlu0 %v2949, 127
        %v2957 = vpop.permute.xlu0 %2956
        %v2962 = vadd.f32 %v2822, %v2951
        %v2963 = vadd.f32 %v2823, %v2953
        %v2964 = vadd.f32 %v2824, %v2955
        %v2965 = vadd.f32 %v2825, %v2957
        %s2966 = sld [smem:[#allocation2 + $0x82]]
        %v2967 = vstv %s2966
        %v2968 = vmul.f32 %v2967, %v335
        %v2969 = vmul.f32 %v2967, %v336
        %v2970 = vmul.f32 %v2967, %v337
        %v2971 = vmul.f32 %v2967, %v338
        %v2972 = vmul.f32 %v2967, %v339
        %v2978 = vrot.slane %v2968, 1
        %v2979 = vrot.slane %v2969, 1
        %v2980 = vsel %vm605, %v2978, %v2979
        %v2981 = vrot.slane %v2970, 1
        %v2982 = vsel %vm605, %v2979, %v2981
        %v2983 = vrot.slane %v2971, 1
        %v2984 = vsel %vm605, %v2981, %v2983
        %v2985 = vrot.slane %v2972, 1
        %v2986 = vsel %vm605, %v2983, %v2985
        %2987 = vrot.lane.b32.xlu0 %v2980, 127
        %v2988 = vpop.permute.xlu0 %2987
        %2989 = vrot.lane.b32.xlu0 %v2982, 127
        %v2990 = vpop.permute.xlu0 %2989
        %2991 = vrot.lane.b32.xlu0 %v2984, 127
        %v2992 = vpop.permute.xlu0 %2991
        %2993 = vrot.lane.b32.xlu0 %v2986, 127
        %v2994 = vpop.permute.xlu0 %2993
        %v2999 = vadd.f32 %v2851, %v2988
        %v3000 = vadd.f32 %v2852, %v2990
        %v3001 = vadd.f32 %v2853, %v2992
        %v3002 = vadd.f32 %v2854, %v2994
        %s3003 = sld [smem:[#allocation2 + $0x17]]
        %v3004 = vstv %s3003
        %v3005 = vmul.f32 %v3004, %v335
        %v3006 = vmul.f32 %v3004, %v336
        %v3007 = vmul.f32 %v3004, %v337
        %v3008 = vmul.f32 %v3004, %v338
        %v3009 = vmul.f32 %v3004, %v339
        %v3015 = vrot.slane %v3005, 1
        %v3016 = vrot.slane %v3006, 1
        %v3017 = vsel %vm605, %v3015, %v3016
        %v3018 = vrot.slane %v3007, 1
        %v3019 = vsel %vm605, %v3016, %v3018
        %v3020 = vrot.slane %v3008, 1
        %v3021 = vsel %vm605, %v3018, %v3020
        %v3022 = vrot.slane %v3009, 1
        %v3023 = vsel %vm605, %v3020, %v3022
        %3024 = vrot.lane.b32.xlu0 %v3017, 126
        %v3025 = vpop.permute.xlu0 %3024
        %3026 = vrot.lane.b32.xlu0 %v3019, 126
        %v3027 = vpop.permute.xlu0 %3026
        %3028 = vrot.lane.b32.xlu0 %v3021, 126
        %v3029 = vpop.permute.xlu0 %3028
        %3030 = vrot.lane.b32.xlu0 %v3023, 126
        %v3031 = vpop.permute.xlu0 %3030
        %v3036 = vadd.f32 %v2888, %v3025
        %v3037 = vadd.f32 %v2889, %v3027
        %v3038 = vadd.f32 %v2890, %v3029
        %v3039 = vadd.f32 %v2891, %v3031
        %s3040 = sld [smem:[#allocation2 + $0x3b]]
        %v3041 = vstv %s3040
        %v3042 = vmul.f32 %v3041, %v335
        %v3043 = vmul.f32 %v3041, %v336
        %v3044 = vmul.f32 %v3041, %v337
        %v3045 = vmul.f32 %v3041, %v338
        %v3046 = vmul.f32 %v3041, %v339
        %v3052 = vrot.slane %v3042, 1
        %v3053 = vrot.slane %v3043, 1
        %v3054 = vsel %vm605, %v3052, %v3053
        %v3055 = vrot.slane %v3044, 1
        %v3056 = vsel %vm605, %v3053, %v3055
        %v3057 = vrot.slane %v3045, 1
        %v3058 = vsel %vm605, %v3055, %v3057
        %v3059 = vrot.slane %v3046, 1
        %v3060 = vsel %vm605, %v3057, %v3059
        %3061 = vrot.lane.b32.xlu0 %v3054, 126
        %v3062 = vpop.permute.xlu0 %3061
        %3063 = vrot.lane.b32.xlu0 %v3056, 126
        %v3064 = vpop.permute.xlu0 %3063
        %3065 = vrot.lane.b32.xlu0 %v3058, 126
        %v3066 = vpop.permute.xlu0 %3065
        %3067 = vrot.lane.b32.xlu0 %v3060, 126
        %v3068 = vpop.permute.xlu0 %3067
        %v3073 = vadd.f32 %v2925, %v3062
        %v3074 = vadd.f32 %v2926, %v3064
        %v3075 = vadd.f32 %v2927, %v3066
        %v3076 = vadd.f32 %v2928, %v3068
        %s3077 = sld [smem:[#allocation2 + $0x5f]]
        %v3078 = vstv %s3077
        %v3079 = vmul.f32 %v3078, %v335
        %v3080 = vmul.f32 %v3078, %v336
        %v3081 = vmul.f32 %v3078, %v337
        %v3082 = vmul.f32 %v3078, %v338
        %v3083 = vmul.f32 %v3078, %v339
        %v3089 = vrot.slane %v3079, 1
        %v3090 = vrot.slane %v3080, 1
        %v3091 = vsel %vm605, %v3089, %v3090
        %v3092 = vrot.slane %v3081, 1
        %v3093 = vsel %vm605, %v3090, %v3092
        %v3094 = vrot.slane %v3082, 1
        %v3095 = vsel %vm605, %v3092, %v3094
        %v3096 = vrot.slane %v3083, 1
        %v3097 = vsel %vm605, %v3094, %v3096
        %3098 = vrot.lane.b32.xlu0 %v3091, 126
        %v3099 = vpop.permute.xlu0 %3098
        %3100 = vrot.lane.b32.xlu0 %v3093, 126
        %v3101 = vpop.permute.xlu0 %3100
        %3102 = vrot.lane.b32.xlu0 %v3095, 126
        %v3103 = vpop.permute.xlu0 %3102
        %3104 = vrot.lane.b32.xlu0 %v3097, 126
        %v3105 = vpop.permute.xlu0 %3104
        %v3110 = vadd.f32 %v2962, %v3099
        %v3111 = vadd.f32 %v2963, %v3101
        %v3112 = vadd.f32 %v2964, %v3103
        %v3113 = vadd.f32 %v2965, %v3105
        %s3114 = sld [smem:[#allocation2 + $0x83]]
        %v3115 = vstv %s3114
        %v3116 = vmul.f32 %v3115, %v335
        %v3117 = vmul.f32 %v3115, %v336
        %v3118 = vmul.f32 %v3115, %v337
        %v3119 = vmul.f32 %v3115, %v338
        %v3120 = vmul.f32 %v3115, %v339
        %v3126 = vrot.slane %v3116, 1
        %v3127 = vrot.slane %v3117, 1
        %v3128 = vsel %vm605, %v3126, %v3127
        %v3129 = vrot.slane %v3118, 1
        %v3130 = vsel %vm605, %v3127, %v3129
        %v3131 = vrot.slane %v3119, 1
        %v3132 = vsel %vm605, %v3129, %v3131
        %v3133 = vrot.slane %v3120, 1
        %v3134 = vsel %vm605, %v3131, %v3133
        %3135 = vrot.lane.b32.xlu0 %v3128, 126
        %v3136 = vpop.permute.xlu0 %3135
        %3137 = vrot.lane.b32.xlu0 %v3130, 126
        %v3138 = vpop.permute.xlu0 %3137
        %3139 = vrot.lane.b32.xlu0 %v3132, 126
        %v3140 = vpop.permute.xlu0 %3139
        %3141 = vrot.lane.b32.xlu0 %v3134, 126
        %v3142 = vpop.permute.xlu0 %3141
        %v3147 = vadd.f32 %v2999, %v3136
        %v3148 = vadd.f32 %v3000, %v3138
        %v3149 = vadd.f32 %v3001, %v3140
        %v3150 = vadd.f32 %v3002, %v3142
        %s3151 = sld [smem:[#allocation2 + $0x18]]
        %v3152 = vstv %s3151
        %v3153 = vmul.f32 %v3152, %v335
        %v3154 = vmul.f32 %v3152, %v336
        %v3155 = vmul.f32 %v3152, %v337
        %v3156 = vmul.f32 %v3152, %v338
        %v3157 = vmul.f32 %v3152, %v339
        %v3163 = vrot.slane %v3153, 2
        %v3164 = vrot.slane %v3154, 2
        %v3165 = vsel %vm1018, %v3163, %v3164
        %v3166 = vrot.slane %v3155, 2
        %v3167 = vsel %vm1018, %v3164, %v3166
        %v3168 = vrot.slane %v3156, 2
        %v3169 = vsel %vm1018, %v3166, %v3168
        %v3170 = vrot.slane %v3157, 2
        %v3171 = vsel %vm1018, %v3168, %v3170
        %v3176 = vadd.f32 %v3036, %v3165
        %v3177 = vadd.f32 %v3037, %v3167
        %v3178 = vadd.f32 %v3038, %v3169
        %v3179 = vadd.f32 %v3039, %v3171
        %s3180 = sld [smem:[#allocation2 + $0x3c]]
        %v3181 = vstv %s3180
        %v3182 = vmul.f32 %v3181, %v335
        %v3183 = vmul.f32 %v3181, %v336
        %v3184 = vmul.f32 %v3181, %v337
        %v3185 = vmul.f32 %v3181, %v338
        %v3186 = vmul.f32 %v3181, %v339
        %v3192 = vrot.slane %v3182, 2
        %v3193 = vrot.slane %v3183, 2
        %v3194 = vsel %vm1018, %v3192, %v3193
        %v3195 = vrot.slane %v3184, 2
        %v3196 = vsel %vm1018, %v3193, %v3195
        %v3197 = vrot.slane %v3185, 2
        %v3198 = vsel %vm1018, %v3195, %v3197
        %v3199 = vrot.slane %v3186, 2
        %v3200 = vsel %vm1018, %v3197, %v3199
        %v3205 = vadd.f32 %v3073, %v3194
        %v3206 = vadd.f32 %v3074, %v3196
        %v3207 = vadd.f32 %v3075, %v3198
        %v3208 = vadd.f32 %v3076, %v3200
        %s3209 = sld [smem:[#allocation2 + $0x60]]
        %v3210 = vstv %s3209
        %v3211 = vmul.f32 %v3210, %v335
        %v3212 = vmul.f32 %v3210, %v336
        %v3213 = vmul.f32 %v3210, %v337
        %v3214 = vmul.f32 %v3210, %v338
        %v3215 = vmul.f32 %v3210, %v339
        %v3221 = vrot.slane %v3211, 2
        %v3222 = vrot.slane %v3212, 2
        %v3223 = vsel %vm1018, %v3221, %v3222
        %v3224 = vrot.slane %v3213, 2
        %v3225 = vsel %vm1018, %v3222, %v3224
        %v3226 = vrot.slane %v3214, 2
        %v3227 = vsel %vm1018, %v3224, %v3226
        %v3228 = vrot.slane %v3215, 2
        %v3229 = vsel %vm1018, %v3226, %v3228
        %v3234 = vadd.f32 %v3110, %v3223
        %v3235 = vadd.f32 %v3111, %v3225
        %v3236 = vadd.f32 %v3112, %v3227
        %v3237 = vadd.f32 %v3113, %v3229
        %s3238 = sld [smem:[#allocation2 + $0x84]]
        %v3239 = vstv %s3238
        %v3240 = vmul.f32 %v3239, %v335
        %v3241 = vmul.f32 %v3239, %v336
        %v3242 = vmul.f32 %v3239, %v337
        %v3243 = vmul.f32 %v3239, %v338
        %v3244 = vmul.f32 %v3239, %v339
        %v3250 = vrot.slane %v3240, 2
        %v3251 = vrot.slane %v3241, 2
        %v3252 = vsel %vm1018, %v3250, %v3251
        %v3253 = vrot.slane %v3242, 2
        %v3254 = vsel %vm1018, %v3251, %v3253
        %v3255 = vrot.slane %v3243, 2
        %v3256 = vsel %vm1018, %v3253, %v3255
        %v3257 = vrot.slane %v3244, 2
        %v3258 = vsel %vm1018, %v3255, %v3257
        %v3263 = vadd.f32 %v3147, %v3252
        %v3264 = vadd.f32 %v3148, %v3254
        %v3265 = vadd.f32 %v3149, %v3256
        %v3266 = vadd.f32 %v3150, %v3258
        %s3267 = sld [smem:[#allocation2 + $0x19]]
        %v3268 = vstv %s3267
        %v3269 = vmul.f32 %v3268, %v335
        %v3270 = vmul.f32 %v3268, %v336
        %v3271 = vmul.f32 %v3268, %v337
        %v3272 = vmul.f32 %v3268, %v338
        %v3273 = vmul.f32 %v3268, %v339
        %v3279 = vrot.slane %v3269, 2
        %v3280 = vrot.slane %v3270, 2
        %v3281 = vsel %vm1018, %v3279, %v3280
        %v3282 = vrot.slane %v3271, 2
        %v3283 = vsel %vm1018, %v3280, %v3282
        %v3284 = vrot.slane %v3272, 2
        %v3285 = vsel %vm1018, %v3282, %v3284
        %v3286 = vrot.slane %v3273, 2
        %v3287 = vsel %vm1018, %v3284, %v3286
        %3288 = vrot.lane.b32.xlu0 %v3281, 127
        %v3289 = vpop.permute.xlu0 %3288
        %3290 = vrot.lane.b32.xlu0 %v3283, 127
        %v3291 = vpop.permute.xlu0 %3290
        %3292 = vrot.lane.b32.xlu0 %v3285, 127
        %v3293 = vpop.permute.xlu0 %3292
        %3294 = vrot.lane.b32.xlu0 %v3287, 127
        %v3295 = vpop.permute.xlu0 %3294
        %v3300 = vadd.f32 %v3176, %v3289
        %v3301 = vadd.f32 %v3177, %v3291
        %v3302 = vadd.f32 %v3178, %v3293
        %v3303 = vadd.f32 %v3179, %v3295
        %s3304 = sld [smem:[#allocation2 + $0x3d]]
        %v3305 = vstv %s3304
        %v3306 = vmul.f32 %v3305, %v335
        %v3307 = vmul.f32 %v3305, %v336
        %v3308 = vmul.f32 %v3305, %v337
        %v3309 = vmul.f32 %v3305, %v338
        %v3310 = vmul.f32 %v3305, %v339
        %v3316 = vrot.slane %v3306, 2
        %v3317 = vrot.slane %v3307, 2
        %v3318 = vsel %vm1018, %v3316, %v3317
        %v3319 = vrot.slane %v3308, 2
        %v3320 = vsel %vm1018, %v3317, %v3319
        %v3321 = vrot.slane %v3309, 2
        %v3322 = vsel %vm1018, %v3319, %v3321
        %v3323 = vrot.slane %v3310, 2
        %v3324 = vsel %vm1018, %v3321, %v3323
        %3325 = vrot.lane.b32.xlu0 %v3318, 127
        %v3326 = vpop.permute.xlu0 %3325
        %3327 = vrot.lane.b32.xlu0 %v3320, 127
        %v3328 = vpop.permute.xlu0 %3327
        %3329 = vrot.lane.b32.xlu0 %v3322, 127
        %v3330 = vpop.permute.xlu0 %3329
        %3331 = vrot.lane.b32.xlu0 %v3324, 127
        %v3332 = vpop.permute.xlu0 %3331
        %v3337 = vadd.f32 %v3205, %v3326
        %v3338 = vadd.f32 %v3206, %v3328
        %v3339 = vadd.f32 %v3207, %v3330
        %v3340 = vadd.f32 %v3208, %v3332
        %s3341 = sld [smem:[#allocation2 + $0x61]]
        %v3342 = vstv %s3341
        %v3343 = vmul.f32 %v3342, %v335
        %v3344 = vmul.f32 %v3342, %v336
        %v3345 = vmul.f32 %v3342, %v337
        %v3346 = vmul.f32 %v3342, %v338
        %v3347 = vmul.f32 %v3342, %v339
        %v3353 = vrot.slane %v3343, 2
        %v3354 = vrot.slane %v3344, 2
        %v3355 = vsel %vm1018, %v3353, %v3354
        %v3356 = vrot.slane %v3345, 2
        %v3357 = vsel %vm1018, %v3354, %v3356
        %v3358 = vrot.slane %v3346, 2
        %v3359 = vsel %vm1018, %v3356, %v3358
        %v3360 = vrot.slane %v3347, 2
        %v3361 = vsel %vm1018, %v3358, %v3360
        %3362 = vrot.lane.b32.xlu0 %v3355, 127
        %v3363 = vpop.permute.xlu0 %3362
        %3364 = vrot.lane.b32.xlu0 %v3357, 127
        %v3365 = vpop.permute.xlu0 %3364
        %3366 = vrot.lane.b32.xlu0 %v3359, 127
        %v3367 = vpop.permute.xlu0 %3366
        %3368 = vrot.lane.b32.xlu0 %v3361, 127
        %v3369 = vpop.permute.xlu0 %3368
        %v3374 = vadd.f32 %v3234, %v3363
        %v3375 = vadd.f32 %v3235, %v3365
        %v3376 = vadd.f32 %v3236, %v3367
        %v3377 = vadd.f32 %v3237, %v3369
        %s3378 = sld [smem:[#allocation2 + $0x85]]
        %v3379 = vstv %s3378
        %v3380 = vmul.f32 %v3379, %v335
        %v3381 = vmul.f32 %v3379, %v336
        %v3382 = vmul.f32 %v3379, %v337
        %v3383 = vmul.f32 %v3379, %v338
        %v3384 = vmul.f32 %v3379, %v339
        %v3390 = vrot.slane %v3380, 2
        %v3391 = vrot.slane %v3381, 2
        %v3392 = vsel %vm1018, %v3390, %v3391
        %v3393 = vrot.slane %v3382, 2
        %v3394 = vsel %vm1018, %v3391, %v3393
        %v3395 = vrot.slane %v3383, 2
        %v3396 = vsel %vm1018, %v3393, %v3395
        %v3397 = vrot.slane %v3384, 2
        %v3398 = vsel %vm1018, %v3395, %v3397
        %3399 = vrot.lane.b32.xlu0 %v3392, 127
        %v3400 = vpop.permute.xlu0 %3399
        %3401 = vrot.lane.b32.xlu0 %v3394, 127
        %v3402 = vpop.permute.xlu0 %3401
        %3403 = vrot.lane.b32.xlu0 %v3396, 127
        %v3404 = vpop.permute.xlu0 %3403
        %3405 = vrot.lane.b32.xlu0 %v3398, 127
        %v3406 = vpop.permute.xlu0 %3405
        %v3411 = vadd.f32 %v3263, %v3400
        %v3412 = vadd.f32 %v3264, %v3402
        %v3413 = vadd.f32 %v3265, %v3404
        %v3414 = vadd.f32 %v3266, %v3406
        %s3415 = sld [smem:[#allocation2 + $0x1a]]
        %v3416 = vstv %s3415
        %v3417 = vmul.f32 %v3416, %v335
        %v3418 = vmul.f32 %v3416, %v336
        %v3419 = vmul.f32 %v3416, %v337
        %v3420 = vmul.f32 %v3416, %v338
        %v3421 = vmul.f32 %v3416, %v339
        %v3427 = vrot.slane %v3417, 2
        %v3428 = vrot.slane %v3418, 2
        %v3429 = vsel %vm1018, %v3427, %v3428
        %v3430 = vrot.slane %v3419, 2
        %v3431 = vsel %vm1018, %v3428, %v3430
        %v3432 = vrot.slane %v3420, 2
        %v3433 = vsel %vm1018, %v3430, %v3432
        %v3434 = vrot.slane %v3421, 2
        %v3435 = vsel %vm1018, %v3432, %v3434
        %3436 = vrot.lane.b32.xlu0 %v3429, 126
        %v3437 = vpop.permute.xlu0 %3436
        %3438 = vrot.lane.b32.xlu0 %v3431, 126
        %v3439 = vpop.permute.xlu0 %3438
        %3440 = vrot.lane.b32.xlu0 %v3433, 126
        %v3441 = vpop.permute.xlu0 %3440
        %3442 = vrot.lane.b32.xlu0 %v3435, 126
        %v3443 = vpop.permute.xlu0 %3442
        %v3448 = vadd.f32 %v3300, %v3437
        %v3449 = vadd.f32 %v3301, %v3439
        %v3450 = vadd.f32 %v3302, %v3441
        %v3451 = vadd.f32 %v3303, %v3443
        %s3452 = sld [smem:[#allocation2 + $0x3e]]
        %v3453 = vstv %s3452
        %v3454 = vmul.f32 %v3453, %v335
        %v3455 = vmul.f32 %v3453, %v336
        %v3456 = vmul.f32 %v3453, %v337
        %v3457 = vmul.f32 %v3453, %v338
        %v3458 = vmul.f32 %v3453, %v339
        %v3464 = vrot.slane %v3454, 2
        %v3465 = vrot.slane %v3455, 2
        %v3466 = vsel %vm1018, %v3464, %v3465
        %v3467 = vrot.slane %v3456, 2
        %v3468 = vsel %vm1018, %v3465, %v3467
        %v3469 = vrot.slane %v3457, 2
        %v3470 = vsel %vm1018, %v3467, %v3469
        %v3471 = vrot.slane %v3458, 2
        %v3472 = vsel %vm1018, %v3469, %v3471
        %3473 = vrot.lane.b32.xlu0 %v3466, 126
        %v3474 = vpop.permute.xlu0 %3473
        %3475 = vrot.lane.b32.xlu0 %v3468, 126
        %v3476 = vpop.permute.xlu0 %3475
        %3477 = vrot.lane.b32.xlu0 %v3470, 126
        %v3478 = vpop.permute.xlu0 %3477
        %3479 = vrot.lane.b32.xlu0 %v3472, 126
        %v3480 = vpop.permute.xlu0 %3479
        %v3485 = vadd.f32 %v3337, %v3474
        %v3486 = vadd.f32 %v3338, %v3476
        %v3487 = vadd.f32 %v3339, %v3478
        %v3488 = vadd.f32 %v3340, %v3480
        %s3489 = sld [smem:[#allocation2 + $0x62]]
        %v3490 = vstv %s3489
        %v3491 = vmul.f32 %v3490, %v335
        %v3492 = vmul.f32 %v3490, %v336
        %v3493 = vmul.f32 %v3490, %v337
        %v3494 = vmul.f32 %v3490, %v338
        %v3495 = vmul.f32 %v3490, %v339
        %v3501 = vrot.slane %v3491, 2
        %v3502 = vrot.slane %v3492, 2
        %v3503 = vsel %vm1018, %v3501, %v3502
        %v3504 = vrot.slane %v3493, 2
        %v3505 = vsel %vm1018, %v3502, %v3504
        %v3506 = vrot.slane %v3494, 2
        %v3507 = vsel %vm1018, %v3504, %v3506
        %v3508 = vrot.slane %v3495, 2
        %v3509 = vsel %vm1018, %v3506, %v3508
        %3510 = vrot.lane.b32.xlu0 %v3503, 126
        %v3511 = vpop.permute.xlu0 %3510
        %3512 = vrot.lane.b32.xlu0 %v3505, 126
        %v3513 = vpop.permute.xlu0 %3512
        %3514 = vrot.lane.b32.xlu0 %v3507, 126
        %v3515 = vpop.permute.xlu0 %3514
        %3516 = vrot.lane.b32.xlu0 %v3509, 126
        %v3517 = vpop.permute.xlu0 %3516
        %v3522 = vadd.f32 %v3374, %v3511
        %v3523 = vadd.f32 %v3375, %v3513
        %v3524 = vadd.f32 %v3376, %v3515
        %v3525 = vadd.f32 %v3377, %v3517
        %s3526 = sld [smem:[#allocation2 + $0x86]]
        %v3527 = vstv %s3526
        %v3528 = vmul.f32 %v3527, %v335
        %v3529 = vmul.f32 %v3527, %v336
        %v3530 = vmul.f32 %v3527, %v337
        %v3531 = vmul.f32 %v3527, %v338
        %v3532 = vmul.f32 %v3527, %v339
        %v3538 = vrot.slane %v3528, 2
        %v3539 = vrot.slane %v3529, 2
        %v3540 = vsel %vm1018, %v3538, %v3539
        %v3541 = vrot.slane %v3530, 2
        %v3542 = vsel %vm1018, %v3539, %v3541
        %v3543 = vrot.slane %v3531, 2
        %v3544 = vsel %vm1018, %v3541, %v3543
        %v3545 = vrot.slane %v3532, 2
        %v3546 = vsel %vm1018, %v3543, %v3545
        %3547 = vrot.lane.b32.xlu0 %v3540, 126
        %v3548 = vpop.permute.xlu0 %3547
        %3549 = vrot.lane.b32.xlu0 %v3542, 126
        %v3550 = vpop.permute.xlu0 %3549
        %3551 = vrot.lane.b32.xlu0 %v3544, 126
        %v3552 = vpop.permute.xlu0 %3551
        %3553 = vrot.lane.b32.xlu0 %v3546, 126
        %v3554 = vpop.permute.xlu0 %3553
        %v3559 = vadd.f32 %v3411, %v3548
        %v3560 = vadd.f32 %v3412, %v3550
        %v3561 = vadd.f32 %v3413, %v3552
        %v3562 = vadd.f32 %v3414, %v3554
        %s3563 = sld [smem:[#allocation2 + $0x1b]]
        %v3564 = vstv %s3563
        %v3565 = vmul.f32 %v3564, %v340
        %v3566 = vmul.f32 %v3564, %v341
        %v3567 = vmul.f32 %v3564, %v342
        %v3568 = vmul.f32 %v3564, %v343
        %v3569 = vadd.f32 %v3448, %v3565
        %v3570 = vadd.f32 %v3449, %v3566
        %v3571 = vadd.f32 %v3450, %v3567
        %v3572 = vadd.f32 %v3451, %v3568
        %s3573 = sld [smem:[#allocation2 + $0x3f]]
        %v3574 = vstv %s3573
        %v3575 = vmul.f32 %v3574, %v340
        %v3576 = vmul.f32 %v3574, %v341
        %v3577 = vmul.f32 %v3574, %v342
        %v3578 = vmul.f32 %v3574, %v343
        %v3579 = vadd.f32 %v3485, %v3575
        %v3580 = vadd.f32 %v3486, %v3576
        %v3581 = vadd.f32 %v3487, %v3577
        %v3582 = vadd.f32 %v3488, %v3578
        %s3583 = sld [smem:[#allocation2 + $0x63]]
        %v3584 = vstv %s3583
        %v3585 = vmul.f32 %v3584, %v340
        %v3586 = vmul.f32 %v3584, %v341
        %v3587 = vmul.f32 %v3584, %v342
        %v3588 = vmul.f32 %v3584, %v343
        %v3589 = vadd.f32 %v3522, %v3585
        %v3590 = vadd.f32 %v3523, %v3586
        %v3591 = vadd.f32 %v3524, %v3587
        %v3592 = vadd.f32 %v3525, %v3588
        %s3593 = sld [smem:[#allocation2 + $0x87]]
        %v3594 = vstv %s3593
        %v3595 = vmul.f32 %v3594, %v340
        %v3596 = vmul.f32 %v3594, %v341
        %v3597 = vmul.f32 %v3594, %v342
        %v3598 = vmul.f32 %v3594, %v343
        %v3599 = vadd.f32 %v3559, %v3595
        %v3600 = vadd.f32 %v3560, %v3596
        %v3601 = vadd.f32 %v3561, %v3597
        %v3602 = vadd.f32 %v3562, %v3598
        %s3603 = sld [smem:[#allocation2 + $0x1c]]
        %v3604 = vstv %s3603
        %v3605 = vmul.f32 %v3604, %v340
        %v3606 = vmul.f32 %v3604, %v341
        %v3607 = vmul.f32 %v3604, %v342
        %v3608 = vmul.f32 %v3604, %v343
        %3613 = vrot.lane.b32.xlu0 %v3605, 127
        %v3614 = vpop.permute.xlu0 %3613
        %3615 = vrot.lane.b32.xlu0 %v3606, 127
        %v3616 = vpop.permute.xlu0 %3615
        %3617 = vrot.lane.b32.xlu0 %v3607, 127
        %v3618 = vpop.permute.xlu0 %3617
        %3619 = vrot.lane.b32.xlu0 %v3608, 127
        %v3620 = vpop.permute.xlu0 %3619
        %v3625 = vadd.f32 %v3569, %v3614
        %v3626 = vadd.f32 %v3570, %v3616
        %v3627 = vadd.f32 %v3571, %v3618
        %v3628 = vadd.f32 %v3572, %v3620
        %s3629 = sld [smem:[#allocation2 + $0x40]]
        %v3630 = vstv %s3629
        %v3631 = vmul.f32 %v3630, %v340
        %v3632 = vmul.f32 %v3630, %v341
        %v3633 = vmul.f32 %v3630, %v342
        %v3634 = vmul.f32 %v3630, %v343
        %3639 = vrot.lane.b32.xlu0 %v3631, 127
        %v3640 = vpop.permute.xlu0 %3639
        %3641 = vrot.lane.b32.xlu0 %v3632, 127
        %v3642 = vpop.permute.xlu0 %3641
        %3643 = vrot.lane.b32.xlu0 %v3633, 127
        %v3644 = vpop.permute.xlu0 %3643
        %3645 = vrot.lane.b32.xlu0 %v3634, 127
        %v3646 = vpop.permute.xlu0 %3645
        %v3651 = vadd.f32 %v3579, %v3640
        %v3652 = vadd.f32 %v3580, %v3642
        %v3653 = vadd.f32 %v3581, %v3644
        %v3654 = vadd.f32 %v3582, %v3646
        %s3655 = sld [smem:[#allocation2 + $0x64]]
        %v3656 = vstv %s3655
        %v3657 = vmul.f32 %v3656, %v340
        %v3658 = vmul.f32 %v3656, %v341
        %v3659 = vmul.f32 %v3656, %v342
        %v3660 = vmul.f32 %v3656, %v343
        %3665 = vrot.lane.b32.xlu0 %v3657, 127
        %v3666 = vpop.permute.xlu0 %3665
        %3667 = vrot.lane.b32.xlu0 %v3658, 127
        %v3668 = vpop.permute.xlu0 %3667
        %3669 = vrot.lane.b32.xlu0 %v3659, 127
        %v3670 = vpop.permute.xlu0 %3669
        %3671 = vrot.lane.b32.xlu0 %v3660, 127
        %v3672 = vpop.permute.xlu0 %3671
        %v3677 = vadd.f32 %v3589, %v3666
        %v3678 = vadd.f32 %v3590, %v3668
        %v3679 = vadd.f32 %v3591, %v3670
        %v3680 = vadd.f32 %v3592, %v3672
        %s3681 = sld [smem:[#allocation2 + $0x88]]
        %v3682 = vstv %s3681
        %v3683 = vmul.f32 %v3682, %v340
        %v3684 = vmul.f32 %v3682, %v341
        %v3685 = vmul.f32 %v3682, %v342
        %v3686 = vmul.f32 %v3682, %v343
        %3691 = vrot.lane.b32.xlu0 %v3683, 127
        %v3692 = vpop.permute.xlu0 %3691
        %3693 = vrot.lane.b32.xlu0 %v3684, 127
        %v3694 = vpop.permute.xlu0 %3693
        %3695 = vrot.lane.b32.xlu0 %v3685, 127
        %v3696 = vpop.permute.xlu0 %3695
        %3697 = vrot.lane.b32.xlu0 %v3686, 127
        %v3698 = vpop.permute.xlu0 %3697
        %v3703 = vadd.f32 %v3599, %v3692
        %v3704 = vadd.f32 %v3600, %v3694
        %v3705 = vadd.f32 %v3601, %v3696
        %v3706 = vadd.f32 %v3602, %v3698
        %s3707 = sld [smem:[#allocation2 + $0x1d]]
        %v3708 = vstv %s3707
        %v3709 = vmul.f32 %v3708, %v340
        %v3710 = vmul.f32 %v3708, %v341
        %v3711 = vmul.f32 %v3708, %v342
        %v3712 = vmul.f32 %v3708, %v343
        %3717 = vrot.lane.b32.xlu0 %v3709, 126
        %v3718 = vpop.permute.xlu0 %3717
        %3719 = vrot.lane.b32.xlu0 %v3710, 126
        %v3720 = vpop.permute.xlu0 %3719
        %3721 = vrot.lane.b32.xlu0 %v3711, 126
        %v3722 = vpop.permute.xlu0 %3721
        %3723 = vrot.lane.b32.xlu0 %v3712, 126
        %v3724 = vpop.permute.xlu0 %3723
        %v3729 = vadd.f32 %v3625, %v3718
        %v3730 = vadd.f32 %v3626, %v3720
        %v3731 = vadd.f32 %v3627, %v3722
        %v3732 = vadd.f32 %v3628, %v3724
        %s3733 = sld [smem:[#allocation2 + $0x41]]
        %v3734 = vstv %s3733
        %v3735 = vmul.f32 %v3734, %v340
        %v3736 = vmul.f32 %v3734, %v341
        %v3737 = vmul.f32 %v3734, %v342
        %v3738 = vmul.f32 %v3734, %v343
        %3743 = vrot.lane.b32.xlu0 %v3735, 126
        %v3744 = vpop.permute.xlu0 %3743
        %3745 = vrot.lane.b32.xlu0 %v3736, 126
        %v3746 = vpop.permute.xlu0 %3745
        %3747 = vrot.lane.b32.xlu0 %v3737, 126
        %v3748 = vpop.permute.xlu0 %3747
        %3749 = vrot.lane.b32.xlu0 %v3738, 126
        %v3750 = vpop.permute.xlu0 %3749
        %v3755 = vadd.f32 %v3651, %v3744
        %v3756 = vadd.f32 %v3652, %v3746
        %v3757 = vadd.f32 %v3653, %v3748
        %v3758 = vadd.f32 %v3654, %v3750
        %s3759 = sld [smem:[#allocation2 + $0x65]]
        %v3760 = vstv %s3759
        %v3761 = vmul.f32 %v3760, %v340
        %v3762 = vmul.f32 %v3760, %v341
        %v3763 = vmul.f32 %v3760, %v342
        %v3764 = vmul.f32 %v3760, %v343
        %3769 = vrot.lane.b32.xlu0 %v3761, 126
        %v3770 = vpop.permute.xlu0 %3769
        %3771 = vrot.lane.b32.xlu0 %v3762, 126
        %v3772 = vpop.permute.xlu0 %3771
        %3773 = vrot.lane.b32.xlu0 %v3763, 126
        %v3774 = vpop.permute.xlu0 %3773
        %3775 = vrot.lane.b32.xlu0 %v3764, 126
        %v3776 = vpop.permute.xlu0 %3775
        %v3781 = vadd.f32 %v3677, %v3770
        %v3782 = vadd.f32 %v3678, %v3772
        %v3783 = vadd.f32 %v3679, %v3774
        %v3784 = vadd.f32 %v3680, %v3776
        %s3785 = sld [smem:[#allocation2 + $0x89]]
        %v3786 = vstv %s3785
        %v3787 = vmul.f32 %v3786, %v340
        %v3788 = vmul.f32 %v3786, %v341
        %v3789 = vmul.f32 %v3786, %v342
        %v3790 = vmul.f32 %v3786, %v343
        %3795 = vrot.lane.b32.xlu0 %v3787, 126
        %v3796 = vpop.permute.xlu0 %3795
        %3797 = vrot.lane.b32.xlu0 %v3788, 126
        %v3798 = vpop.permute.xlu0 %3797
        %3799 = vrot.lane.b32.xlu0 %v3789, 126
        %v3800 = vpop.permute.xlu0 %3799
        %3801 = vrot.lane.b32.xlu0 %v3790, 126
        %v3802 = vpop.permute.xlu0 %3801
        %v3807 = vadd.f32 %v3703, %v3796
        %v3808 = vadd.f32 %v3704, %v3798
        %v3809 = vadd.f32 %v3705, %v3800
        %v3810 = vadd.f32 %v3706, %v3802
        %s3811 = sld [smem:[#allocation2 + $0x1e]]
        %v3812 = vstv %s3811
        %v3813 = vmul.f32 %v3812, %v340
        %v3814 = vmul.f32 %v3812, %v341
        %v3815 = vmul.f32 %v3812, %v342
        %v3816 = vmul.f32 %v3812, %v343
        %v3817 = vmul.f32 %v3812, %v344
        %v3823 = vrot.slane %v3813, 1
        %v3824 = vrot.slane %v3814, 1
        %v3825 = vsel %vm605, %v3823, %v3824
        %v3826 = vrot.slane %v3815, 1
        %v3827 = vsel %vm605, %v3824, %v3826
        %v3828 = vrot.slane %v3816, 1
        %v3829 = vsel %vm605, %v3826, %v3828
        %v3830 = vrot.slane %v3817, 1
        %v3831 = vsel %vm605, %v3828, %v3830
        %v3836 = vadd.f32 %v3729, %v3825
        %v3837 = vadd.f32 %v3730, %v3827
        %v3838 = vadd.f32 %v3731, %v3829
        %v3839 = vadd.f32 %v3732, %v3831
        %s3840 = sld [smem:[#allocation2 + $0x42]]
        %v3841 = vstv %s3840
        %v3842 = vmul.f32 %v3841, %v340
        %v3843 = vmul.f32 %v3841, %v341
        %v3844 = vmul.f32 %v3841, %v342
        %v3845 = vmul.f32 %v3841, %v343
        %v3846 = vmul.f32 %v3841, %v344
        %v3852 = vrot.slane %v3842, 1
        %v3853 = vrot.slane %v3843, 1
        %v3854 = vsel %vm605, %v3852, %v3853
        %v3855 = vrot.slane %v3844, 1
        %v3856 = vsel %vm605, %v3853, %v3855
        %v3857 = vrot.slane %v3845, 1
        %v3858 = vsel %vm605, %v3855, %v3857
        %v3859 = vrot.slane %v3846, 1
        %v3860 = vsel %vm605, %v3857, %v3859
        %v3865 = vadd.f32 %v3755, %v3854
        %v3866 = vadd.f32 %v3756, %v3856
        %v3867 = vadd.f32 %v3757, %v3858
        %v3868 = vadd.f32 %v3758, %v3860
        %s3869 = sld [smem:[#allocation2 + $0x66]]
        %v3870 = vstv %s3869
        %v3871 = vmul.f32 %v3870, %v340
        %v3872 = vmul.f32 %v3870, %v341
        %v3873 = vmul.f32 %v3870, %v342
        %v3874 = vmul.f32 %v3870, %v343
        %v3875 = vmul.f32 %v3870, %v344
        %v3881 = vrot.slane %v3871, 1
        %v3882 = vrot.slane %v3872, 1
        %v3883 = vsel %vm605, %v3881, %v3882
        %v3884 = vrot.slane %v3873, 1
        %v3885 = vsel %vm605, %v3882, %v3884
        %v3886 = vrot.slane %v3874, 1
        %v3887 = vsel %vm605, %v3884, %v3886
        %v3888 = vrot.slane %v3875, 1
        %v3889 = vsel %vm605, %v3886, %v3888
        %v3894 = vadd.f32 %v3781, %v3883
        %v3895 = vadd.f32 %v3782, %v3885
        %v3896 = vadd.f32 %v3783, %v3887
        %v3897 = vadd.f32 %v3784, %v3889
        %s3898 = sld [smem:[#allocation2 + $0x8a]]
        %v3899 = vstv %s3898
        %v3900 = vmul.f32 %v3899, %v340
        %v3901 = vmul.f32 %v3899, %v341
        %v3902 = vmul.f32 %v3899, %v342
        %v3903 = vmul.f32 %v3899, %v343
        %v3904 = vmul.f32 %v3899, %v344
        %v3910 = vrot.slane %v3900, 1
        %v3911 = vrot.slane %v3901, 1
        %v3912 = vsel %vm605, %v3910, %v3911
        %v3913 = vrot.slane %v3902, 1
        %v3914 = vsel %vm605, %v3911, %v3913
        %v3915 = vrot.slane %v3903, 1
        %v3916 = vsel %vm605, %v3913, %v3915
        %v3917 = vrot.slane %v3904, 1
        %v3918 = vsel %vm605, %v3915, %v3917
        %v3923 = vadd.f32 %v3807, %v3912
        %v3924 = vadd.f32 %v3808, %v3914
        %v3925 = vadd.f32 %v3809, %v3916
        %v3926 = vadd.f32 %v3810, %v3918
        %s3927 = sld [smem:[#allocation2 + $0x1f]]
        %v3928 = vstv %s3927
        %v3929 = vmul.f32 %v3928, %v340
        %v3930 = vmul.f32 %v3928, %v341
        %v3931 = vmul.f32 %v3928, %v342
        %v3932 = vmul.f32 %v3928, %v343
        %v3933 = vmul.f32 %v3928, %v344
        %v3939 = vrot.slane %v3929, 1
        %v3940 = vrot.slane %v3930, 1
        %v3941 = vsel %vm605, %v3939, %v3940
        %v3942 = vrot.slane %v3931, 1
        %v3943 = vsel %vm605, %v3940, %v3942
        %v3944 = vrot.slane %v3932, 1
        %v3945 = vsel %vm605, %v3942, %v3944
        %v3946 = vrot.slane %v3933, 1
        %v3947 = vsel %vm605, %v3944, %v3946
        %3948 = vrot.lane.b32.xlu0 %v3941, 127
        %v3949 = vpop.permute.xlu0 %3948
        %3950 = vrot.lane.b32.xlu0 %v3943, 127
        %v3951 = vpop.permute.xlu0 %3950
        %3952 = vrot.lane.b32.xlu0 %v3945, 127
        %v3953 = vpop.permute.xlu0 %3952
        %3954 = vrot.lane.b32.xlu0 %v3947, 127
        %v3955 = vpop.permute.xlu0 %3954
        %v3960 = vadd.f32 %v3836, %v3949
        %v3961 = vadd.f32 %v3837, %v3951
        %v3962 = vadd.f32 %v3838, %v3953
        %v3963 = vadd.f32 %v3839, %v3955
        %s3964 = sld [smem:[#allocation2 + $0x43]]
        %v3965 = vstv %s3964
        %v3966 = vmul.f32 %v3965, %v340
        %v3967 = vmul.f32 %v3965, %v341
        %v3968 = vmul.f32 %v3965, %v342
        %v3969 = vmul.f32 %v3965, %v343
        %v3970 = vmul.f32 %v3965, %v344
        %v3976 = vrot.slane %v3966, 1
        %v3977 = vrot.slane %v3967, 1
        %v3978 = vsel %vm605, %v3976, %v3977
        %v3979 = vrot.slane %v3968, 1
        %v3980 = vsel %vm605, %v3977, %v3979
        %v3981 = vrot.slane %v3969, 1
        %v3982 = vsel %vm605, %v3979, %v3981
        %v3983 = vrot.slane %v3970, 1
        %v3984 = vsel %vm605, %v3981, %v3983
        %3985 = vrot.lane.b32.xlu0 %v3978, 127
        %v3986 = vpop.permute.xlu0 %3985
        %3987 = vrot.lane.b32.xlu0 %v3980, 127
        %v3988 = vpop.permute.xlu0 %3987
        %3989 = vrot.lane.b32.xlu0 %v3982, 127
        %v3990 = vpop.permute.xlu0 %3989
        %3991 = vrot.lane.b32.xlu0 %v3984, 127
        %v3992 = vpop.permute.xlu0 %3991
        %v3997 = vadd.f32 %v3865, %v3986
        %v3998 = vadd.f32 %v3866, %v3988
        %v3999 = vadd.f32 %v3867, %v3990
        %v4000 = vadd.f32 %v3868, %v3992
        %s4001 = sld [smem:[#allocation2 + $0x67]]
        %v4002 = vstv %s4001
        %v4003 = vmul.f32 %v4002, %v340
        %v4004 = vmul.f32 %v4002, %v341
        %v4005 = vmul.f32 %v4002, %v342
        %v4006 = vmul.f32 %v4002, %v343
        %v4007 = vmul.f32 %v4002, %v344
        %v4013 = vrot.slane %v4003, 1
        %v4014 = vrot.slane %v4004, 1
        %v4015 = vsel %vm605, %v4013, %v4014
        %v4016 = vrot.slane %v4005, 1
        %v4017 = vsel %vm605, %v4014, %v4016
        %v4018 = vrot.slane %v4006, 1
        %v4019 = vsel %vm605, %v4016, %v4018
        %v4020 = vrot.slane %v4007, 1
        %v4021 = vsel %vm605, %v4018, %v4020
        %4022 = vrot.lane.b32.xlu0 %v4015, 127
        %v4023 = vpop.permute.xlu0 %4022
        %4024 = vrot.lane.b32.xlu0 %v4017, 127
        %v4025 = vpop.permute.xlu0 %4024
        %4026 = vrot.lane.b32.xlu0 %v4019, 127
        %v4027 = vpop.permute.xlu0 %4026
        %4028 = vrot.lane.b32.xlu0 %v4021, 127
        %v4029 = vpop.permute.xlu0 %4028
        %v4034 = vadd.f32 %v3894, %v4023
        %v4035 = vadd.f32 %v3895, %v4025
        %v4036 = vadd.f32 %v3896, %v4027
        %v4037 = vadd.f32 %v3897, %v4029
        %s4038 = sld [smem:[#allocation2 + $0x8b]]
        %v4039 = vstv %s4038
        %v4040 = vmul.f32 %v4039, %v340
        %v4041 = vmul.f32 %v4039, %v341
        %v4042 = vmul.f32 %v4039, %v342
        %v4043 = vmul.f32 %v4039, %v343
        %v4044 = vmul.f32 %v4039, %v344
        %v4050 = vrot.slane %v4040, 1
        %v4051 = vrot.slane %v4041, 1
        %v4052 = vsel %vm605, %v4050, %v4051
        %v4053 = vrot.slane %v4042, 1
        %v4054 = vsel %vm605, %v4051, %v4053
        %v4055 = vrot.slane %v4043, 1
        %v4056 = vsel %vm605, %v4053, %v4055
        %v4057 = vrot.slane %v4044, 1
        %v4058 = vsel %vm605, %v4055, %v4057
        %4059 = vrot.lane.b32.xlu0 %v4052, 127
        %v4060 = vpop.permute.xlu0 %4059
        %4061 = vrot.lane.b32.xlu0 %v4054, 127
        %v4062 = vpop.permute.xlu0 %4061
        %4063 = vrot.lane.b32.xlu0 %v4056, 127
        %v4064 = vpop.permute.xlu0 %4063
        %4065 = vrot.lane.b32.xlu0 %v4058, 127
        %v4066 = vpop.permute.xlu0 %4065
        %v4071 = vadd.f32 %v3923, %v4060
        %v4072 = vadd.f32 %v3924, %v4062
        %v4073 = vadd.f32 %v3925, %v4064
        %v4074 = vadd.f32 %v3926, %v4066
        %s4075 = sld [smem:[#allocation2 + $0x20]]
        %v4076 = vstv %s4075
        %v4077 = vmul.f32 %v4076, %v340
        %v4078 = vmul.f32 %v4076, %v341
        %v4079 = vmul.f32 %v4076, %v342
        %v4080 = vmul.f32 %v4076, %v343
        %v4081 = vmul.f32 %v4076, %v344
        %v4087 = vrot.slane %v4077, 1
        %v4088 = vrot.slane %v4078, 1
        %v4089 = vsel %vm605, %v4087, %v4088
        %v4090 = vrot.slane %v4079, 1
        %v4091 = vsel %vm605, %v4088, %v4090
        %v4092 = vrot.slane %v4080, 1
        %v4093 = vsel %vm605, %v4090, %v4092
        %v4094 = vrot.slane %v4081, 1
        %v4095 = vsel %vm605, %v4092, %v4094
        %4096 = vrot.lane.b32.xlu0 %v4089, 126
        %v4097 = vpop.permute.xlu0 %4096
        %4098 = vrot.lane.b32.xlu0 %v4091, 126
        %v4099 = vpop.permute.xlu0 %4098
        %4100 = vrot.lane.b32.xlu0 %v4093, 126
        %v4101 = vpop.permute.xlu0 %4100
        %4102 = vrot.lane.b32.xlu0 %v4095, 126
        %v4103 = vpop.permute.xlu0 %4102
        %v4108 = vadd.f32 %v3960, %v4097
        %v4109 = vadd.f32 %v3961, %v4099
        %v4110 = vadd.f32 %v3962, %v4101
        %v4111 = vadd.f32 %v3963, %v4103
        %s4112 = sld [smem:[#allocation2 + $0x44]]
        %v4113 = vstv %s4112
        %v4114 = vmul.f32 %v4113, %v340
        %v4115 = vmul.f32 %v4113, %v341
        %v4116 = vmul.f32 %v4113, %v342
        %v4117 = vmul.f32 %v4113, %v343
        %v4118 = vmul.f32 %v4113, %v344
        %v4124 = vrot.slane %v4114, 1
        %v4125 = vrot.slane %v4115, 1
        %v4126 = vsel %vm605, %v4124, %v4125
        %v4127 = vrot.slane %v4116, 1
        %v4128 = vsel %vm605, %v4125, %v4127
        %v4129 = vrot.slane %v4117, 1
        %v4130 = vsel %vm605, %v4127, %v4129
        %v4131 = vrot.slane %v4118, 1
        %v4132 = vsel %vm605, %v4129, %v4131
        %4133 = vrot.lane.b32.xlu0 %v4126, 126
        %v4134 = vpop.permute.xlu0 %4133
        %4135 = vrot.lane.b32.xlu0 %v4128, 126
        %v4136 = vpop.permute.xlu0 %4135
        %4137 = vrot.lane.b32.xlu0 %v4130, 126
        %v4138 = vpop.permute.xlu0 %4137
        %4139 = vrot.lane.b32.xlu0 %v4132, 126
        %v4140 = vpop.permute.xlu0 %4139
        %v4145 = vadd.f32 %v3997, %v4134
        %v4146 = vadd.f32 %v3998, %v4136
        %v4147 = vadd.f32 %v3999, %v4138
        %v4148 = vadd.f32 %v4000, %v4140
        %s4149 = sld [smem:[#allocation2 + $0x68]]
        %v4150 = vstv %s4149
        %v4151 = vmul.f32 %v4150, %v340
        %v4152 = vmul.f32 %v4150, %v341
        %v4153 = vmul.f32 %v4150, %v342
        %v4154 = vmul.f32 %v4150, %v343
        %v4155 = vmul.f32 %v4150, %v344
        %v4161 = vrot.slane %v4151, 1
        %v4162 = vrot.slane %v4152, 1
        %v4163 = vsel %vm605, %v4161, %v4162
        %v4164 = vrot.slane %v4153, 1
        %v4165 = vsel %vm605, %v4162, %v4164
        %v4166 = vrot.slane %v4154, 1
        %v4167 = vsel %vm605, %v4164, %v4166
        %v4168 = vrot.slane %v4155, 1
        %v4169 = vsel %vm605, %v4166, %v4168
        %4170 = vrot.lane.b32.xlu0 %v4163, 126
        %v4171 = vpop.permute.xlu0 %4170
        %4172 = vrot.lane.b32.xlu0 %v4165, 126
        %v4173 = vpop.permute.xlu0 %4172
        %4174 = vrot.lane.b32.xlu0 %v4167, 126
        %v4175 = vpop.permute.xlu0 %4174
        %4176 = vrot.lane.b32.xlu0 %v4169, 126
        %v4177 = vpop.permute.xlu0 %4176
        %v4182 = vadd.f32 %v4034, %v4171
        %v4183 = vadd.f32 %v4035, %v4173
        %v4184 = vadd.f32 %v4036, %v4175
        %v4185 = vadd.f32 %v4037, %v4177
        %s4186 = sld [smem:[#allocation2 + $0x8c]]
        %v4187 = vstv %s4186
        %v4188 = vmul.f32 %v4187, %v340
        %v4189 = vmul.f32 %v4187, %v341
        %v4190 = vmul.f32 %v4187, %v342
        %v4191 = vmul.f32 %v4187, %v343
        %v4192 = vmul.f32 %v4187, %v344
        %v4198 = vrot.slane %v4188, 1
        %v4199 = vrot.slane %v4189, 1
        %v4200 = vsel %vm605, %v4198, %v4199
        %v4201 = vrot.slane %v4190, 1
        %v4202 = vsel %vm605, %v4199, %v4201
        %v4203 = vrot.slane %v4191, 1
        %v4204 = vsel %vm605, %v4201, %v4203
        %v4205 = vrot.slane %v4192, 1
        %v4206 = vsel %vm605, %v4203, %v4205
        %4207 = vrot.lane.b32.xlu0 %v4200, 126
        %v4208 = vpop.permute.xlu0 %4207
        %4209 = vrot.lane.b32.xlu0 %v4202, 126
        %v4210 = vpop.permute.xlu0 %4209
        %4211 = vrot.lane.b32.xlu0 %v4204, 126
        %v4212 = vpop.permute.xlu0 %4211
        %4213 = vrot.lane.b32.xlu0 %v4206, 126
        %v4214 = vpop.permute.xlu0 %4213
        %v4219 = vadd.f32 %v4071, %v4208
        %v4220 = vadd.f32 %v4072, %v4210
        %v4221 = vadd.f32 %v4073, %v4212
        %v4222 = vadd.f32 %v4074, %v4214
        %s4223 = sld [smem:[#allocation2 + $0x21]]
        %v4224 = vstv %s4223
        %v4225 = vmul.f32 %v4224, %v340
        %v4226 = vmul.f32 %v4224, %v341
        %v4227 = vmul.f32 %v4224, %v342
        %v4228 = vmul.f32 %v4224, %v343
        %v4229 = vmul.f32 %v4224, %v344
        %v4235 = vrot.slane %v4225, 2
        %v4236 = vrot.slane %v4226, 2
        %v4237 = vsel %vm1018, %v4235, %v4236
        %v4238 = vrot.slane %v4227, 2
        %v4239 = vsel %vm1018, %v4236, %v4238
        %v4240 = vrot.slane %v4228, 2
        %v4241 = vsel %vm1018, %v4238, %v4240
        %v4242 = vrot.slane %v4229, 2
        %v4243 = vsel %vm1018, %v4240, %v4242
        %v4248 = vadd.f32 %v4108, %v4237
        %v4249 = vadd.f32 %v4109, %v4239
        %v4250 = vadd.f32 %v4110, %v4241
        %v4251 = vadd.f32 %v4111, %v4243
        %s4252 = sld [smem:[#allocation2 + $0x45]]
        %v4253 = vstv %s4252
        %v4254 = vmul.f32 %v4253, %v340
        %v4255 = vmul.f32 %v4253, %v341
        %v4256 = vmul.f32 %v4253, %v342
        %v4257 = vmul.f32 %v4253, %v343
        %v4258 = vmul.f32 %v4253, %v344
        %v4264 = vrot.slane %v4254, 2
        %v4265 = vrot.slane %v4255, 2
        %v4266 = vsel %vm1018, %v4264, %v4265
        %v4267 = vrot.slane %v4256, 2
        %v4268 = vsel %vm1018, %v4265, %v4267
        %v4269 = vrot.slane %v4257, 2
        %v4270 = vsel %vm1018, %v4267, %v4269
        %v4271 = vrot.slane %v4258, 2
        %v4272 = vsel %vm1018, %v4269, %v4271
        %v4277 = vadd.f32 %v4145, %v4266
        %v4278 = vadd.f32 %v4146, %v4268
        %v4279 = vadd.f32 %v4147, %v4270
        %v4280 = vadd.f32 %v4148, %v4272
        %s4281 = sld [smem:[#allocation2 + $0x69]]
        %v4282 = vstv %s4281
        %v4283 = vmul.f32 %v4282, %v340
        %v4284 = vmul.f32 %v4282, %v341
        %v4285 = vmul.f32 %v4282, %v342
        %v4286 = vmul.f32 %v4282, %v343
        %v4287 = vmul.f32 %v4282, %v344
        %v4293 = vrot.slane %v4283, 2
        %v4294 = vrot.slane %v4284, 2
        %v4295 = vsel %vm1018, %v4293, %v4294
        %v4296 = vrot.slane %v4285, 2
        %v4297 = vsel %vm1018, %v4294, %v4296
        %v4298 = vrot.slane %v4286, 2
        %v4299 = vsel %vm1018, %v4296, %v4298
        %v4300 = vrot.slane %v4287, 2
        %v4301 = vsel %vm1018, %v4298, %v4300
        %v4306 = vadd.f32 %v4182, %v4295
        %v4307 = vadd.f32 %v4183, %v4297
        %v4308 = vadd.f32 %v4184, %v4299
        %v4309 = vadd.f32 %v4185, %v4301
        %s4310 = sld [smem:[#allocation2 + $0x8d]]
        %v4311 = vstv %s4310
        %v4312 = vmul.f32 %v4311, %v340
        %v4313 = vmul.f32 %v4311, %v341
        %v4314 = vmul.f32 %v4311, %v342
        %v4315 = vmul.f32 %v4311, %v343
        %v4316 = vmul.f32 %v4311, %v344
        %v4322 = vrot.slane %v4312, 2
        %v4323 = vrot.slane %v4313, 2
        %v4324 = vsel %vm1018, %v4322, %v4323
        %v4325 = vrot.slane %v4314, 2
        %v4326 = vsel %vm1018, %v4323, %v4325
        %v4327 = vrot.slane %v4315, 2
        %v4328 = vsel %vm1018, %v4325, %v4327
        %v4329 = vrot.slane %v4316, 2
        %v4330 = vsel %vm1018, %v4327, %v4329
        %v4335 = vadd.f32 %v4219, %v4324
        %v4336 = vadd.f32 %v4220, %v4326
        %v4337 = vadd.f32 %v4221, %v4328
        %v4338 = vadd.f32 %v4222, %v4330
        %s4339 = sld [smem:[#allocation2 + $0x22]]
        %v4340 = vstv %s4339
        %v4341 = vmul.f32 %v4340, %v340
        %v4342 = vmul.f32 %v4340, %v341
        %v4343 = vmul.f32 %v4340, %v342
        %v4344 = vmul.f32 %v4340, %v343
        %v4345 = vmul.f32 %v4340, %v344
        %v4351 = vrot.slane %v4341, 2
        %v4352 = vrot.slane %v4342, 2
        %v4353 = vsel %vm1018, %v4351, %v4352
        %v4354 = vrot.slane %v4343, 2
        %v4355 = vsel %vm1018, %v4352, %v4354
        %v4356 = vrot.slane %v4344, 2
        %v4357 = vsel %vm1018, %v4354, %v4356
        %v4358 = vrot.slane %v4345, 2
        %v4359 = vsel %vm1018, %v4356, %v4358
        %4360 = vrot.lane.b32.xlu0 %v4353, 127
        %v4361 = vpop.permute.xlu0 %4360
        %4362 = vrot.lane.b32.xlu0 %v4355, 127
        %v4363 = vpop.permute.xlu0 %4362
        %4364 = vrot.lane.b32.xlu0 %v4357, 127
        %v4365 = vpop.permute.xlu0 %4364
        %4366 = vrot.lane.b32.xlu0 %v4359, 127
        %v4367 = vpop.permute.xlu0 %4366
        %v4372 = vadd.f32 %v4248, %v4361
        %v4373 = vadd.f32 %v4249, %v4363
        %v4374 = vadd.f32 %v4250, %v4365
        %v4375 = vadd.f32 %v4251, %v4367
        %s4376 = sld [smem:[#allocation2 + $0x46]]
        %v4377 = vstv %s4376
        %v4378 = vmul.f32 %v4377, %v340
        %v4379 = vmul.f32 %v4377, %v341
        %v4380 = vmul.f32 %v4377, %v342
        %v4381 = vmul.f32 %v4377, %v343
        %v4382 = vmul.f32 %v4377, %v344
        %v4388 = vrot.slane %v4378, 2
        %v4389 = vrot.slane %v4379, 2
        %v4390 = vsel %vm1018, %v4388, %v4389
        %v4391 = vrot.slane %v4380, 2
        %v4392 = vsel %vm1018, %v4389, %v4391
        %v4393 = vrot.slane %v4381, 2
        %v4394 = vsel %vm1018, %v4391, %v4393
        %v4395 = vrot.slane %v4382, 2
        %v4396 = vsel %vm1018, %v4393, %v4395
        %4397 = vrot.lane.b32.xlu0 %v4390, 127
        %v4398 = vpop.permute.xlu0 %4397
        %4399 = vrot.lane.b32.xlu0 %v4392, 127
        %v4400 = vpop.permute.xlu0 %4399
        %4401 = vrot.lane.b32.xlu0 %v4394, 127
        %v4402 = vpop.permute.xlu0 %4401
        %4403 = vrot.lane.b32.xlu0 %v4396, 127
        %v4404 = vpop.permute.xlu0 %4403
        %v4409 = vadd.f32 %v4277, %v4398
        %v4410 = vadd.f32 %v4278, %v4400
        %v4411 = vadd.f32 %v4279, %v4402
        %v4412 = vadd.f32 %v4280, %v4404
        %s4413 = sld [smem:[#allocation2 + $0x6a]]
        %v4414 = vstv %s4413
        %v4415 = vmul.f32 %v4414, %v340
        %v4416 = vmul.f32 %v4414, %v341
        %v4417 = vmul.f32 %v4414, %v342
        %v4418 = vmul.f32 %v4414, %v343
        %v4419 = vmul.f32 %v4414, %v344
        %v4425 = vrot.slane %v4415, 2
        %v4426 = vrot.slane %v4416, 2
        %v4427 = vsel %vm1018, %v4425, %v4426
        %v4428 = vrot.slane %v4417, 2
        %v4429 = vsel %vm1018, %v4426, %v4428
        %v4430 = vrot.slane %v4418, 2
        %v4431 = vsel %vm1018, %v4428, %v4430
        %v4432 = vrot.slane %v4419, 2
        %v4433 = vsel %vm1018, %v4430, %v4432
        %4434 = vrot.lane.b32.xlu0 %v4427, 127
        %v4435 = vpop.permute.xlu0 %4434
        %4436 = vrot.lane.b32.xlu0 %v4429, 127
        %v4437 = vpop.permute.xlu0 %4436
        %4438 = vrot.lane.b32.xlu0 %v4431, 127
        %v4439 = vpop.permute.xlu0 %4438
        %4440 = vrot.lane.b32.xlu0 %v4433, 127
        %v4441 = vpop.permute.xlu0 %4440
        %v4446 = vadd.f32 %v4306, %v4435
        %v4447 = vadd.f32 %v4307, %v4437
        %v4448 = vadd.f32 %v4308, %v4439
        %v4449 = vadd.f32 %v4309, %v4441
        %s4450 = sld [smem:[#allocation2 + $0x8e]]
        %v4451 = vstv %s4450
        %v4452 = vmul.f32 %v4451, %v340
        %v4453 = vmul.f32 %v4451, %v341
        %v4454 = vmul.f32 %v4451, %v342
        %v4455 = vmul.f32 %v4451, %v343
        %v4456 = vmul.f32 %v4451, %v344
        %v4462 = vrot.slane %v4452, 2
        %v4463 = vrot.slane %v4453, 2
        %v4464 = vsel %vm1018, %v4462, %v4463
        %v4465 = vrot.slane %v4454, 2
        %v4466 = vsel %vm1018, %v4463, %v4465
        %v4467 = vrot.slane %v4455, 2
        %v4468 = vsel %vm1018, %v4465, %v4467
        %v4469 = vrot.slane %v4456, 2
        %v4470 = vsel %vm1018, %v4467, %v4469
        %4471 = vrot.lane.b32.xlu0 %v4464, 127
        %v4472 = vpop.permute.xlu0 %4471
        %4473 = vrot.lane.b32.xlu0 %v4466, 127
        %v4474 = vpop.permute.xlu0 %4473
        %4475 = vrot.lane.b32.xlu0 %v4468, 127
        %v4476 = vpop.permute.xlu0 %4475
        %4477 = vrot.lane.b32.xlu0 %v4470, 127
        %v4478 = vpop.permute.xlu0 %4477
        %v4483 = vadd.f32 %v4335, %v4472
        %v4484 = vadd.f32 %v4336, %v4474
        %v4485 = vadd.f32 %v4337, %v4476
        %v4486 = vadd.f32 %v4338, %v4478
        %s4487 = sld [smem:[#allocation2 + $0x23]]
        %v4488 = vstv %s4487
        %v4489 = vmul.f32 %v4488, %v340
        %v4490 = vmul.f32 %v4488, %v341
        %v4491 = vmul.f32 %v4488, %v342
        %v4492 = vmul.f32 %v4488, %v343
        %v4493 = vmul.f32 %v4488, %v344
        %v4499 = vrot.slane %v4489, 2
        %v4500 = vrot.slane %v4490, 2
        %v4501 = vsel %vm1018, %v4499, %v4500
        %v4502 = vrot.slane %v4491, 2
        %v4503 = vsel %vm1018, %v4500, %v4502
        %v4504 = vrot.slane %v4492, 2
        %v4505 = vsel %vm1018, %v4502, %v4504
        %v4506 = vrot.slane %v4493, 2
        %v4507 = vsel %vm1018, %v4504, %v4506
        %4508 = vrot.lane.b32.xlu0 %v4501, 126
        %v4509 = vpop.permute.xlu0 %4508
        %4510 = vrot.lane.b32.xlu0 %v4503, 126
        %v4511 = vpop.permute.xlu0 %4510
        %4512 = vrot.lane.b32.xlu0 %v4505, 126
        %v4513 = vpop.permute.xlu0 %4512
        %4514 = vrot.lane.b32.xlu0 %v4507, 126
        %v4515 = vpop.permute.xlu0 %4514
        %v4520 = vadd.f32 %v4372, %v4509
        %v4521 = vadd.f32 %v4373, %v4511
        %v4522 = vadd.f32 %v4374, %v4513
        %v4523 = vadd.f32 %v4375, %v4515
        %s4524 = sld [smem:[#allocation2 + $0x47]]
        %v4525 = vstv %s4524
        %v4526 = vmul.f32 %v4525, %v340
        %v4527 = vmul.f32 %v4525, %v341
        %v4528 = vmul.f32 %v4525, %v342
        %v4529 = vmul.f32 %v4525, %v343
        %v4530 = vmul.f32 %v4525, %v344
        %v4536 = vrot.slane %v4526, 2
        %v4537 = vrot.slane %v4527, 2
        %v4538 = vsel %vm1018, %v4536, %v4537
        %v4539 = vrot.slane %v4528, 2
        %v4540 = vsel %vm1018, %v4537, %v4539
        %v4541 = vrot.slane %v4529, 2
        %v4542 = vsel %vm1018, %v4539, %v4541
        %v4543 = vrot.slane %v4530, 2
        %v4544 = vsel %vm1018, %v4541, %v4543
        %4545 = vrot.lane.b32.xlu0 %v4538, 126
        %v4546 = vpop.permute.xlu0 %4545
        %4547 = vrot.lane.b32.xlu0 %v4540, 126
        %v4548 = vpop.permute.xlu0 %4547
        %4549 = vrot.lane.b32.xlu0 %v4542, 126
        %v4550 = vpop.permute.xlu0 %4549
        %4551 = vrot.lane.b32.xlu0 %v4544, 126
        %v4552 = vpop.permute.xlu0 %4551
        %v4557 = vadd.f32 %v4409, %v4546
        %v4558 = vadd.f32 %v4410, %v4548
        %v4559 = vadd.f32 %v4411, %v4550
        %v4560 = vadd.f32 %v4412, %v4552
        %s4561 = sld [smem:[#allocation2 + $0x6b]]
        %v4562 = vstv %s4561
        %v4563 = vmul.f32 %v4562, %v340
        %v4564 = vmul.f32 %v4562, %v341
        %v4565 = vmul.f32 %v4562, %v342
        %v4566 = vmul.f32 %v4562, %v343
        %v4567 = vmul.f32 %v4562, %v344
        %v4573 = vrot.slane %v4563, 2
        %v4574 = vrot.slane %v4564, 2
        %v4575 = vsel %vm1018, %v4573, %v4574
        %v4576 = vrot.slane %v4565, 2
        %v4577 = vsel %vm1018, %v4574, %v4576
        %v4578 = vrot.slane %v4566, 2
        %v4579 = vsel %vm1018, %v4576, %v4578
        %v4580 = vrot.slane %v4567, 2
        %v4581 = vsel %vm1018, %v4578, %v4580
        %4582 = vrot.lane.b32.xlu0 %v4575, 126
        %v4583 = vpop.permute.xlu0 %4582
        %4584 = vrot.lane.b32.xlu0 %v4577, 126
        %v4585 = vpop.permute.xlu0 %4584
        %4586 = vrot.lane.b32.xlu0 %v4579, 126
        %v4587 = vpop.permute.xlu0 %4586
        %4588 = vrot.lane.b32.xlu0 %v4581, 126
        %v4589 = vpop.permute.xlu0 %4588
        %v4594 = vadd.f32 %v4446, %v4583
        %v4595 = vadd.f32 %v4447, %v4585
        %v4596 = vadd.f32 %v4448, %v4587
        %v4597 = vadd.f32 %v4449, %v4589
        %s4598 = sld [smem:[#allocation2 + $0x8f]]
        %v4599 = vstv %s4598
        %v4600 = vmul.f32 %v4599, %v340
        %v4601 = vmul.f32 %v4599, %v341
        %v4602 = vmul.f32 %v4599, %v342
        %v4603 = vmul.f32 %v4599, %v343
        %v4604 = vmul.f32 %v4599, %v344
        %v4610 = vrot.slane %v4600, 2
        %v4611 = vrot.slane %v4601, 2
        %v4612 = vsel %vm1018, %v4610, %v4611
        %v4613 = vrot.slane %v4602, 2
        %v4614 = vsel %vm1018, %v4611, %v4613
        %v4615 = vrot.slane %v4603, 2
        %v4616 = vsel %vm1018, %v4613, %v4615
        %v4617 = vrot.slane %v4604, 2
        %v4618 = vsel %vm1018, %v4615, %v4617
        %4619 = vrot.lane.b32.xlu0 %v4612, 126
        %v4620 = vpop.permute.xlu0 %4619
        %4621 = vrot.lane.b32.xlu0 %v4614, 126
        %v4622 = vpop.permute.xlu0 %4621
        %4623 = vrot.lane.b32.xlu0 %v4616, 126
        %v4624 = vpop.permute.xlu0 %4623
        %4625 = vrot.lane.b32.xlu0 %v4618, 126
        %v4626 = vpop.permute.xlu0 %4625
        %v4631 = vadd.f32 %v4483, %v4620
        %v4632 = vadd.f32 %v4484, %v4622
        %v4633 = vadd.f32 %v4485, %v4624
        %v4634 = vadd.f32 %v4486, %v4626
        %vm4635 = vcmp.ge.f32.partialorder %v4520, 0.0
        %vm4636 = vcmp.ge.f32.partialorder %v4521, 0.0
        %vm4637 = vcmp.ge.f32.partialorder %v4522, 0.0
        %vm4638 = vcmp.ge.f32.partialorder %v4523, 0.0
        %v4639 = vmul.f32 %v4520, 0.2
        %v4640 = vmul.f32 %v4521, 0.2
        %v4641 = vmul.f32 %v4522, 0.2
        %v4642 = vmul.f32 %v4523, 0.2
        %v4643 = vsel %vm4635, %v4520, %v4639
        %v4644 = vsel %vm4636, %v4521, %v4640
        %v4645 = vsel %vm4637, %v4522, %v4641
        %v4646 = vsel %vm4638, %v4523, %v4642
        %vm4647 = vcmask 261120
        %4648 = vst.msk [vmem:[%s157] sm:$0xff] %vm4647, %v4643
        %4649 = vst.msk [vmem:[%s157 + $0x8] sm:$0xff] %vm4647, %v4644
        %4650 = vst.msk [vmem:[%s157 + $0x10] sm:$0xff] %vm4647, %v4645
        %4651 = vst.msk [vmem:[%s157 + $0x18] sm:$0xff] %vm4647, %v4646
        %vm4652 = vcmp.ge.f32.partialorder %v4557, 0.0
        %vm4653 = vcmp.ge.f32.partialorder %v4558, 0.0
        %vm4654 = vcmp.ge.f32.partialorder %v4559, 0.0
        %vm4655 = vcmp.ge.f32.partialorder %v4560, 0.0
        %v4656 = vmul.f32 %v4557, 0.2
        %v4657 = vmul.f32 %v4558, 0.2
        %v4658 = vmul.f32 %v4559, 0.2
        %v4659 = vmul.f32 %v4560, 0.2
        %v4660 = vsel %vm4652, %v4557, %v4656
        %v4661 = vsel %vm4653, %v4558, %v4657
        %v4662 = vsel %vm4654, %v4559, %v4658
        %v4663 = vsel %vm4655, %v4560, %v4659
        %s4664 = scalar_lea.vmem %s157, 32
        %4665 = vst.msk [vmem:[%s4664] sm:$0xff] %vm4647, %v4660
        %4666 = vst.msk [vmem:[%s4664 + $0x8] sm:$0xff] %vm4647, %v4661
        %4667 = vst.msk [vmem:[%s4664 + $0x10] sm:$0xff] %vm4647, %v4662
        %4668 = vst.msk [vmem:[%s4664 + $0x18] sm:$0xff] %vm4647, %v4663
        %vm4669 = vcmp.ge.f32.partialorder %v4594, 0.0
        %vm4670 = vcmp.ge.f32.partialorder %v4595, 0.0
        %vm4671 = vcmp.ge.f32.partialorder %v4596, 0.0
        %vm4672 = vcmp.ge.f32.partialorder %v4597, 0.0
        %v4673 = vmul.f32 %v4594, 0.2
        %v4674 = vmul.f32 %v4595, 0.2
        %v4675 = vmul.f32 %v4596, 0.2
        %v4676 = vmul.f32 %v4597, 0.2
        %v4677 = vsel %vm4669, %v4594, %v4673
        %v4678 = vsel %vm4670, %v4595, %v4674
        %v4679 = vsel %vm4671, %v4596, %v4675
        %v4680 = vsel %vm4672, %v4597, %v4676
        %s4681 = scalar_lea.vmem %s157, 64
        %4682 = vst.msk [vmem:[%s4681] sm:$0xff] %vm4647, %v4677
        %4683 = vst.msk [vmem:[%s4681 + $0x8] sm:$0xff] %vm4647, %v4678
        %4684 = vst.msk [vmem:[%s4681 + $0x10] sm:$0xff] %vm4647, %v4679
        %4685 = vst.msk [vmem:[%s4681 + $0x18] sm:$0xff] %vm4647, %v4680
        %vm4686 = vcmp.ge.f32.partialorder %v4631, 0.0
        %vm4687 = vcmp.ge.f32.partialorder %v4632, 0.0
        %vm4688 = vcmp.ge.f32.partialorder %v4633, 0.0
        %vm4689 = vcmp.ge.f32.partialorder %v4634, 0.0
        %v4690 = vmul.f32 %v4631, 0.2
        %v4691 = vmul.f32 %v4632, 0.2
        %v4692 = vmul.f32 %v4633, 0.2
        %v4693 = vmul.f32 %v4634, 0.2
        %v4694 = vsel %vm4686, %v4631, %v4690
        %v4695 = vsel %vm4687, %v4632, %v4691
        %v4696 = vsel %vm4688, %v4633, %v4692
        %v4697 = vsel %vm4689, %v4634, %v4693
        %s4698 = scalar_lea.vmem %s157, 96
        %4699 = vst.msk [vmem:[%s4698] sm:$0xff] %vm4647, %v4694
        %4700 = vst.msk [vmem:[%s4698 + $0x8] sm:$0xff] %vm4647, %v4695
        %4701 = vst.msk [vmem:[%s4698 + $0x10] sm:$0xff] %vm4647, %v4696
        %4702 = vst.msk [vmem:[%s4698 + $0x18] sm:$0xff] %vm4647, %v4697
        %p4703 = scmp.lt.s32.totalorder %s14, 1
        %s4704 = scalar_select %p4703, %s14, 1
        %s4705 = smul.addr %s4704, 16
        %s4706 = smul.addr %s4705, 8
        %s4707 = scalar_lea.vmem %s2, %s4706
        // Predicated region
        $region33: #{unet_cat_forward.1} parent=27 // pred_check
          %p4708 = pneg %p79
        $region34: #{unet_cat_forward.1} parent=27 // pred_check_branch
          %4710 = sbr.rel (%p4708) target = $region36
        $region35: #{unet_cat_forward.1} parent=27 // pred_region
          _
        $region36: #{unet_cat_forward.1} parent=27 // pred_fallthru
          _
      $region28: #{unet_cat_forward.1} parent=5 // pred_fallthru
        _
      %p4711 = scmp.le.s32.totalorder 2, %s9
      // Predicated region
      $region37: #{unet_cat_forward.1} parent=5 // pred_check
        %p4712 = pneg %p4711
      $region38: #{unet_cat_forward.1} parent=5 // pred_check_branch
        %4714 = sbr.rel (%p4712) target = $region40
      $region39: #{unet_cat_forward.1} parent=5 // pred_region
        %s4715 = ssub.s32 %s9, 2
        // Predicated region
        $region41: #{unet_cat_forward.1} parent=39 // pred_check
          %p4716 = pneg %p85
        $region42: #{unet_cat_forward.1} parent=39 // pred_check_branch
          %4718 = sbr.rel (%p4716) target = $region44
        $region43: #{unet_cat_forward.1} parent=39 // pred_region
          %p4719 = scmp.lt.s32.totalorder %s15, 1
          %s4720 = scalar_select %p4719, %s15, 1
          %s4721 = smul.addr %s4720, 16
          %s4722 = smul.addr %s4721, 8
          %s4723 = scalar_lea.vmem %s2, %s4722
        $region44: #{unet_cat_forward.1} parent=39 // pred_fallthru
          _
      $region40: #{unet_cat_forward.1} parent=5 // pred_fallthru
        _
    $region6: #{unet_cat_forward.1} parent=1 // loop_footer
      %s13 = sadd.s32 1, %s9
    $region7: #{unet_cat_forward.1} parent=1 // loop_footer_branch
      %8 = sbr.rel target = $region3
    $region8: #{unet_cat_forward.1} parent=1 // loop_exit
      _
    %4724 = vsyncpa [#allocation3], 1
    %s4725 = scalar_lea.sflag [#allocation3], 1
    %4726 = vsyncpa %s4725, 1

</llo_original>
